<compile_context>
chip_gen: v7x
topology: tpu7x:2x2x1
jax: 0.10.0
libtpu: 0.0.40
codegen_flags: <defaults>
</compile_context>

<pallas_src>
import functools

import jax
import jax.numpy as jnp
from jax import lax
from jax.experimental import pallas as pl
from jax.experimental.pallas import tpu as pltpu


# ---------------------------------------------------------------------------
# helpers
# ---------------------------------------------------------------------------
def _round_up(x, m):
    return (x + m - 1) // m * m


def _pad_gate_weight(w, d_in_pad, h_pad):
    """PyTorch-layout weight (4H, D_in) -> kernel layout (D_in_pad, 4*H_pad).

    Each of the 4 gate blocks ([i, f, g, o]) is padded to H_pad separately so
    gate k lives in lanes [k*H_pad : (k+1)*H_pad] (lane-aligned slices)."""
    four_h, d_in = w.shape
    h = four_h // 4
    w4 = w.reshape(4, h, d_in)
    w4 = jnp.pad(w4, ((0, 0), (0, h_pad - h), (0, d_in_pad - d_in)))
    return jnp.transpose(w4, (2, 0, 1)).reshape(d_in_pad, 4 * h_pad)


def _pad_gate_bias(b, h_pad):
    h = b.shape[0] // 4
    b4 = jnp.pad(b.reshape(4, h), ((0, 0), (0, h_pad - h)))
    return b4.reshape(1, 4 * h_pad)


# ---------------------------------------------------------------------------
# Fused multi-layer LSTM encoder kernel (single pallas_call, grid over time)
# ---------------------------------------------------------------------------
def _fused_lstm_encoder_kernel(x_ref, w_ih0_ref, w_ihr_ref, w_hh_ref, b_ref,
                               h_out_ref,
                               h_scr, c_scr, gx_scr, act_scr,
                               *, t_real, mask_tail):
    """
    x_ref   : (Tc, Bp, Dp)         bf16  input chunk (time-major)
    w_ih0   : (Dp, 4Hp)            bf16  layer-0 input weights  (resident, 1-buf)
    w_ihr   : (max(L-1,1),Hp,4Hp)  bf16  layer>=1 input weights (resident, 1-buf)
    w_hh    : (L, Hp, 4Hp)         bf16  recurrent weights      (resident, 1-buf)
    b       : (L, 1, 4Hp)          f32   fused bias             (resident, 1-buf)
    h_out   : (L, Bp, Hp)          f32   final hidden state per layer
    h_scr   : (L, Bp, Hp)          f32   carried hidden state
    c_scr   : (L, Bp, Hp)          f32   carried cell state
    gx_scr  : (Tc, Bp, 4Hp)        bf16  hoisted input projection of the chunk
    act_scr : (Tc, Bp, Hp)         bf16  inter-layer activation chunk
    """
    Tc, Bp, Dp = x_ref.shape
    L, _, Hp = h_scr.shape

    @pl.when(pl.program_id(0) == 0)
    def _init():
        h_scr[...] = jnp.zeros_like(h_scr)
        c_scr[...] = jnp.zeros_like(c_scr)

    chunk_start = pl.program_id(0) * Tc

    def _sigmoid(z):
        # one EUP push (tanh) instead of exp + reciprocal
        return 0.5 * (jnp.tanh(0.5 * z) + 1.0)

    act2d = x_ref[...].reshape(Tc * Bp, Dp)              # bf16 (Tc*Bp, D_in)

    for l in range(L):
        w_ih = w_ih0_ref[...] if l == 0 else w_ihr_ref[l - 1]   # (D_in, 4Hp)
        w_hh = w_hh_ref[l]                                       # (Hp, 4Hp)
        b = b_ref[l]                                             # (1, 4Hp) f32

        # Hoisted input projection for the whole chunk: one large bf16 MXU
        # matmul (f32 accumulation), bias folded in, stored as bf16 so only
        # the small h @ W_hh matmul sits on the serial critical path.
        gx = jnp.dot(act2d, w_ih, preferred_element_type=jnp.float32) + b
        gx_scr[...] = gx.astype(jnp.bfloat16).reshape(Tc, Bp, 4 * Hp)

        # Register-carried state for the chunk (scratch touched once / layer).
        h_f32 = h_scr[l]
        c_f32 = c_scr[l]
        h_bf16 = h_f32.astype(jnp.bfloat16)
        store_act = l + 1 < L            # last layer's per-step h is never needed

        # TODO(synk): stage W_hh in the MXU across the unrolled chunk via
        # pltpu.matmul_push_rhs / matmul_acc_lhs / matmul_pop.
        for t in range(Tc):
            gates = gx_scr[t].astype(jnp.float32) + jnp.dot(
                h_bf16, w_hh, preferred_element_type=jnp.float32)
            # Hp is a multiple of 128 -> all gate slices are lane-aligned.
            i = _sigmoid(gates[:, 0 * Hp:1 * Hp])
            f = _sigmoid(gates[:, 1 * Hp:2 * Hp])
            g = jnp.tanh(gates[:, 2 * Hp:3 * Hp])
            o = _sigmoid(gates[:, 3 * Hp:4 * Hp])
            c_new = f * c_f32 + i * g
            h_new = o * jnp.tanh(c_new)
            if mask_tail:                 # static flag: only traced for padded T
                valid = (chunk_start + t) < t_real
                c_new = jnp.where(valid, c_new, c_f32)
                h_new = jnp.where(valid, h_new, h_f32)
            c_f32 = c_new
            h_f32 = h_new
            h_bf16 = h_f32.astype(jnp.bfloat16)
            if store_act:
                act_scr[t] = h_bf16

        h_scr[l] = h_f32
        c_scr[l] = c_f32
        if store_act:
            act2d = act_scr[...].reshape(Tc * Bp, Hp)    # next layer's input

    @pl.when(pl.program_id(0) == pl.num_programs(0) - 1)
    def _final():
        h_out_ref[...] = h_scr[...]


def _lstm_encoder_call(x_pad, kp, *, t_real, time_chunk):
    """x_pad: (T_pad, B_pad, D_pad) bf16 -> (L, B_pad, H_pad) f32 final h."""
    T_pad, B_pad, D_pad = x_pad.shape
    L, H_pad, four_h = kp["w_hh"].shape
    n_chunks = T_pad // time_chunk
    mask_tail = (T_pad != t_real)

    # --- explicit VMEM budget (review: size it, don't rely on defaults) -----
    weight_bytes = (kp["w_ih0"].size + kp["w_ihr"].size + kp["w_hh"].size) * 2 \
                   + kp["bias"].size * 4                  # single-buffered
    x_chunk_bytes = 2 * time_chunk * B_pad * D_pad * 2    # double-buffered input
    state_bytes = 2 * L * B_pad * H_pad * 4               # h_scr + c_scr
    out_bytes = L * B_pad * H_pad * 4
    gx_bytes = time_chunk * B_pad * four_h * 2
    act_bytes = time_chunk * B_pad * H_pad * 2
    resident = (weight_bytes + x_chunk_bytes + state_bytes + out_bytes
                + gx_bytes + act_bytes)
    vmem_limit = int(min(max(2 * resident, 16 * 2 ** 20), 64 * 2 ** 20))

    kernel = functools.partial(_fused_lstm_encoder_kernel,
                               t_real=t_real, mask_tail=mask_tail)

    # TODO(synk): on v7x, use the second TensorCore (batch-block "parallel"
    # grid axis or a core_map layer wavefront); the time axis is sequential.
    return pl.pallas_call(
        kernel,
        out_shape=jax.ShapeDtypeStruct((L, B_pad, H_pad), jnp.float32),
        grid=(n_chunks,),
        in_specs=[
            pl.BlockSpec((time_chunk, B_pad, D_pad), lambda t: (t, 0, 0)),
            pl.BlockSpec((D_pad, four_h), lambda t: (0, 0),
                         pipeline_mode=pl.Buffered(1)),
            pl.BlockSpec(kp["w_ihr"].shape, lambda t: (0, 0, 0),
                         pipeline_mode=pl.Buffered(1)),
            pl.BlockSpec((L, H_pad, four_h), lambda t: (0, 0, 0),
                         pipeline_mode=pl.Buffered(1)),
            pl.BlockSpec((L, 1, four_h), lambda t: (0, 0, 0),
                         pipeline_mode=pl.Buffered(1)),
        ],
        out_specs=pl.BlockSpec((L, B_pad, H_pad), lambda t: (0, 0, 0)),
        scratch_shapes=[
            pltpu.VMEM((L, B_pad, H_pad), jnp.float32),          # h carry
            pltpu.VMEM((L, B_pad, H_pad), jnp.float32),          # c carry
            pltpu.VMEM((time_chunk, B_pad, four_h), jnp.bfloat16),  # gx
            pltpu.VMEM((time_chunk, B_pad, H_pad), jnp.bfloat16),   # layer act
        ],
        compiler_params=pltpu.CompilerParams(
            dimension_semantics=("arbitrary",),
            vmem_limit_bytes=vmem_limit),
    )(x_pad, kp["w_ih0"], kp["w_ihr"], kp["w_hh"], kp["bias"])


# ---------------------------------------------------------------------------
# Parameter setup (mirrors nn.LSTM's uniform(-1/sqrt(H), 1/sqrt(H)) init)
# ---------------------------------------------------------------------------
def init_lstm_params(key, input_dim, hidden_dim, n_layers):
    bound = float(hidden_dim) ** -0.5
    params = []
    for layer in range(n_layers):
        d_in = input_dim if layer == 0 else hidden_dim
        key, k1, k2, k3, k4 = jax.random.split(key, 5)
        params.append({
            "w_ih": jax.random.uniform(k1, (4 * hidden_dim, d_in),
                                       jnp.float32, -bound, bound),
            "w_hh": jax.random.uniform(k2, (4 * hidden_dim, hidden_dim),
                                       jnp.float32, -bound, bound),
            "b_ih": jax.random.uniform(k3, (4 * hidden_dim,), jnp.float32, -bound, bound),
            "b_hh": jax.random.uniform(k4, (4 * hidden_dim,), jnp.float32, -bound, bound),
        })
    return params


def pack_kernel_params(raw_params, input_dim, hidden_dim):
    """Pad / transpose / stack raw PyTorch-layout params into kernel layout."""
    n_layers = len(raw_params)
    h_pad = _round_up(hidden_dim, 128)
    d_pad = _round_up(input_dim, 128)
    w_ih0 = _pad_gate_weight(raw_params[0]["w_ih"], d_pad, h_pad).astype(jnp.bfloat16)
    if n_layers > 1:
        w_ihr = jnp.stack([_pad_gate_weight(p["w_ih"], h_pad, h_pad)
                           for p in raw_params[1:]]).astype(jnp.bfloat16)
    else:
        w_ihr = jnp.zeros((1, h_pad, 4 * h_pad), jnp.bfloat16)   # unused dummy
    w_hh = jnp.stack([_pad_gate_weight(p["w_hh"], h_pad, h_pad)
                      for p in raw_params]).astype(jnp.bfloat16)
    bias = jnp.stack([_pad_gate_bias(p["b_ih"] + p["b_hh"], h_pad)
                      for p in raw_params])                       # (L, 1, 4Hp) f32
    return {"w_ih0": w_ih0, "w_ihr": w_ihr, "w_hh": w_hh, "bias": bias}


# ---------------------------------------------------------------------------
# Encoder forward (== PyTorch module forward)
# ---------------------------------------------------------------------------
def encoder_forward(x_btd, kp, *, hidden_dim):
    """x_btd: (batch, seq, input_dim) -> (batch, n_layers, hidden_dim)."""
    B, T, D = x_btd.shape
    L, H_pad, _ = kp["w_hh"].shape
    D_pad = kp["w_ih0"].shape[0]
    B_pad = _round_up(B, 16)                       # bf16 sublane packing
    time_chunk = min(64, T)
    T_pad = -(-T // time_chunk) * time_chunk       # padded + masked tail

    x = jnp.transpose(x_btd, (1, 0, 2))            # time-major (T, B, D)
    x = jnp.pad(x, ((0, T_pad - T), (0, B_pad - B), (0, D_pad - D)))
    x = x.astype(jnp.bfloat16)

    h_all = _lstm_encoder_call(x, kp, t_real=T, time_chunk=time_chunk)
    h = h_all[:, :B, :hidden_dim]                  # (L, B, H)
    return jnp.transpose(h, (1, 0, 2))             # == h.permute(1, 0, 2)


# ---------------------------------------------------------------------------
# Pure-JAX f32 reference (for correctness check only)
# ---------------------------------------------------------------------------
def encoder_forward_ref(x_btd, raw_params, hidden_dim):
    H = hidden_dim
    x = jnp.transpose(x_btd, (1, 0, 2))            # (T, B, D)
    B = x.shape[1]
    h_finals = []
    for p in raw_params:
        w_ih, w_hh, b = p["w_ih"], p["w_hh"], p["b_ih"] + p["b_hh"]

        def step(carry, x_t, w_ih=w_ih, w_hh=w_hh, b=b):
            h, c = carry
            gates = x_t @ w_ih.T + h @ w_hh.T + b
            i = jax.nn.sigmoid(gates[:, 0 * H:1 * H])
            f = jax.nn.sigmoid(gates[:, 1 * H:2 * H])
            g = jnp.tanh(gates[:, 2 * H:3 * H])
            o = jax.nn.sigmoid(gates[:, 3 * H:4 * H])
            c = f * c + i * g
            h = o * jnp.tanh(c)
            return (h, c), h

        init = (jnp.zeros((B, H), jnp.float32), jnp.zeros((B, H), jnp.float32))
        (h_last, _), y = lax.scan(step, init, x)
        x = y
        h_finals.append(h_last)
    return jnp.transpose(jnp.stack(h_finals, axis=0), (1, 0, 2))


# ---------------------------------------------------------------------------
if __name__ == "__main__":
    batch, seq, input_dim, hidden_dim, n_layers = 2, 8, 16, 32, 2

    key = jax.random.PRNGKey(0)
    k_x, k_p = jax.random.split(key)
    x = jax.random.normal(k_x, (batch, seq, input_dim), jnp.float32)

    raw_params = init_lstm_params(k_p, input_dim, hidden_dim, n_layers)
    kp = pack_kernel_params(raw_params, input_dim, hidden_dim)

    fwd = jax.jit(functools.partial(encoder_forward, hidden_dim=hidden_dim))
    h = jax.block_until_ready(fwd(x, kp))

    assert h.shape == (batch, n_layers, hidden_dim), h.shape
    assert bool(jnp.all(jnp.isfinite(h)))

    h_ref = encoder_forward_ref(x, raw_params, hidden_dim)
    max_err = float(jnp.max(jnp.abs(h - h_ref)))
    assert bool(jnp.allclose(h, h_ref, atol=5e-2, rtol=5e-2)), max_err

    print("KERNEL_OK")
</pallas_src>

<mosaic_0001>
module attributes {stable_mosaic.version = 11 : i64} {
  func.func @_fused_lstm_encoder_kernel(%arg0: i32, %arg1: memref<8x16x128xbf16, #tpu.memory_space<vmem>>, %arg2: memref<128x512xbf16, #tpu.memory_space<vmem>>, %arg3: memref<1x128x512xbf16, #tpu.memory_space<vmem>>, %arg4: memref<2x128x512xbf16, #tpu.memory_space<vmem>>, %arg5: memref<2x1x512xf32, #tpu.memory_space<vmem>>, %arg6: memref<2x16x128xf32, #tpu.memory_space<vmem>>, %arg7: memref<2x16x128xf32, #tpu.memory_space<vmem>>, %arg8: memref<2x16x128xf32, #tpu.memory_space<vmem>>, %arg9: memref<8x16x512xbf16, #tpu.memory_space<vmem>>, %arg10: memref<8x16x128xbf16, #tpu.memory_space<vmem>>) attributes {dimension_semantics = [#tpu.dimension_semantics<arbitrary>], iteration_bounds = array<i64: 1>, scalar_prefetch = 0 : i64, scratch_operands = 4 : i64, tpu.core_type = #tpu.core_type<tc>, window_params = [{transform_indices = @transform_0, window_bounds = array<i64: 8, 16, 128>}, {pipeline_mode = #tpu.pipeline_mode<synchronous>, transform_indices = @transform_1, window_bounds = array<i64: 128, 512>}, {pipeline_mode = #tpu.pipeline_mode<synchronous>, transform_indices = @transform_2, window_bounds = array<i64: 1, 128, 512>}, {pipeline_mode = #tpu.pipeline_mode<synchronous>, transform_indices = @transform_3, window_bounds = array<i64: 2, 128, 512>}, {pipeline_mode = #tpu.pipeline_mode<synchronous>, transform_indices = @transform_4, window_bounds = array<i64: 2, 1, 512>}, {pipeline_mode = #tpu.pipeline_mode<synchronous>, transform_indices = @transform_5, window_bounds = array<i64: 2, 16, 128>}]} {
    %c0_i32 = arith.constant 0 : i32
    %0 = arith.cmpi eq, %arg0, %c0_i32 : i32
    %1 = arith.extui %0 : i1 to i32
    %c0_i32_0 = arith.constant 0 : i32
    %2 = arith.cmpi ne, %1, %c0_i32_0 : i32
    scf.if %2 {
      %cst_281 = arith.constant 0.000000e+00 : f32
      %670 = vector.broadcast %cst_281 : f32 to vector<2x16x128xf32>
      %c0_282 = arith.constant 0 : index
      %c0_283 = arith.constant 0 : index
      %c0_284 = arith.constant 0 : index
      %671 = vector.load %arg7[%c0_282, %c0_283, %c0_284] : memref<2x16x128xf32, #tpu.memory_space<vmem>>, vector<2x16x128xf32>
      tpu.vector_store %arg7[%c0_282, %c0_283, %c0_284], %670 {strides = array<i32>} : memref<2x16x128xf32, #tpu.memory_space<vmem>>, vector<2x16x128xf32>,
      %cst_285 = arith.constant 0.000000e+00 : f32
      %672 = vector.broadcast %cst_285 : f32 to vector<2x16x128xf32>
      %c0_286 = arith.constant 0 : index
      %c0_287 = arith.constant 0 : index
      %c0_288 = arith.constant 0 : index
      %673 = vector.load %arg8[%c0_286, %c0_287, %c0_288] : memref<2x16x128xf32, #tpu.memory_space<vmem>>, vector<2x16x128xf32>
      tpu.vector_store %arg8[%c0_286, %c0_287, %c0_288], %672 {strides = array<i32>} : memref<2x16x128xf32, #tpu.memory_space<vmem>>, vector<2x16x128xf32>,
    } else {
    }
    %c0 = arith.constant 0 : index
    %c0_1 = arith.constant 0 : index
    %c0_2 = arith.constant 0 : index
    %3 = vector.load %arg1[%c0, %c0_1, %c0_2] : memref<8x16x128xbf16, #tpu.memory_space<vmem>>, vector<8x16x128xbf16>
    %4 = vector.shape_cast %3 : vector<8x16x128xbf16> to vector<128x128xbf16>
    %c0_3 = arith.constant 0 : index
    %c0_4 = arith.constant 0 : index
    %5 = vector.load %arg2[%c0_3, %c0_4] : memref<128x512xbf16, #tpu.memory_space<vmem>>, vector<128x512xbf16>
    %c0_5 = arith.constant 0 : index
    %c0_6 = arith.constant 0 : index
    %c0_7 = arith.constant 0 : index
    %6 = vector.load %arg4[%c0_5, %c0_6, %c0_7] : memref<2x128x512xbf16, #tpu.memory_space<vmem>>, vector<1x128x512xbf16>
    %7 = vector.shape_cast %6 : vector<1x128x512xbf16> to vector<128x512xbf16>
    %c0_8 = arith.constant 0 : index
    %c0_9 = arith.constant 0 : index
    %c0_10 = arith.constant 0 : index
    %8 = vector.load %arg5[%c0_8, %c0_9, %c0_10] : memref<2x1x512xf32, #tpu.memory_space<vmem>>, vector<1x1x512xf32>
    %9 = vector.shape_cast %8 : vector<1x1x512xf32> to vector<1x512xf32>
    %cst = arith.constant dense<0.000000e+00> : vector<128x512xf32>
    %10 = tpu.matmul %4, %5, %cst {dimension_numbers = #tpu.dot_dimension_numbers<[1], [0], [0], [1], [0, 0, 1, 1], [], []>} : vector<128x128xbf16>, vector<128x512xbf16>, vector<128x512xf32> -> vector<128x512xf32>
    %11 = vector.broadcast %9 : vector<1x512xf32> to vector<128x512xf32>
    %12 = arith.addf %10, %11 : vector<128x512xf32>
    %13 = arith.truncf %12 : vector<128x512xf32> to vector<128x512xbf16>
    %14 = vector.shape_cast %13 : vector<128x512xbf16> to vector<8x16x512xbf16>
    %c0_11 = arith.constant 0 : index
    %c0_12 = arith.constant 0 : index
    %c0_13 = arith.constant 0 : index
    %15 = vector.load %arg9[%c0_11, %c0_12, %c0_13] : memref<8x16x512xbf16, #tpu.memory_space<vmem>>, vector<8x16x512xbf16>
    tpu.vector_store %arg9[%c0_11, %c0_12, %c0_13], %14 {strides = array<i32>} : memref<8x16x512xbf16, #tpu.memory_space<vmem>>, vector<8x16x512xbf16>,
    %c0_14 = arith.constant 0 : index
    %c0_15 = arith.constant 0 : index
    %c0_16 = arith.constant 0 : index
    %16 = vector.load %arg7[%c0_14, %c0_15, %c0_16] : memref<2x16x128xf32, #tpu.memory_space<vmem>>, vector<1x16x128xf32>
    %17 = vector.shape_cast %16 : vector<1x16x128xf32> to vector<16x128xf32>
    %c0_17 = arith.constant 0 : index
    %c0_18 = arith.constant 0 : index
    %c0_19 = arith.constant 0 : index
    %18 = vector.load %arg8[%c0_17, %c0_18, %c0_19] : memref<2x16x128xf32, #tpu.memory_space<vmem>>, vector<1x16x128xf32>
    %19 = vector.shape_cast %18 : vector<1x16x128xf32> to vector<16x128xf32>
    %20 = arith.truncf %17 : vector<16x128xf32> to vector<16x128xbf16>
    %c0_20 = arith.constant 0 : index
    %c0_21 = arith.constant 0 : index
    %c0_22 = arith.constant 0 : index
    %21 = vector.load %arg9[%c0_20, %c0_21, %c0_22] : memref<8x16x512xbf16, #tpu.memory_space<vmem>>, vector<1x16x512xbf16>
    %22 = vector.shape_cast %21 : vector<1x16x512xbf16> to vector<16x512xbf16>
    %23 = arith.extf %22 : vector<16x512xbf16> to vector<16x512xf32>
    %cst_23 = arith.constant dense<0.000000e+00> : vector<16x512xf32>
    %24 = tpu.matmul %20, %7, %cst_23 {dimension_numbers = #tpu.dot_dimension_numbers<[1], [0], [0], [1], [0, 0, 1, 1], [], []>} : vector<16x128xbf16>, vector<128x512xbf16>, vector<16x512xf32> -> vector<16x512xf32>
    %25 = arith.addf %23, %24 : vector<16x512xf32>
    %26 = vector.extract_strided_slice %25 {offsets = [0, 0], sizes = [16, 128], strides = [1, 1]} : vector<16x512xf32> to vector<16x128xf32>
    %cst_24 = arith.constant 5.000000e-01 : f32
    %27 = vector.broadcast %cst_24 : f32 to vector<16x128xf32>
    %28 = arith.mulf %27, %26 : vector<16x128xf32>
    %29 = math.tanh %28 : vector<16x128xf32>
    %cst_25 = arith.constant 1.000000e+00 : f32
    %30 = vector.broadcast %cst_25 : f32 to vector<16x128xf32>
    %31 = arith.addf %29, %30 : vector<16x128xf32>
    %cst_26 = arith.constant 5.000000e-01 : f32
    %32 = vector.broadcast %cst_26 : f32 to vector<16x128xf32>
    %33 = arith.mulf %32, %31 : vector<16x128xf32>
    %34 = vector.extract_strided_slice %25 {offsets = [0, 128], sizes = [16, 128], strides = [1, 1]} : vector<16x512xf32> to vector<16x128xf32>
    %cst_27 = arith.constant 5.000000e-01 : f32
    %35 = vector.broadcast %cst_27 : f32 to vector<16x128xf32>
    %36 = arith.mulf %35, %34 : vector<16x128xf32>
    %37 = math.tanh %36 : vector<16x128xf32>
    %cst_28 = arith.constant 1.000000e+00 : f32
    %38 = vector.broadcast %cst_28 : f32 to vector<16x128xf32>
    %39 = arith.addf %37, %38 : vector<16x128xf32>
    %cst_29 = arith.constant 5.000000e-01 : f32
    %40 = vector.broadcast %cst_29 : f32 to vector<16x128xf32>
    %41 = arith.mulf %40, %39 : vector<16x128xf32>
    %42 = vector.extract_strided_slice %25 {offsets = [0, 256], sizes = [16, 128], strides = [1, 1]} : vector<16x512xf32> to vector<16x128xf32>
    %43 = math.tanh %42 : vector<16x128xf32>
    %44 = vector.extract_strided_slice %25 {offsets = [0, 384], sizes = [16, 128], strides = [1, 1]} : vector<16x512xf32> to vector<16x128xf32>
    %cst_30 = arith.constant 5.000000e-01 : f32
    %45 = vector.broadcast %cst_30 : f32 to vector<16x128xf32>
    %46 = arith.mulf %45, %44 : vector<16x128xf32>
    %47 = math.tanh %46 : vector<16x128xf32>
    %cst_31 = arith.constant 1.000000e+00 : f32
    %48 = vector.broadcast %cst_31 : f32 to vector<16x128xf32>
    %49 = arith.addf %47, %48 : vector<16x128xf32>
    %cst_32 = arith.constant 5.000000e-01 : f32
    %50 = vector.broadcast %cst_32 : f32 to vector<16x128xf32>
    %51 = arith.mulf %50, %49 : vector<16x128xf32>
    %52 = arith.mulf %41, %19 : vector<16x128xf32>
    %53 = arith.mulf %33, %43 : vector<16x128xf32>
    %54 = arith.addf %52, %53 : vector<16x128xf32>
    %55 = math.tanh %54 : vector<16x128xf32>
    %56 = arith.mulf %51, %55 : vector<16x128xf32>
    %57 = arith.truncf %56 : vector<16x128xf32> to vector<16x128xbf16>
    %c0_33 = arith.constant 0 : index
    %c0_34 = arith.constant 0 : index
    %c0_35 = arith.constant 0 : index
    %58 = vector.load %arg10[%c0_33, %c0_34, %c0_35] : memref<8x16x128xbf16, #tpu.memory_space<vmem>>, vector<1x16x128xbf16>
    %59 = vector.shape_cast %58 : vector<1x16x128xbf16> to vector<16x128xbf16>
    %60 = vector.shape_cast %57 : vector<16x128xbf16> to vector<1x16x128xbf16>
    tpu.vector_store %arg10[%c0_33, %c0_34, %c0_35], %60 {strides = array<i32>} : memref<8x16x128xbf16, #tpu.memory_space<vmem>>, vector<1x16x128xbf16>,
    %c1 = arith.constant 1 : index
    %c0_36 = arith.constant 0 : index
    %c0_37 = arith.constant 0 : index
    %61 = vector.load %arg9[%c1, %c0_36, %c0_37] : memref<8x16x512xbf16, #tpu.memory_space<vmem>>, vector<1x16x512xbf16>
    %62 = vector.shape_cast %61 : vector<1x16x512xbf16> to vector<16x512xbf16>
    %63 = arith.extf %62 : vector<16x512xbf16> to vector<16x512xf32>
    %cst_38 = arith.constant dense<0.000000e+00> : vector<16x512xf32>
    %64 = tpu.matmul %57, %7, %cst_38 {dimension_numbers = #tpu.dot_dimension_numbers<[1], [0], [0], [1], [0, 0, 1, 1], [], []>} : vector<16x128xbf16>, vector<128x512xbf16>, vector<16x512xf32> -> vector<16x512xf32>
    %65 = arith.addf %63, %64 : vector<16x512xf32>
    %66 = vector.extract_strided_slice %65 {offsets = [0, 0], sizes = [16, 128], strides = [1, 1]} : vector<16x512xf32> to vector<16x128xf32>
    %cst_39 = arith.constant 5.000000e-01 : f32
    %67 = vector.broadcast %cst_39 : f32 to vector<16x128xf32>
    %68 = arith.mulf %67, %66 : vector<16x128xf32>
    %69 = math.tanh %68 : vector<16x128xf32>
    %cst_40 = arith.constant 1.000000e+00 : f32
    %70 = vector.broadcast %cst_40 : f32 to vector<16x128xf32>
    %71 = arith.addf %69, %70 : vector<16x128xf32>
    %cst_41 = arith.constant 5.000000e-01 : f32
    %72 = vector.broadcast %cst_41 : f32 to vector<16x128xf32>
    %73 = arith.mulf %72, %71 : vector<16x128xf32>
    %74 = vector.extract_strided_slice %65 {offsets = [0, 128], sizes = [16, 128], strides = [1, 1]} : vector<16x512xf32> to vector<16x128xf32>
    %cst_42 = arith.constant 5.000000e-01 : f32
    %75 = vector.broadcast %cst_42 : f32 to vector<16x128xf32>
    %76 = arith.mulf %75, %74 : vector<16x128xf32>
    %77 = math.tanh %76 : vector<16x128xf32>
    %cst_43 = arith.constant 1.000000e+00 : f32
    %78 = vector.broadcast %cst_43 : f32 to vector<16x128xf32>
    %79 = arith.addf %77, %78 : vector<16x128xf32>
    %cst_44 = arith.constant 5.000000e-01 : f32
    %80 = vector.broadcast %cst_44 : f32 to vector<16x128xf32>
    %81 = arith.mulf %80, %79 : vector<16x128xf32>
    %82 = vector.extract_strided_slice %65 {offsets = [0, 256], sizes = [16, 128], strides = [1, 1]} : vector<16x512xf32> to vector<16x128xf32>
    %83 = math.tanh %82 : vector<16x128xf32>
    %84 = vector.extract_strided_slice %65 {offsets = [0, 384], sizes = [16, 128], strides = [1, 1]} : vector<16x512xf32> to vector<16x128xf32>
    %cst_45 = arith.constant 5.000000e-01 : f32
    %85 = vector.broadcast %cst_45 : f32 to vector<16x128xf32>
    %86 = arith.mulf %85, %84 : vector<16x128xf32>
    %87 = math.tanh %86 : vector<16x128xf32>
    %cst_46 = arith.constant 1.000000e+00 : f32
    %88 = vector.broadcast %cst_46 : f32 to vector<16x128xf32>
    %89 = arith.addf %87, %88 : vector<16x128xf32>
    %cst_47 = arith.constant 5.000000e-01 : f32
    %90 = vector.broadcast %cst_47 : f32 to vector<16x128xf32>
    %91 = arith.mulf %90, %89 : vector<16x128xf32>
    %92 = arith.mulf %81, %54 : vector<16x128xf32>
    %93 = arith.mulf %73, %83 : vector<16x128xf32>
    %94 = arith.addf %92, %93 : vector<16x128xf32>
    %95 = math.tanh %94 : vector<16x128xf32>
    %96 = arith.mulf %91, %95 : vector<16x128xf32>
    %97 = arith.truncf %96 : vector<16x128xf32> to vector<16x128xbf16>
    %c1_48 = arith.constant 1 : index
    %c0_49 = arith.constant 0 : index
    %c0_50 = arith.constant 0 : index
    %98 = vector.load %arg10[%c1_48, %c0_49, %c0_50] : memref<8x16x128xbf16, #tpu.memory_space<vmem>>, vector<1x16x128xbf16>
    %99 = vector.shape_cast %98 : vector<1x16x128xbf16> to vector<16x128xbf16>
    %100 = vector.shape_cast %97 : vector<16x128xbf16> to vector<1x16x128xbf16>
    tpu.vector_store %arg10[%c1_48, %c0_49, %c0_50], %100 {strides = array<i32>} : memref<8x16x128xbf16, #tpu.memory_space<vmem>>, vector<1x16x128xbf16>,
    %c2 = arith.constant 2 : index
    %c0_51 = arith.constant 0 : index
    %c0_52 = arith.constant 0 : index
    %101 = vector.load %arg9[%c2, %c0_51, %c0_52] : memref<8x16x512xbf16, #tpu.memory_space<vmem>>, vector<1x16x512xbf16>
    %102 = vector.shape_cast %101 : vector<1x16x512xbf16> to vector<16x512xbf16>
    %103 = arith.extf %102 : vector<16x512xbf16> to vector<16x512xf32>
    %cst_53 = arith.constant dense<0.000000e+00> : vector<16x512xf32>
    %104 = tpu.matmul %97, %7, %cst_53 {dimension_numbers = #tpu.dot_dimension_numbers<[1], [0], [0], [1], [0, 0, 1, 1], [], []>} : vector<16x128xbf16>, vector<128x512xbf16>, vector<16x512xf32> -> vector<16x512xf32>
    %105 = arith.addf %103, %104 : vector<16x512xf32>
    %106 = vector.extract_strided_slice %105 {offsets = [0, 0], sizes = [16, 128], strides = [1, 1]} : vector<16x512xf32> to vector<16x128xf32>
    %cst_54 = arith.constant 5.000000e-01 : f32
    %107 = vector.broadcast %cst_54 : f32 to vector<16x128xf32>
    %108 = arith.mulf %107, %106 : vector<16x128xf32>
    %109 = math.tanh %108 : vector<16x128xf32>
    %cst_55 = arith.constant 1.000000e+00 : f32
    %110 = vector.broadcast %cst_55 : f32 to vector<16x128xf32>
    %111 = arith.addf %109, %110 : vector<16x128xf32>
    %cst_56 = arith.constant 5.000000e-01 : f32
    %112 = vector.broadcast %cst_56 : f32 to vector<16x128xf32>
    %113 = arith.mulf %112, %111 : vector<16x128xf32>
    %114 = vector.extract_strided_slice %105 {offsets = [0, 128], sizes = [16, 128], strides = [1, 1]} : vector<16x512xf32> to vector<16x128xf32>
    %cst_57 = arith.constant 5.000000e-01 : f32
    %115 = vector.broadcast %cst_57 : f32 to vector<16x128xf32>
    %116 = arith.mulf %115, %114 : vector<16x128xf32>
    %117 = math.tanh %116 : vector<16x128xf32>
    %cst_58 = arith.constant 1.000000e+00 : f32
    %118 = vector.broadcast %cst_58 : f32 to vector<16x128xf32>
    %119 = arith.addf %117, %118 : vector<16x128xf32>
    %cst_59 = arith.constant 5.000000e-01 : f32
    %120 = vector.broadcast %cst_59 : f32 to vector<16x128xf32>
    %121 = arith.mulf %120, %119 : vector<16x128xf32>
    %122 = vector.extract_strided_slice %105 {offsets = [0, 256], sizes = [16, 128], strides = [1, 1]} : vector<16x512xf32> to vector<16x128xf32>
    %123 = math.tanh %122 : vector<16x128xf32>
    %124 = vector.extract_strided_slice %105 {offsets = [0, 384], sizes = [16, 128], strides = [1, 1]} : vector<16x512xf32> to vector<16x128xf32>
    %cst_60 = arith.constant 5.000000e-01 : f32
    %125 = vector.broadcast %cst_60 : f32 to vector<16x128xf32>
    %126 = arith.mulf %125, %124 : vector<16x128xf32>
    %127 = math.tanh %126 : vector<16x128xf32>
    %cst_61 = arith.constant 1.000000e+00 : f32
    %128 = vector.broadcast %cst_61 : f32 to vector<16x128xf32>
    %129 = arith.addf %127, %128 : vector<16x128xf32>
    %cst_62 = arith.constant 5.000000e-01 : f32
    %130 = vector.broadcast %cst_62 : f32 to vector<16x128xf32>
    %131 = arith.mulf %130, %129 : vector<16x128xf32>
    %132 = arith.mulf %121, %94 : vector<16x128xf32>
    %133 = arith.mulf %113, %123 : vector<16x128xf32>
    %134 = arith.addf %132, %133 : vector<16x128xf32>
    %135 = math.tanh %134 : vector<16x128xf32>
    %136 = arith.mulf %131, %135 : vector<16x128xf32>
    %137 = arith.truncf %136 : vector<16x128xf32> to vector<16x128xbf16>
    %c2_63 = arith.constant 2 : index
    %c0_64 = arith.constant 0 : index
    %c0_65 = arith.constant 0 : index
    %138 = vector.load %arg10[%c2_63, %c0_64, %c0_65] : memref<8x16x128xbf16, #tpu.memory_space<vmem>>, vector<1x16x128xbf16>
    %139 = vector.shape_cast %138 : vector<1x16x128xbf16> to vector<16x128xbf16>
    %140 = vector.shape_cast %137 : vector<16x128xbf16> to vector<1x16x128xbf16>
    tpu.vector_store %arg10[%c2_63, %c0_64, %c0_65], %140 {strides = array<i32>} : memref<8x16x128xbf16, #tpu.memory_space<vmem>>, vector<1x16x128xbf16>,
    %c3 = arith.constant 3 : index
    %c0_66 = arith.constant 0 : index
    %c0_67 = arith.constant 0 : index
    %141 = vector.load %arg9[%c3, %c0_66, %c0_67] : memref<8x16x512xbf16, #tpu.memory_space<vmem>>, vector<1x16x512xbf16>
    %142 = vector.shape_cast %141 : vector<1x16x512xbf16> to vector<16x512xbf16>
    %143 = arith.extf %142 : vector<16x512xbf16> to vector<16x512xf32>
    %cst_68 = arith.constant dense<0.000000e+00> : vector<16x512xf32>
    %144 = tpu.matmul %137, %7, %cst_68 {dimension_numbers = #tpu.dot_dimension_numbers<[1], [0], [0], [1], [0, 0, 1, 1], [], []>} : vector<16x128xbf16>, vector<128x512xbf16>, vector<16x512xf32> -> vector<16x512xf32>
    %145 = arith.addf %143, %144 : vector<16x512xf32>
    %146 = vector.extract_strided_slice %145 {offsets = [0, 0], sizes = [16, 128], strides = [1, 1]} : vector<16x512xf32> to vector<16x128xf32>
    %cst_69 = arith.constant 5.000000e-01 : f32
    %147 = vector.broadcast %cst_69 : f32 to vector<16x128xf32>
    %148 = arith.mulf %147, %146 : vector<16x128xf32>
    %149 = math.tanh %148 : vector<16x128xf32>
    %cst_70 = arith.constant 1.000000e+00 : f32
    %150 = vector.broadcast %cst_70 : f32 to vector<16x128xf32>
    %151 = arith.addf %149, %150 : vector<16x128xf32>
    %cst_71 = arith.constant 5.000000e-01 : f32
    %152 = vector.broadcast %cst_71 : f32 to vector<16x128xf32>
    %153 = arith.mulf %152, %151 : vector<16x128xf32>
    %154 = vector.extract_strided_slice %145 {offsets = [0, 128], sizes = [16, 128], strides = [1, 1]} : vector<16x512xf32> to vector<16x128xf32>
    %cst_72 = arith.constant 5.000000e-01 : f32
    %155 = vector.broadcast %cst_72 : f32 to vector<16x128xf32>
    %156 = arith.mulf %155, %154 : vector<16x128xf32>
    %157 = math.tanh %156 : vector<16x128xf32>
    %cst_73 = arith.constant 1.000000e+00 : f32
    %158 = vector.broadcast %cst_73 : f32 to vector<16x128xf32>
    %159 = arith.addf %157, %158 : vector<16x128xf32>
    %cst_74 = arith.constant 5.000000e-01 : f32
    %160 = vector.broadcast %cst_74 : f32 to vector<16x128xf32>
    %161 = arith.mulf %160, %159 : vector<16x128xf32>
    %162 = vector.extract_strided_slice %145 {offsets = [0, 256], sizes = [16, 128], strides = [1, 1]} : vector<16x512xf32> to vector<16x128xf32>
    %163 = math.tanh %162 : vector<16x128xf32>
    %164 = vector.extract_strided_slice %145 {offsets = [0, 384], sizes = [16, 128], strides = [1, 1]} : vector<16x512xf32> to vector<16x128xf32>
    %cst_75 = arith.constant 5.000000e-01 : f32
    %165 = vector.broadcast %cst_75 : f32 to vector<16x128xf32>
    %166 = arith.mulf %165, %164 : vector<16x128xf32>
    %167 = math.tanh %166 : vector<16x128xf32>
    %cst_76 = arith.constant 1.000000e+00 : f32
    %168 = vector.broadcast %cst_76 : f32 to vector<16x128xf32>
    %169 = arith.addf %167, %168 : vector<16x128xf32>
    %cst_77 = arith.constant 5.000000e-01 : f32
    %170 = vector.broadcast %cst_77 : f32 to vector<16x128xf32>
    %171 = arith.mulf %170, %169 : vector<16x128xf32>
    %172 = arith.mulf %161, %134 : vector<16x128xf32>
    %173 = arith.mulf %153, %163 : vector<16x128xf32>
    %174 = arith.addf %172, %173 : vector<16x128xf32>
    %175 = math.tanh %174 : vector<16x128xf32>
    %176 = arith.mulf %171, %175 : vector<16x128xf32>
    %177 = arith.truncf %176 : vector<16x128xf32> to vector<16x128xbf16>
    %c3_78 = arith.constant 3 : index
    %c0_79 = arith.constant 0 : index
    %c0_80 = arith.constant 0 : index
    %178 = vector.load %arg10[%c3_78, %c0_79, %c0_80] : memref<8x16x128xbf16, #tpu.memory_space<vmem>>, vector<1x16x128xbf16>
    %179 = vector.shape_cast %178 : vector<1x16x128xbf16> to vector<16x128xbf16>
    %180 = vector.shape_cast %177 : vector<16x128xbf16> to vector<1x16x128xbf16>
    tpu.vector_store %arg10[%c3_78, %c0_79, %c0_80], %180 {strides = array<i32>} : memref<8x16x128xbf16, #tpu.memory_space<vmem>>, vector<1x16x128xbf16>,
    %c4 = arith.constant 4 : index
    %c0_81 = arith.constant 0 : index
    %c0_82 = arith.constant 0 : index
    %181 = vector.load %arg9[%c4, %c0_81, %c0_82] : memref<8x16x512xbf16, #tpu.memory_space<vmem>>, vector<1x16x512xbf16>
    %182 = vector.shape_cast %181 : vector<1x16x512xbf16> to vector<16x512xbf16>
    %183 = arith.extf %182 : vector<16x512xbf16> to vector<16x512xf32>
    %cst_83 = arith.constant dense<0.000000e+00> : vector<16x512xf32>
    %184 = tpu.matmul %177, %7, %cst_83 {dimension_numbers = #tpu.dot_dimension_numbers<[1], [0], [0], [1], [0, 0, 1, 1], [], []>} : vector<16x128xbf16>, vector<128x512xbf16>, vector<16x512xf32> -> vector<16x512xf32>
    %185 = arith.addf %183, %184 : vector<16x512xf32>
    %186 = vector.extract_strided_slice %185 {offsets = [0, 0], sizes = [16, 128], strides = [1, 1]} : vector<16x512xf32> to vector<16x128xf32>
    %cst_84 = arith.constant 5.000000e-01 : f32
    %187 = vector.broadcast %cst_84 : f32 to vector<16x128xf32>
    %188 = arith.mulf %187, %186 : vector<16x128xf32>
    %189 = math.tanh %188 : vector<16x128xf32>
    %cst_85 = arith.constant 1.000000e+00 : f32
    %190 = vector.broadcast %cst_85 : f32 to vector<16x128xf32>
    %191 = arith.addf %189, %190 : vector<16x128xf32>
    %cst_86 = arith.constant 5.000000e-01 : f32
    %192 = vector.broadcast %cst_86 : f32 to vector<16x128xf32>
    %193 = arith.mulf %192, %191 : vector<16x128xf32>
    %194 = vector.extract_strided_slice %185 {offsets = [0, 128], sizes = [16, 128], strides = [1, 1]} : vector<16x512xf32> to vector<16x128xf32>
    %cst_87 = arith.constant 5.000000e-01 : f32
    %195 = vector.broadcast %cst_87 : f32 to vector<16x128xf32>
    %196 = arith.mulf %195, %194 : vector<16x128xf32>
    %197 = math.tanh %196 : vector<16x128xf32>
    %cst_88 = arith.constant 1.000000e+00 : f32
    %198 = vector.broadcast %cst_88 : f32 to vector<16x128xf32>
    %199 = arith.addf %197, %198 : vector<16x128xf32>
    %cst_89 = arith.constant 5.000000e-01 : f32
    %200 = vector.broadcast %cst_89 : f32 to vector<16x128xf32>
    %201 = arith.mulf %200, %199 : vector<16x128xf32>
    %202 = vector.extract_strided_slice %185 {offsets = [0, 256], sizes = [16, 128], strides = [1, 1]} : vector<16x512xf32> to vector<16x128xf32>
    %203 = math.tanh %202 : vector<16x128xf32>
    %204 = vector.extract_strided_slice %185 {offsets = [0, 384], sizes = [16, 128], strides = [1, 1]} : vector<16x512xf32> to vector<16x128xf32>
    %cst_90 = arith.constant 5.000000e-01 : f32
    %205 = vector.broadcast %cst_90 : f32 to vector<16x128xf32>
    %206 = arith.mulf %205, %204 : vector<16x128xf32>
    %207 = math.tanh %206 : vector<16x128xf32>
    %cst_91 = arith.constant 1.000000e+00 : f32
    %208 = vector.broadcast %cst_91 : f32 to vector<16x128xf32>
    %209 = arith.addf %207, %208 : vector<16x128xf32>
    %cst_92 = arith.constant 5.000000e-01 : f32
    %210 = vector.broadcast %cst_92 : f32 to vector<16x128xf32>
    %211 = arith.mulf %210, %209 : vector<16x128xf32>
    %212 = arith.mulf %201, %174 : vector<16x128xf32>
    %213 = arith.mulf %193, %203 : vector<16x128xf32>
    %214 = arith.addf %212, %213 : vector<16x128xf32>
    %215 = math.tanh %214 : vector<16x128xf32>
    %216 = arith.mulf %211, %215 : vector<16x128xf32>
    %217 = arith.truncf %216 : vector<16x128xf32> to vector<16x128xbf16>
    %c4_93 = arith.constant 4 : index
    %c0_94 = arith.constant 0 : index
    %c0_95 = arith.constant 0 : index
    %218 = vector.load %arg10[%c4_93, %c0_94, %c0_95] : memref<8x16x128xbf16, #tpu.memory_space<vmem>>, vector<1x16x128xbf16>
    %219 = vector.shape_cast %218 : vector<1x16x128xbf16> to vector<16x128xbf16>
    %220 = vector.shape_cast %217 : vector<16x128xbf16> to vector<1x16x128xbf16>
    tpu.vector_store %arg10[%c4_93, %c0_94, %c0_95], %220 {strides = array<i32>} : memref<8x16x128xbf16, #tpu.memory_space<vmem>>, vector<1x16x128xbf16>,
    %c5 = arith.constant 5 : index
    %c0_96 = arith.constant 0 : index
    %c0_97 = arith.constant 0 : index
    %221 = vector.load %arg9[%c5, %c0_96, %c0_97] : memref<8x16x512xbf16, #tpu.memory_space<vmem>>, vector<1x16x512xbf16>
    %222 = vector.shape_cast %221 : vector<1x16x512xbf16> to vector<16x512xbf16>
    %223 = arith.extf %222 : vector<16x512xbf16> to vector<16x512xf32>
    %cst_98 = arith.constant dense<0.000000e+00> : vector<16x512xf32>
    %224 = tpu.matmul %217, %7, %cst_98 {dimension_numbers = #tpu.dot_dimension_numbers<[1], [0], [0], [1], [0, 0, 1, 1], [], []>} : vector<16x128xbf16>, vector<128x512xbf16>, vector<16x512xf32> -> vector<16x512xf32>
    %225 = arith.addf %223, %224 : vector<16x512xf32>
    %226 = vector.extract_strided_slice %225 {offsets = [0, 0], sizes = [16, 128], strides = [1, 1]} : vector<16x512xf32> to vector<16x128xf32>
    %cst_99 = arith.constant 5.000000e-01 : f32
    %227 = vector.broadcast %cst_99 : f32 to vector<16x128xf32>
    %228 = arith.mulf %227, %226 : vector<16x128xf32>
    %229 = math.tanh %228 : vector<16x128xf32>
    %cst_100 = arith.constant 1.000000e+00 : f32
    %230 = vector.broadcast %cst_100 : f32 to vector<16x128xf32>
    %231 = arith.addf %229, %230 : vector<16x128xf32>
    %cst_101 = arith.constant 5.000000e-01 : f32
    %232 = vector.broadcast %cst_101 : f32 to vector<16x128xf32>
    %233 = arith.mulf %232, %231 : vector<16x128xf32>
    %234 = vector.extract_strided_slice %225 {offsets = [0, 128], sizes = [16, 128], strides = [1, 1]} : vector<16x512xf32> to vector<16x128xf32>
    %cst_102 = arith.constant 5.000000e-01 : f32
    %235 = vector.broadcast %cst_102 : f32 to vector<16x128xf32>
    %236 = arith.mulf %235, %234 : vector<16x128xf32>
    %237 = math.tanh %236 : vector<16x128xf32>
    %cst_103 = arith.constant 1.000000e+00 : f32
    %238 = vector.broadcast %cst_103 : f32 to vector<16x128xf32>
    %239 = arith.addf %237, %238 : vector<16x128xf32>
    %cst_104 = arith.constant 5.000000e-01 : f32
    %240 = vector.broadcast %cst_104 : f32 to vector<16x128xf32>
    %241 = arith.mulf %240, %239 : vector<16x128xf32>
    %242 = vector.extract_strided_slice %225 {offsets = [0, 256], sizes = [16, 128], strides = [1, 1]} : vector<16x512xf32> to vector<16x128xf32>
    %243 = math.tanh %242 : vector<16x128xf32>
    %244 = vector.extract_strided_slice %225 {offsets = [0, 384], sizes = [16, 128], strides = [1, 1]} : vector<16x512xf32> to vector<16x128xf32>
    %cst_105 = arith.constant 5.000000e-01 : f32
    %245 = vector.broadcast %cst_105 : f32 to vector<16x128xf32>
    %246 = arith.mulf %245, %244 : vector<16x128xf32>
    %247 = math.tanh %246 : vector<16x128xf32>
    %cst_106 = arith.constant 1.000000e+00 : f32
    %248 = vector.broadcast %cst_106 : f32 to vector<16x128xf32>
    %249 = arith.addf %247, %248 : vector<16x128xf32>
    %cst_107 = arith.constant 5.000000e-01 : f32
    %250 = vector.broadcast %cst_107 : f32 to vector<16x128xf32>
    %251 = arith.mulf %250, %249 : vector<16x128xf32>
    %252 = arith.mulf %241, %214 : vector<16x128xf32>
    %253 = arith.mulf %233, %243 : vector<16x128xf32>
    %254 = arith.addf %252, %253 : vector<16x128xf32>
    %255 = math.tanh %254 : vector<16x128xf32>
    %256 = arith.mulf %251, %255 : vector<16x128xf32>
    %257 = arith.truncf %256 : vector<16x128xf32> to vector<16x128xbf16>
    %c5_108 = arith.constant 5 : index
    %c0_109 = arith.constant 0 : index
    %c0_110 = arith.constant 0 : index
    %258 = vector.load %arg10[%c5_108, %c0_109, %c0_110] : memref<8x16x128xbf16, #tpu.memory_space<vmem>>, vector<1x16x128xbf16>
    %259 = vector.shape_cast %258 : vector<1x16x128xbf16> to vector<16x128xbf16>
    %260 = vector.shape_cast %257 : vector<16x128xbf16> to vector<1x16x128xbf16>
    tpu.vector_store %arg10[%c5_108, %c0_109, %c0_110], %260 {strides = array<i32>} : memref<8x16x128xbf16, #tpu.memory_space<vmem>>, vector<1x16x128xbf16>,
    %c6 = arith.constant 6 : index
    %c0_111 = arith.constant 0 : index
    %c0_112 = arith.constant 0 : index
    %261 = vector.load %arg9[%c6, %c0_111, %c0_112] : memref<8x16x512xbf16, #tpu.memory_space<vmem>>, vector<1x16x512xbf16>
    %262 = vector.shape_cast %261 : vector<1x16x512xbf16> to vector<16x512xbf16>
    %263 = arith.extf %262 : vector<16x512xbf16> to vector<16x512xf32>
    %cst_113 = arith.constant dense<0.000000e+00> : vector<16x512xf32>
    %264 = tpu.matmul %257, %7, %cst_113 {dimension_numbers = #tpu.dot_dimension_numbers<[1], [0], [0], [1], [0, 0, 1, 1], [], []>} : vector<16x128xbf16>, vector<128x512xbf16>, vector<16x512xf32> -> vector<16x512xf32>
    %265 = arith.addf %263, %264 : vector<16x512xf32>
    %266 = vector.extract_strided_slice %265 {offsets = [0, 0], sizes = [16, 128], strides = [1, 1]} : vector<16x512xf32> to vector<16x128xf32>
    %cst_114 = arith.constant 5.000000e-01 : f32
    %267 = vector.broadcast %cst_114 : f32 to vector<16x128xf32>
    %268 = arith.mulf %267, %266 : vector<16x128xf32>
    %269 = math.tanh %268 : vector<16x128xf32>
    %cst_115 = arith.constant 1.000000e+00 : f32
    %270 = vector.broadcast %cst_115 : f32 to vector<16x128xf32>
    %271 = arith.addf %269, %270 : vector<16x128xf32>
    %cst_116 = arith.constant 5.000000e-01 : f32
    %272 = vector.broadcast %cst_116 : f32 to vector<16x128xf32>
    %273 = arith.mulf %272, %271 : vector<16x128xf32>
    %274 = vector.extract_strided_slice %265 {offsets = [0, 128], sizes = [16, 128], strides = [1, 1]} : vector<16x512xf32> to vector<16x128xf32>
    %cst_117 = arith.constant 5.000000e-01 : f32
    %275 = vector.broadcast %cst_117 : f32 to vector<16x128xf32>
    %276 = arith.mulf %275, %274 : vector<16x128xf32>
    %277 = math.tanh %276 : vector<16x128xf32>
    %cst_118 = arith.constant 1.000000e+00 : f32
    %278 = vector.broadcast %cst_118 : f32 to vector<16x128xf32>
    %279 = arith.addf %277, %278 : vector<16x128xf32>
    %cst_119 = arith.constant 5.000000e-01 : f32
    %280 = vector.broadcast %cst_119 : f32 to vector<16x128xf32>
    %281 = arith.mulf %280, %279 : vector<16x128xf32>
    %282 = vector.extract_strided_slice %265 {offsets = [0, 256], sizes = [16, 128], strides = [1, 1]} : vector<16x512xf32> to vector<16x128xf32>
    %283 = math.tanh %282 : vector<16x128xf32>
    %284 = vector.extract_strided_slice %265 {offsets = [0, 384], sizes = [16, 128], strides = [1, 1]} : vector<16x512xf32> to vector<16x128xf32>
    %cst_120 = arith.constant 5.000000e-01 : f32
    %285 = vector.broadcast %cst_120 : f32 to vector<16x128xf32>
    %286 = arith.mulf %285, %284 : vector<16x128xf32>
    %287 = math.tanh %286 : vector<16x128xf32>
    %cst_121 = arith.constant 1.000000e+00 : f32
    %288 = vector.broadcast %cst_121 : f32 to vector<16x128xf32>
    %289 = arith.addf %287, %288 : vector<16x128xf32>
    %cst_122 = arith.constant 5.000000e-01 : f32
    %290 = vector.broadcast %cst_122 : f32 to vector<16x128xf32>
    %291 = arith.mulf %290, %289 : vector<16x128xf32>
    %292 = arith.mulf %281, %254 : vector<16x128xf32>
    %293 = arith.mulf %273, %283 : vector<16x128xf32>
    %294 = arith.addf %292, %293 : vector<16x128xf32>
    %295 = math.tanh %294 : vector<16x128xf32>
    %296 = arith.mulf %291, %295 : vector<16x128xf32>
    %297 = arith.truncf %296 : vector<16x128xf32> to vector<16x128xbf16>
    %c6_123 = arith.constant 6 : index
    %c0_124 = arith.constant 0 : index
    %c0_125 = arith.constant 0 : index
    %298 = vector.load %arg10[%c6_123, %c0_124, %c0_125] : memref<8x16x128xbf16, #tpu.memory_space<vmem>>, vector<1x16x128xbf16>
    %299 = vector.shape_cast %298 : vector<1x16x128xbf16> to vector<16x128xbf16>
    %300 = vector.shape_cast %297 : vector<16x128xbf16> to vector<1x16x128xbf16>
    tpu.vector_store %arg10[%c6_123, %c0_124, %c0_125], %300 {strides = array<i32>} : memref<8x16x128xbf16, #tpu.memory_space<vmem>>, vector<1x16x128xbf16>,
    %c7 = arith.constant 7 : index
    %c0_126 = arith.constant 0 : index
    %c0_127 = arith.constant 0 : index
    %301 = vector.load %arg9[%c7, %c0_126, %c0_127] : memref<8x16x512xbf16, #tpu.memory_space<vmem>>, vector<1x16x512xbf16>
    %302 = vector.shape_cast %301 : vector<1x16x512xbf16> to vector<16x512xbf16>
    %303 = arith.extf %302 : vector<16x512xbf16> to vector<16x512xf32>
    %cst_128 = arith.constant dense<0.000000e+00> : vector<16x512xf32>
    %304 = tpu.matmul %297, %7, %cst_128 {dimension_numbers = #tpu.dot_dimension_numbers<[1], [0], [0], [1], [0, 0, 1, 1], [], []>} : vector<16x128xbf16>, vector<128x512xbf16>, vector<16x512xf32> -> vector<16x512xf32>
    %305 = arith.addf %303, %304 : vector<16x512xf32>
    %306 = vector.extract_strided_slice %305 {offsets = [0, 0], sizes = [16, 128], strides = [1, 1]} : vector<16x512xf32> to vector<16x128xf32>
    %cst_129 = arith.constant 5.000000e-01 : f32
    %307 = vector.broadcast %cst_129 : f32 to vector<16x128xf32>
    %308 = arith.mulf %307, %306 : vector<16x128xf32>
    %309 = math.tanh %308 : vector<16x128xf32>
    %cst_130 = arith.constant 1.000000e+00 : f32
    %310 = vector.broadcast %cst_130 : f32 to vector<16x128xf32>
    %311 = arith.addf %309, %310 : vector<16x128xf32>
    %cst_131 = arith.constant 5.000000e-01 : f32
    %312 = vector.broadcast %cst_131 : f32 to vector<16x128xf32>
    %313 = arith.mulf %312, %311 : vector<16x128xf32>
    %314 = vector.extract_strided_slice %305 {offsets = [0, 128], sizes = [16, 128], strides = [1, 1]} : vector<16x512xf32> to vector<16x128xf32>
    %cst_132 = arith.constant 5.000000e-01 : f32
    %315 = vector.broadcast %cst_132 : f32 to vector<16x128xf32>
    %316 = arith.mulf %315, %314 : vector<16x128xf32>
    %317 = math.tanh %316 : vector<16x128xf32>
    %cst_133 = arith.constant 1.000000e+00 : f32
    %318 = vector.broadcast %cst_133 : f32 to vector<16x128xf32>
    %319 = arith.addf %317, %318 : vector<16x128xf32>
    %cst_134 = arith.constant 5.000000e-01 : f32
    %320 = vector.broadcast %cst_134 : f32 to vector<16x128xf32>
    %321 = arith.mulf %320, %319 : vector<16x128xf32>
    %322 = vector.extract_strided_slice %305 {offsets = [0, 256], sizes = [16, 128], strides = [1, 1]} : vector<16x512xf32> to vector<16x128xf32>
    %323 = math.tanh %322 : vector<16x128xf32>
    %324 = vector.extract_strided_slice %305 {offsets = [0, 384], sizes = [16, 128], strides = [1, 1]} : vector<16x512xf32> to vector<16x128xf32>
    %cst_135 = arith.constant 5.000000e-01 : f32
    %325 = vector.broadcast %cst_135 : f32 to vector<16x128xf32>
    %326 = arith.mulf %325, %324 : vector<16x128xf32>
    %327 = math.tanh %326 : vector<16x128xf32>
    %cst_136 = arith.constant 1.000000e+00 : f32
    %328 = vector.broadcast %cst_136 : f32 to vector<16x128xf32>
    %329 = arith.addf %327, %328 : vector<16x128xf32>
    %cst_137 = arith.constant 5.000000e-01 : f32
    %330 = vector.broadcast %cst_137 : f32 to vector<16x128xf32>
    %331 = arith.mulf %330, %329 : vector<16x128xf32>
    %332 = arith.mulf %321, %294 : vector<16x128xf32>
    %333 = arith.mulf %313, %323 : vector<16x128xf32>
    %334 = arith.addf %332, %333 : vector<16x128xf32>
    %335 = math.tanh %334 : vector<16x128xf32>
    %336 = arith.mulf %331, %335 : vector<16x128xf32>
    %337 = arith.truncf %336 : vector<16x128xf32> to vector<16x128xbf16>
    %c7_138 = arith.constant 7 : index
    %c0_139 = arith.constant 0 : index
    %c0_140 = arith.constant 0 : index
    %338 = vector.load %arg10[%c7_138, %c0_139, %c0_140] : memref<8x16x128xbf16, #tpu.memory_space<vmem>>, vector<1x16x128xbf16>
    %339 = vector.shape_cast %338 : vector<1x16x128xbf16> to vector<16x128xbf16>
    %340 = vector.shape_cast %337 : vector<16x128xbf16> to vector<1x16x128xbf16>
    tpu.vector_store %arg10[%c7_138, %c0_139, %c0_140], %340 {strides = array<i32>} : memref<8x16x128xbf16, #tpu.memory_space<vmem>>, vector<1x16x128xbf16>,
    %c0_141 = arith.constant 0 : index
    %c0_142 = arith.constant 0 : index
    %c0_143 = arith.constant 0 : index
    %341 = vector.load %arg7[%c0_141, %c0_142, %c0_143] : memref<2x16x128xf32, #tpu.memory_space<vmem>>, vector<1x16x128xf32>
    %342 = vector.shape_cast %341 : vector<1x16x128xf32> to vector<16x128xf32>
    %343 = vector.shape_cast %336 : vector<16x128xf32> to vector<1x16x128xf32>
    tpu.vector_store %arg7[%c0_141, %c0_142, %c0_143], %343 {strides = array<i32>} : memref<2x16x128xf32, #tpu.memory_space<vmem>>, vector<1x16x128xf32>,
    %c0_144 = arith.constant 0 : index
    %c0_145 = arith.constant 0 : index
    %c0_146 = arith.constant 0 : index
    %344 = vector.load %arg8[%c0_144, %c0_145, %c0_146] : memref<2x16x128xf32, #tpu.memory_space<vmem>>, vector<1x16x128xf32>
    %345 = vector.shape_cast %344 : vector<1x16x128xf32> to vector<16x128xf32>
    %346 = vector.shape_cast %334 : vector<16x128xf32> to vector<1x16x128xf32>
    tpu.vector_store %arg8[%c0_144, %c0_145, %c0_146], %346 {strides = array<i32>} : memref<2x16x128xf32, #tpu.memory_space<vmem>>, vector<1x16x128xf32>,
    %c0_147 = arith.constant 0 : index
    %c0_148 = arith.constant 0 : index
    %c0_149 = arith.constant 0 : index
    %347 = vector.load %arg10[%c0_147, %c0_148, %c0_149] : memref<8x16x128xbf16, #tpu.memory_space<vmem>>, vector<8x16x128xbf16>
    %348 = vector.shape_cast %347 : vector<8x16x128xbf16> to vector<128x128xbf16>
    %c0_150 = arith.constant 0 : index
    %c0_151 = arith.constant 0 : index
    %c0_152 = arith.constant 0 : index
    %349 = vector.load %arg3[%c0_150, %c0_151, %c0_152] : memref<1x128x512xbf16, #tpu.memory_space<vmem>>, vector<1x128x512xbf16>
    %350 = vector.shape_cast %349 : vector<1x128x512xbf16> to vector<128x512xbf16>
    %c1_153 = arith.constant 1 : index
    %c0_154 = arith.constant 0 : index
    %c0_155 = arith.constant 0 : index
    %351 = vector.load %arg4[%c1_153, %c0_154, %c0_155] : memref<2x128x512xbf16, #tpu.memory_space<vmem>>, vector<1x128x512xbf16>
    %352 = vector.shape_cast %351 : vector<1x128x512xbf16> to vector<128x512xbf16>
    %c1_156 = arith.constant 1 : index
    %c0_157 = arith.constant 0 : index
    %c0_158 = arith.constant 0 : index
    %353 = vector.load %arg5[%c1_156, %c0_157, %c0_158] : memref<2x1x512xf32, #tpu.memory_space<vmem>>, vector<1x1x512xf32>
    %354 = vector.shape_cast %353 : vector<1x1x512xf32> to vector<1x512xf32>
    %cst_159 = arith.constant dense<0.000000e+00> : vector<128x512xf32>
    %355 = tpu.matmul %348, %350, %cst_159 {dimension_numbers = #tpu.dot_dimension_numbers<[1], [0], [0], [1], [0, 0, 1, 1], [], []>} : vector<128x128xbf16>, vector<128x512xbf16>, vector<128x512xf32> -> vector<128x512xf32>
    %356 = vector.broadcast %354 : vector<1x512xf32> to vector<128x512xf32>
    %357 = arith.addf %355, %356 : vector<128x512xf32>
    %358 = arith.truncf %357 : vector<128x512xf32> to vector<128x512xbf16>
    %359 = vector.shape_cast %358 : vector<128x512xbf16> to vector<8x16x512xbf16>
    %c0_160 = arith.constant 0 : index
    %c0_161 = arith.constant 0 : index
    %c0_162 = arith.constant 0 : index
    %360 = vector.load %arg9[%c0_160, %c0_161, %c0_162] : memref<8x16x512xbf16, #tpu.memory_space<vmem>>, vector<8x16x512xbf16>
    tpu.vector_store %arg9[%c0_160, %c0_161, %c0_162], %359 {strides = array<i32>} : memref<8x16x512xbf16, #tpu.memory_space<vmem>>, vector<8x16x512xbf16>,
    %c1_163 = arith.constant 1 : index
    %c0_164 = arith.constant 0 : index
    %c0_165 = arith.constant 0 : index
    %361 = vector.load %arg7[%c1_163, %c0_164, %c0_165] : memref<2x16x128xf32, #tpu.memory_space<vmem>>, vector<1x16x128xf32>
    %362 = vector.shape_cast %361 : vector<1x16x128xf32> to vector<16x128xf32>
    %c1_166 = arith.constant 1 : index
    %c0_167 = arith.constant 0 : index
    %c0_168 = arith.constant 0 : index
    %363 = vector.load %arg8[%c1_166, %c0_167, %c0_168] : memref<2x16x128xf32, #tpu.memory_space<vmem>>, vector<1x16x128xf32>
    %364 = vector.shape_cast %363 : vector<1x16x128xf32> to vector<16x128xf32>
    %365 = arith.truncf %362 : vector<16x128xf32> to vector<16x128xbf16>
    %c0_169 = arith.constant 0 : index
    %c0_170 = arith.constant 0 : index
    %c0_171 = arith.constant 0 : index
    %366 = vector.load %arg9[%c0_169, %c0_170, %c0_171] : memref<8x16x512xbf16, #tpu.memory_space<vmem>>, vector<1x16x512xbf16>
    %367 = vector.shape_cast %366 : vector<1x16x512xbf16> to vector<16x512xbf16>
    %368 = arith.extf %367 : vector<16x512xbf16> to vector<16x512xf32>
    %cst_172 = arith.constant dense<0.000000e+00> : vector<16x512xf32>
    %369 = tpu.matmul %365, %352, %cst_172 {dimension_numbers = #tpu.dot_dimension_numbers<[1], [0], [0], [1], [0, 0, 1, 1], [], []>} : vector<16x128xbf16>, vector<128x512xbf16>, vector<16x512xf32> -> vector<16x512xf32>
    %370 = arith.addf %368, %369 : vector<16x512xf32>
    %371 = vector.extract_strided_slice %370 {offsets = [0, 0], sizes = [16, 128], strides = [1, 1]} : vector<16x512xf32> to vector<16x128xf32>
    %cst_173 = arith.constant 5.000000e-01 : f32
    %372 = vector.broadcast %cst_173 : f32 to vector<16x128xf32>
    %373 = arith.mulf %372, %371 : vector<16x128xf32>
    %374 = math.tanh %373 : vector<16x128xf32>
    %cst_174 = arith.constant 1.000000e+00 : f32
    %375 = vector.broadcast %cst_174 : f32 to vector<16x128xf32>
    %376 = arith.addf %374, %375 : vector<16x128xf32>
    %cst_175 = arith.constant 5.000000e-01 : f32
    %377 = vector.broadcast %cst_175 : f32 to vector<16x128xf32>
    %378 = arith.mulf %377, %376 : vector<16x128xf32>
    %379 = vector.extract_strided_slice %370 {offsets = [0, 128], sizes = [16, 128], strides = [1, 1]} : vector<16x512xf32> to vector<16x128xf32>
    %cst_176 = arith.constant 5.000000e-01 : f32
    %380 = vector.broadcast %cst_176 : f32 to vector<16x128xf32>
    %381 = arith.mulf %380, %379 : vector<16x128xf32>
    %382 = math.tanh %381 : vector<16x128xf32>
    %cst_177 = arith.constant 1.000000e+00 : f32
    %383 = vector.broadcast %cst_177 : f32 to vector<16x128xf32>
    %384 = arith.addf %382, %383 : vector<16x128xf32>
    %cst_178 = arith.constant 5.000000e-01 : f32
    %385 = vector.broadcast %cst_178 : f32 to vector<16x128xf32>
    %386 = arith.mulf %385, %384 : vector<16x128xf32>
    %387 = vector.extract_strided_slice %370 {offsets = [0, 256], sizes = [16, 128], strides = [1, 1]} : vector<16x512xf32> to vector<16x128xf32>
    %388 = math.tanh %387 : vector<16x128xf32>
    %389 = vector.extract_strided_slice %370 {offsets = [0, 384], sizes = [16, 128], strides = [1, 1]} : vector<16x512xf32> to vector<16x128xf32>
    %cst_179 = arith.constant 5.000000e-01 : f32
    %390 = vector.broadcast %cst_179 : f32 to vector<16x128xf32>
    %391 = arith.mulf %390, %389 : vector<16x128xf32>
    %392 = math.tanh %391 : vector<16x128xf32>
    %cst_180 = arith.constant 1.000000e+00 : f32
    %393 = vector.broadcast %cst_180 : f32 to vector<16x128xf32>
    %394 = arith.addf %392, %393 : vector<16x128xf32>
    %cst_181 = arith.constant 5.000000e-01 : f32
    %395 = vector.broadcast %cst_181 : f32 to vector<16x128xf32>
    %396 = arith.mulf %395, %394 : vector<16x128xf32>
    %397 = arith.mulf %386, %364 : vector<16x128xf32>
    %398 = arith.mulf %378, %388 : vector<16x128xf32>
    %399 = arith.addf %397, %398 : vector<16x128xf32>
    %400 = math.tanh %399 : vector<16x128xf32>
    %401 = arith.mulf %396, %400 : vector<16x128xf32>
    %402 = arith.truncf %401 : vector<16x128xf32> to vector<16x128xbf16>
    %c1_182 = arith.constant 1 : index
    %c0_183 = arith.constant 0 : index
    %c0_184 = arith.constant 0 : index
    %403 = vector.load %arg9[%c1_182, %c0_183, %c0_184] : memref<8x16x512xbf16, #tpu.memory_space<vmem>>, vector<1x16x512xbf16>
    %404 = vector.shape_cast %403 : vector<1x16x512xbf16> to vector<16x512xbf16>
    %405 = arith.extf %404 : vector<16x512xbf16> to vector<16x512xf32>
    %cst_185 = arith.constant dense<0.000000e+00> : vector<16x512xf32>
    %406 = tpu.matmul %402, %352, %cst_185 {dimension_numbers = #tpu.dot_dimension_numbers<[1], [0], [0], [1], [0, 0, 1, 1], [], []>} : vector<16x128xbf16>, vector<128x512xbf16>, vector<16x512xf32> -> vector<16x512xf32>
    %407 = arith.addf %405, %406 : vector<16x512xf32>
    %408 = vector.extract_strided_slice %407 {offsets = [0, 0], sizes = [16, 128], strides = [1, 1]} : vector<16x512xf32> to vector<16x128xf32>
    %cst_186 = arith.constant 5.000000e-01 : f32
    %409 = vector.broadcast %cst_186 : f32 to vector<16x128xf32>
    %410 = arith.mulf %409, %408 : vector<16x128xf32>
    %411 = math.tanh %410 : vector<16x128xf32>
    %cst_187 = arith.constant 1.000000e+00 : f32
    %412 = vector.broadcast %cst_187 : f32 to vector<16x128xf32>
    %413 = arith.addf %411, %412 : vector<16x128xf32>
    %cst_188 = arith.constant 5.000000e-01 : f32
    %414 = vector.broadcast %cst_188 : f32 to vector<16x128xf32>
    %415 = arith.mulf %414, %413 : vector<16x128xf32>
    %416 = vector.extract_strided_slice %407 {offsets = [0, 128], sizes = [16, 128], strides = [1, 1]} : vector<16x512xf32> to vector<16x128xf32>
    %cst_189 = arith.constant 5.000000e-01 : f32
    %417 = vector.broadcast %cst_189 : f32 to vector<16x128xf32>
    %418 = arith.mulf %417, %416 : vector<16x128xf32>
    %419 = math.tanh %418 : vector<16x128xf32>
    %cst_190 = arith.constant 1.000000e+00 : f32
    %420 = vector.broadcast %cst_190 : f32 to vector<16x128xf32>
    %421 = arith.addf %419, %420 : vector<16x128xf32>
    %cst_191 = arith.constant 5.000000e-01 : f32
    %422 = vector.broadcast %cst_191 : f32 to vector<16x128xf32>
    %423 = arith.mulf %422, %421 : vector<16x128xf32>
    %424 = vector.extract_strided_slice %407 {offsets = [0, 256], sizes = [16, 128], strides = [1, 1]} : vector<16x512xf32> to vector<16x128xf32>
    %425 = math.tanh %424 : vector<16x128xf32>
    %426 = vector.extract_strided_slice %407 {offsets = [0, 384], sizes = [16, 128], strides = [1, 1]} : vector<16x512xf32> to vector<16x128xf32>
    %cst_192 = arith.constant 5.000000e-01 : f32
    %427 = vector.broadcast %cst_192 : f32 to vector<16x128xf32>
    %428 = arith.mulf %427, %426 : vector<16x128xf32>
    %429 = math.tanh %428 : vector<16x128xf32>
    %cst_193 = arith.constant 1.000000e+00 : f32
    %430 = vector.broadcast %cst_193 : f32 to vector<16x128xf32>
    %431 = arith.addf %429, %430 : vector<16x128xf32>
    %cst_194 = arith.constant 5.000000e-01 : f32
    %432 = vector.broadcast %cst_194 : f32 to vector<16x128xf32>
    %433 = arith.mulf %432, %431 : vector<16x128xf32>
    %434 = arith.mulf %423, %399 : vector<16x128xf32>
    %435 = arith.mulf %415, %425 : vector<16x128xf32>
    %436 = arith.addf %434, %435 : vector<16x128xf32>
    %437 = math.tanh %436 : vector<16x128xf32>
    %438 = arith.mulf %433, %437 : vector<16x128xf32>
    %439 = arith.truncf %438 : vector<16x128xf32> to vector<16x128xbf16>
    %c2_195 = arith.constant 2 : index
    %c0_196 = arith.constant 0 : index
    %c0_197 = arith.constant 0 : index
    %440 = vector.load %arg9[%c2_195, %c0_196, %c0_197] : memref<8x16x512xbf16, #tpu.memory_space<vmem>>, vector<1x16x512xbf16>
    %441 = vector.shape_cast %440 : vector<1x16x512xbf16> to vector<16x512xbf16>
    %442 = arith.extf %441 : vector<16x512xbf16> to vector<16x512xf32>
    %cst_198 = arith.constant dense<0.000000e+00> : vector<16x512xf32>
    %443 = tpu.matmul %439, %352, %cst_198 {dimension_numbers = #tpu.dot_dimension_numbers<[1], [0], [0], [1], [0, 0, 1, 1], [], []>} : vector<16x128xbf16>, vector<128x512xbf16>, vector<16x512xf32> -> vector<16x512xf32>
    %444 = arith.addf %442, %443 : vector<16x512xf32>
    %445 = vector.extract_strided_slice %444 {offsets = [0, 0], sizes = [16, 128], strides = [1, 1]} : vector<16x512xf32> to vector<16x128xf32>
    %cst_199 = arith.constant 5.000000e-01 : f32
    %446 = vector.broadcast %cst_199 : f32 to vector<16x128xf32>
    %447 = arith.mulf %446, %445 : vector<16x128xf32>
    %448 = math.tanh %447 : vector<16x128xf32>
    %cst_200 = arith.constant 1.000000e+00 : f32
    %449 = vector.broadcast %cst_200 : f32 to vector<16x128xf32>
    %450 = arith.addf %448, %449 : vector<16x128xf32>
    %cst_201 = arith.constant 5.000000e-01 : f32
    %451 = vector.broadcast %cst_201 : f32 to vector<16x128xf32>
    %452 = arith.mulf %451, %450 : vector<16x128xf32>
    %453 = vector.extract_strided_slice %444 {offsets = [0, 128], sizes = [16, 128], strides = [1, 1]} : vector<16x512xf32> to vector<16x128xf32>
    %cst_202 = arith.constant 5.000000e-01 : f32
    %454 = vector.broadcast %cst_202 : f32 to vector<16x128xf32>
    %455 = arith.mulf %454, %453 : vector<16x128xf32>
    %456 = math.tanh %455 : vector<16x128xf32>
    %cst_203 = arith.constant 1.000000e+00 : f32
    %457 = vector.broadcast %cst_203 : f32 to vector<16x128xf32>
    %458 = arith.addf %456, %457 : vector<16x128xf32>
    %cst_204 = arith.constant 5.000000e-01 : f32
    %459 = vector.broadcast %cst_204 : f32 to vector<16x128xf32>
    %460 = arith.mulf %459, %458 : vector<16x128xf32>
    %461 = vector.extract_strided_slice %444 {offsets = [0, 256], sizes = [16, 128], strides = [1, 1]} : vector<16x512xf32> to vector<16x128xf32>
    %462 = math.tanh %461 : vector<16x128xf32>
    %463 = vector.extract_strided_slice %444 {offsets = [0, 384], sizes = [16, 128], strides = [1, 1]} : vector<16x512xf32> to vector<16x128xf32>
    %cst_205 = arith.constant 5.000000e-01 : f32
    %464 = vector.broadcast %cst_205 : f32 to vector<16x128xf32>
    %465 = arith.mulf %464, %463 : vector<16x128xf32>
    %466 = math.tanh %465 : vector<16x128xf32>
    %cst_206 = arith.constant 1.000000e+00 : f32
    %467 = vector.broadcast %cst_206 : f32 to vector<16x128xf32>
    %468 = arith.addf %466, %467 : vector<16x128xf32>
    %cst_207 = arith.constant 5.000000e-01 : f32
    %469 = vector.broadcast %cst_207 : f32 to vector<16x128xf32>
    %470 = arith.mulf %469, %468 : vector<16x128xf32>
    %471 = arith.mulf %460, %436 : vector<16x128xf32>
    %472 = arith.mulf %452, %462 : vector<16x128xf32>
    %473 = arith.addf %471, %472 : vector<16x128xf32>
    %474 = math.tanh %473 : vector<16x128xf32>
    %475 = arith.mulf %470, %474 : vector<16x128xf32>
    %476 = arith.truncf %475 : vector<16x128xf32> to vector<16x128xbf16>
    %c3_208 = arith.constant 3 : index
    %c0_209 = arith.constant 0 : index
    %c0_210 = arith.constant 0 : index
    %477 = vector.load %arg9[%c3_208, %c0_209, %c0_210] : memref<8x16x512xbf16, #tpu.memory_space<vmem>>, vector<1x16x512xbf16>
    %478 = vector.shape_cast %477 : vector<1x16x512xbf16> to vector<16x512xbf16>
    %479 = arith.extf %478 : vector<16x512xbf16> to vector<16x512xf32>
    %cst_211 = arith.constant dense<0.000000e+00> : vector<16x512xf32>
    %480 = tpu.matmul %476, %352, %cst_211 {dimension_numbers = #tpu.dot_dimension_numbers<[1], [0], [0], [1], [0, 0, 1, 1], [], []>} : vector<16x128xbf16>, vector<128x512xbf16>, vector<16x512xf32> -> vector<16x512xf32>
    %481 = arith.addf %479, %480 : vector<16x512xf32>
    %482 = vector.extract_strided_slice %481 {offsets = [0, 0], sizes = [16, 128], strides = [1, 1]} : vector<16x512xf32> to vector<16x128xf32>
    %cst_212 = arith.constant 5.000000e-01 : f32
    %483 = vector.broadcast %cst_212 : f32 to vector<16x128xf32>
    %484 = arith.mulf %483, %482 : vector<16x128xf32>
    %485 = math.tanh %484 : vector<16x128xf32>
    %cst_213 = arith.constant 1.000000e+00 : f32
    %486 = vector.broadcast %cst_213 : f32 to vector<16x128xf32>
    %487 = arith.addf %485, %486 : vector<16x128xf32>
    %cst_214 = arith.constant 5.000000e-01 : f32
    %488 = vector.broadcast %cst_214 : f32 to vector<16x128xf32>
    %489 = arith.mulf %488, %487 : vector<16x128xf32>
    %490 = vector.extract_strided_slice %481 {offsets = [0, 128], sizes = [16, 128], strides = [1, 1]} : vector<16x512xf32> to vector<16x128xf32>
    %cst_215 = arith.constant 5.000000e-01 : f32
    %491 = vector.broadcast %cst_215 : f32 to vector<16x128xf32>
    %492 = arith.mulf %491, %490 : vector<16x128xf32>
    %493 = math.tanh %492 : vector<16x128xf32>
    %cst_216 = arith.constant 1.000000e+00 : f32
    %494 = vector.broadcast %cst_216 : f32 to vector<16x128xf32>
    %495 = arith.addf %493, %494 : vector<16x128xf32>
    %cst_217 = arith.constant 5.000000e-01 : f32
    %496 = vector.broadcast %cst_217 : f32 to vector<16x128xf32>
    %497 = arith.mulf %496, %495 : vector<16x128xf32>
    %498 = vector.extract_strided_slice %481 {offsets = [0, 256], sizes = [16, 128], strides = [1, 1]} : vector<16x512xf32> to vector<16x128xf32>
    %499 = math.tanh %498 : vector<16x128xf32>
    %500 = vector.extract_strided_slice %481 {offsets = [0, 384], sizes = [16, 128], strides = [1, 1]} : vector<16x512xf32> to vector<16x128xf32>
    %cst_218 = arith.constant 5.000000e-01 : f32
    %501 = vector.broadcast %cst_218 : f32 to vector<16x128xf32>
    %502 = arith.mulf %501, %500 : vector<16x128xf32>
    %503 = math.tanh %502 : vector<16x128xf32>
    %cst_219 = arith.constant 1.000000e+00 : f32
    %504 = vector.broadcast %cst_219 : f32 to vector<16x128xf32>
    %505 = arith.addf %503, %504 : vector<16x128xf32>
    %cst_220 = arith.constant 5.000000e-01 : f32
    %506 = vector.broadcast %cst_220 : f32 to vector<16x128xf32>
    %507 = arith.mulf %506, %505 : vector<16x128xf32>
    %508 = arith.mulf %497, %473 : vector<16x128xf32>
    %509 = arith.mulf %489, %499 : vector<16x128xf32>
    %510 = arith.addf %508, %509 : vector<16x128xf32>
    %511 = math.tanh %510 : vector<16x128xf32>
    %512 = arith.mulf %507, %511 : vector<16x128xf32>
    %513 = arith.truncf %512 : vector<16x128xf32> to vector<16x128xbf16>
    %c4_221 = arith.constant 4 : index
    %c0_222 = arith.constant 0 : index
    %c0_223 = arith.constant 0 : index
    %514 = vector.load %arg9[%c4_221, %c0_222, %c0_223] : memref<8x16x512xbf16, #tpu.memory_space<vmem>>, vector<1x16x512xbf16>
    %515 = vector.shape_cast %514 : vector<1x16x512xbf16> to vector<16x512xbf16>
    %516 = arith.extf %515 : vector<16x512xbf16> to vector<16x512xf32>
    %cst_224 = arith.constant dense<0.000000e+00> : vector<16x512xf32>
    %517 = tpu.matmul %513, %352, %cst_224 {dimension_numbers = #tpu.dot_dimension_numbers<[1], [0], [0], [1], [0, 0, 1, 1], [], []>} : vector<16x128xbf16>, vector<128x512xbf16>, vector<16x512xf32> -> vector<16x512xf32>
    %518 = arith.addf %516, %517 : vector<16x512xf32>
    %519 = vector.extract_strided_slice %518 {offsets = [0, 0], sizes = [16, 128], strides = [1, 1]} : vector<16x512xf32> to vector<16x128xf32>
    %cst_225 = arith.constant 5.000000e-01 : f32
    %520 = vector.broadcast %cst_225 : f32 to vector<16x128xf32>
    %521 = arith.mulf %520, %519 : vector<16x128xf32>
    %522 = math.tanh %521 : vector<16x128xf32>
    %cst_226 = arith.constant 1.000000e+00 : f32
    %523 = vector.broadcast %cst_226 : f32 to vector<16x128xf32>
    %524 = arith.addf %522, %523 : vector<16x128xf32>
    %cst_227 = arith.constant 5.000000e-01 : f32
    %525 = vector.broadcast %cst_227 : f32 to vector<16x128xf32>
    %526 = arith.mulf %525, %524 : vector<16x128xf32>
    %527 = vector.extract_strided_slice %518 {offsets = [0, 128], sizes = [16, 128], strides = [1, 1]} : vector<16x512xf32> to vector<16x128xf32>
    %cst_228 = arith.constant 5.000000e-01 : f32
    %528 = vector.broadcast %cst_228 : f32 to vector<16x128xf32>
    %529 = arith.mulf %528, %527 : vector<16x128xf32>
    %530 = math.tanh %529 : vector<16x128xf32>
    %cst_229 = arith.constant 1.000000e+00 : f32
    %531 = vector.broadcast %cst_229 : f32 to vector<16x128xf32>
    %532 = arith.addf %530, %531 : vector<16x128xf32>
    %cst_230 = arith.constant 5.000000e-01 : f32
    %533 = vector.broadcast %cst_230 : f32 to vector<16x128xf32>
    %534 = arith.mulf %533, %532 : vector<16x128xf32>
    %535 = vector.extract_strided_slice %518 {offsets = [0, 256], sizes = [16, 128], strides = [1, 1]} : vector<16x512xf32> to vector<16x128xf32>
    %536 = math.tanh %535 : vector<16x128xf32>
    %537 = vector.extract_strided_slice %518 {offsets = [0, 384], sizes = [16, 128], strides = [1, 1]} : vector<16x512xf32> to vector<16x128xf32>
    %cst_231 = arith.constant 5.000000e-01 : f32
    %538 = vector.broadcast %cst_231 : f32 to vector<16x128xf32>
    %539 = arith.mulf %538, %537 : vector<16x128xf32>
    %540 = math.tanh %539 : vector<16x128xf32>
    %cst_232 = arith.constant 1.000000e+00 : f32
    %541 = vector.broadcast %cst_232 : f32 to vector<16x128xf32>
    %542 = arith.addf %540, %541 : vector<16x128xf32>
    %cst_233 = arith.constant 5.000000e-01 : f32
    %543 = vector.broadcast %cst_233 : f32 to vector<16x128xf32>
    %544 = arith.mulf %543, %542 : vector<16x128xf32>
    %545 = arith.mulf %534, %510 : vector<16x128xf32>
    %546 = arith.mulf %526, %536 : vector<16x128xf32>
    %547 = arith.addf %545, %546 : vector<16x128xf32>
    %548 = math.tanh %547 : vector<16x128xf32>
    %549 = arith.mulf %544, %548 : vector<16x128xf32>
    %550 = arith.truncf %549 : vector<16x128xf32> to vector<16x128xbf16>
    %c5_234 = arith.constant 5 : index
    %c0_235 = arith.constant 0 : index
    %c0_236 = arith.constant 0 : index
    %551 = vector.load %arg9[%c5_234, %c0_235, %c0_236] : memref<8x16x512xbf16, #tpu.memory_space<vmem>>, vector<1x16x512xbf16>
    %552 = vector.shape_cast %551 : vector<1x16x512xbf16> to vector<16x512xbf16>
    %553 = arith.extf %552 : vector<16x512xbf16> to vector<16x512xf32>
    %cst_237 = arith.constant dense<0.000000e+00> : vector<16x512xf32>
    %554 = tpu.matmul %550, %352, %cst_237 {dimension_numbers = #tpu.dot_dimension_numbers<[1], [0], [0], [1], [0, 0, 1, 1], [], []>} : vector<16x128xbf16>, vector<128x512xbf16>, vector<16x512xf32> -> vector<16x512xf32>
    %555 = arith.addf %553, %554 : vector<16x512xf32>
    %556 = vector.extract_strided_slice %555 {offsets = [0, 0], sizes = [16, 128], strides = [1, 1]} : vector<16x512xf32> to vector<16x128xf32>
    %cst_238 = arith.constant 5.000000e-01 : f32
    %557 = vector.broadcast %cst_238 : f32 to vector<16x128xf32>
    %558 = arith.mulf %557, %556 : vector<16x128xf32>
    %559 = math.tanh %558 : vector<16x128xf32>
    %cst_239 = arith.constant 1.000000e+00 : f32
    %560 = vector.broadcast %cst_239 : f32 to vector<16x128xf32>
    %561 = arith.addf %559, %560 : vector<16x128xf32>
    %cst_240 = arith.constant 5.000000e-01 : f32
    %562 = vector.broadcast %cst_240 : f32 to vector<16x128xf32>
    %563 = arith.mulf %562, %561 : vector<16x128xf32>
    %564 = vector.extract_strided_slice %555 {offsets = [0, 128], sizes = [16, 128], strides = [1, 1]} : vector<16x512xf32> to vector<16x128xf32>
    %cst_241 = arith.constant 5.000000e-01 : f32
    %565 = vector.broadcast %cst_241 : f32 to vector<16x128xf32>
    %566 = arith.mulf %565, %564 : vector<16x128xf32>
    %567 = math.tanh %566 : vector<16x128xf32>
    %cst_242 = arith.constant 1.000000e+00 : f32
    %568 = vector.broadcast %cst_242 : f32 to vector<16x128xf32>
    %569 = arith.addf %567, %568 : vector<16x128xf32>
    %cst_243 = arith.constant 5.000000e-01 : f32
    %570 = vector.broadcast %cst_243 : f32 to vector<16x128xf32>
    %571 = arith.mulf %570, %569 : vector<16x128xf32>
    %572 = vector.extract_strided_slice %555 {offsets = [0, 256], sizes = [16, 128], strides = [1, 1]} : vector<16x512xf32> to vector<16x128xf32>
    %573 = math.tanh %572 : vector<16x128xf32>
    %574 = vector.extract_strided_slice %555 {offsets = [0, 384], sizes = [16, 128], strides = [1, 1]} : vector<16x512xf32> to vector<16x128xf32>
    %cst_244 = arith.constant 5.000000e-01 : f32
    %575 = vector.broadcast %cst_244 : f32 to vector<16x128xf32>
    %576 = arith.mulf %575, %574 : vector<16x128xf32>
    %577 = math.tanh %576 : vector<16x128xf32>
    %cst_245 = arith.constant 1.000000e+00 : f32
    %578 = vector.broadcast %cst_245 : f32 to vector<16x128xf32>
    %579 = arith.addf %577, %578 : vector<16x128xf32>
    %cst_246 = arith.constant 5.000000e-01 : f32
    %580 = vector.broadcast %cst_246 : f32 to vector<16x128xf32>
    %581 = arith.mulf %580, %579 : vector<16x128xf32>
    %582 = arith.mulf %571, %547 : vector<16x128xf32>
    %583 = arith.mulf %563, %573 : vector<16x128xf32>
    %584 = arith.addf %582, %583 : vector<16x128xf32>
    %585 = math.tanh %584 : vector<16x128xf32>
    %586 = arith.mulf %581, %585 : vector<16x128xf32>
    %587 = arith.truncf %586 : vector<16x128xf32> to vector<16x128xbf16>
    %c6_247 = arith.constant 6 : index
    %c0_248 = arith.constant 0 : index
    %c0_249 = arith.constant 0 : index
    %588 = vector.load %arg9[%c6_247, %c0_248, %c0_249] : memref<8x16x512xbf16, #tpu.memory_space<vmem>>, vector<1x16x512xbf16>
    %589 = vector.shape_cast %588 : vector<1x16x512xbf16> to vector<16x512xbf16>
    %590 = arith.extf %589 : vector<16x512xbf16> to vector<16x512xf32>
    %cst_250 = arith.constant dense<0.000000e+00> : vector<16x512xf32>
    %591 = tpu.matmul %587, %352, %cst_250 {dimension_numbers = #tpu.dot_dimension_numbers<[1], [0], [0], [1], [0, 0, 1, 1], [], []>} : vector<16x128xbf16>, vector<128x512xbf16>, vector<16x512xf32> -> vector<16x512xf32>
    %592 = arith.addf %590, %591 : vector<16x512xf32>
    %593 = vector.extract_strided_slice %592 {offsets = [0, 0], sizes = [16, 128], strides = [1, 1]} : vector<16x512xf32> to vector<16x128xf32>
    %cst_251 = arith.constant 5.000000e-01 : f32
    %594 = vector.broadcast %cst_251 : f32 to vector<16x128xf32>
    %595 = arith.mulf %594, %593 : vector<16x128xf32>
    %596 = math.tanh %595 : vector<16x128xf32>
    %cst_252 = arith.constant 1.000000e+00 : f32
    %597 = vector.broadcast %cst_252 : f32 to vector<16x128xf32>
    %598 = arith.addf %596, %597 : vector<16x128xf32>
    %cst_253 = arith.constant 5.000000e-01 : f32
    %599 = vector.broadcast %cst_253 : f32 to vector<16x128xf32>
    %600 = arith.mulf %599, %598 : vector<16x128xf32>
    %601 = vector.extract_strided_slice %592 {offsets = [0, 128], sizes = [16, 128], strides = [1, 1]} : vector<16x512xf32> to vector<16x128xf32>
    %cst_254 = arith.constant 5.000000e-01 : f32
    %602 = vector.broadcast %cst_254 : f32 to vector<16x128xf32>
    %603 = arith.mulf %602, %601 : vector<16x128xf32>
    %604 = math.tanh %603 : vector<16x128xf32>
    %cst_255 = arith.constant 1.000000e+00 : f32
    %605 = vector.broadcast %cst_255 : f32 to vector<16x128xf32>
    %606 = arith.addf %604, %605 : vector<16x128xf32>
    %cst_256 = arith.constant 5.000000e-01 : f32
    %607 = vector.broadcast %cst_256 : f32 to vector<16x128xf32>
    %608 = arith.mulf %607, %606 : vector<16x128xf32>
    %609 = vector.extract_strided_slice %592 {offsets = [0, 256], sizes = [16, 128], strides = [1, 1]} : vector<16x512xf32> to vector<16x128xf32>
    %610 = math.tanh %609 : vector<16x128xf32>
    %611 = vector.extract_strided_slice %592 {offsets = [0, 384], sizes = [16, 128], strides = [1, 1]} : vector<16x512xf32> to vector<16x128xf32>
    %cst_257 = arith.constant 5.000000e-01 : f32
    %612 = vector.broadcast %cst_257 : f32 to vector<16x128xf32>
    %613 = arith.mulf %612, %611 : vector<16x128xf32>
    %614 = math.tanh %613 : vector<16x128xf32>
    %cst_258 = arith.constant 1.000000e+00 : f32
    %615 = vector.broadcast %cst_258 : f32 to vector<16x128xf32>
    %616 = arith.addf %614, %615 : vector<16x128xf32>
    %cst_259 = arith.constant 5.000000e-01 : f32
    %617 = vector.broadcast %cst_259 : f32 to vector<16x128xf32>
    %618 = arith.mulf %617, %616 : vector<16x128xf32>
    %619 = arith.mulf %608, %584 : vector<16x128xf32>
    %620 = arith.mulf %600, %610 : vector<16x128xf32>
    %621 = arith.addf %619, %620 : vector<16x128xf32>
    %622 = math.tanh %621 : vector<16x128xf32>
    %623 = arith.mulf %618, %622 : vector<16x128xf32>
    %624 = arith.truncf %623 : vector<16x128xf32> to vector<16x128xbf16>
    %c7_260 = arith.constant 7 : index
    %c0_261 = arith.constant 0 : index
    %c0_262 = arith.constant 0 : index
    %625 = vector.load %arg9[%c7_260, %c0_261, %c0_262] : memref<8x16x512xbf16, #tpu.memory_space<vmem>>, vector<1x16x512xbf16>
    %626 = vector.shape_cast %625 : vector<1x16x512xbf16> to vector<16x512xbf16>
    %627 = arith.extf %626 : vector<16x512xbf16> to vector<16x512xf32>
    %cst_263 = arith.constant dense<0.000000e+00> : vector<16x512xf32>
    %628 = tpu.matmul %624, %352, %cst_263 {dimension_numbers = #tpu.dot_dimension_numbers<[1], [0], [0], [1], [0, 0, 1, 1], [], []>} : vector<16x128xbf16>, vector<128x512xbf16>, vector<16x512xf32> -> vector<16x512xf32>
    %629 = arith.addf %627, %628 : vector<16x512xf32>
    %630 = vector.extract_strided_slice %629 {offsets = [0, 0], sizes = [16, 128], strides = [1, 1]} : vector<16x512xf32> to vector<16x128xf32>
    %cst_264 = arith.constant 5.000000e-01 : f32
    %631 = vector.broadcast %cst_264 : f32 to vector<16x128xf32>
    %632 = arith.mulf %631, %630 : vector<16x128xf32>
    %633 = math.tanh %632 : vector<16x128xf32>
    %cst_265 = arith.constant 1.000000e+00 : f32
    %634 = vector.broadcast %cst_265 : f32 to vector<16x128xf32>
    %635 = arith.addf %633, %634 : vector<16x128xf32>
    %cst_266 = arith.constant 5.000000e-01 : f32
    %636 = vector.broadcast %cst_266 : f32 to vector<16x128xf32>
    %637 = arith.mulf %636, %635 : vector<16x128xf32>
    %638 = vector.extract_strided_slice %629 {offsets = [0, 128], sizes = [16, 128], strides = [1, 1]} : vector<16x512xf32> to vector<16x128xf32>
    %cst_267 = arith.constant 5.000000e-01 : f32
    %639 = vector.broadcast %cst_267 : f32 to vector<16x128xf32>
    %640 = arith.mulf %639, %638 : vector<16x128xf32>
    %641 = math.tanh %640 : vector<16x128xf32>
    %cst_268 = arith.constant 1.000000e+00 : f32
    %642 = vector.broadcast %cst_268 : f32 to vector<16x128xf32>
    %643 = arith.addf %641, %642 : vector<16x128xf32>
    %cst_269 = arith.constant 5.000000e-01 : f32
    %644 = vector.broadcast %cst_269 : f32 to vector<16x128xf32>
    %645 = arith.mulf %644, %643 : vector<16x128xf32>
    %646 = vector.extract_strided_slice %629 {offsets = [0, 256], sizes = [16, 128], strides = [1, 1]} : vector<16x512xf32> to vector<16x128xf32>
    %647 = math.tanh %646 : vector<16x128xf32>
    %648 = vector.extract_strided_slice %629 {offsets = [0, 384], sizes = [16, 128], strides = [1, 1]} : vector<16x512xf32> to vector<16x128xf32>
    %cst_270 = arith.constant 5.000000e-01 : f32
    %649 = vector.broadcast %cst_270 : f32 to vector<16x128xf32>
    %650 = arith.mulf %649, %648 : vector<16x128xf32>
    %651 = math.tanh %650 : vector<16x128xf32>
    %cst_271 = arith.constant 1.000000e+00 : f32
    %652 = vector.broadcast %cst_271 : f32 to vector<16x128xf32>
    %653 = arith.addf %651, %652 : vector<16x128xf32>
    %cst_272 = arith.constant 5.000000e-01 : f32
    %654 = vector.broadcast %cst_272 : f32 to vector<16x128xf32>
    %655 = arith.mulf %654, %653 : vector<16x128xf32>
    %656 = arith.mulf %645, %621 : vector<16x128xf32>
    %657 = arith.mulf %637, %647 : vector<16x128xf32>
    %658 = arith.addf %656, %657 : vector<16x128xf32>
    %659 = math.tanh %658 : vector<16x128xf32>
    %660 = arith.mulf %655, %659 : vector<16x128xf32>
    %c1_273 = arith.constant 1 : index
    %c0_274 = arith.constant 0 : index
    %c0_275 = arith.constant 0 : index
    %661 = vector.load %arg7[%c1_273, %c0_274, %c0_275] : memref<2x16x128xf32, #tpu.memory_space<vmem>>, vector<1x16x128xf32>
    %662 = vector.shape_cast %661 : vector<1x16x128xf32> to vector<16x128xf32>
    %663 = vector.shape_cast %660 : vector<16x128xf32> to vector<1x16x128xf32>
    tpu.vector_store %arg7[%c1_273, %c0_274, %c0_275], %663 {strides = array<i32>} : memref<2x16x128xf32, #tpu.memory_space<vmem>>, vector<1x16x128xf32>,
    %c1_276 = arith.constant 1 : index
    %c0_277 = arith.constant 0 : index
    %c0_278 = arith.constant 0 : index
    %664 = vector.load %arg8[%c1_276, %c0_277, %c0_278] : memref<2x16x128xf32, #tpu.memory_space<vmem>>, vector<1x16x128xf32>
    %665 = vector.shape_cast %664 : vector<1x16x128xf32> to vector<16x128xf32>
    %666 = vector.shape_cast %658 : vector<16x128xf32> to vector<1x16x128xf32>
    tpu.vector_store %arg8[%c1_276, %c0_277, %c0_278], %666 {strides = array<i32>} : memref<2x16x128xf32, #tpu.memory_space<vmem>>, vector<1x16x128xf32>,
    %c0_i32_279 = arith.constant 0 : i32
    %667 = arith.cmpi eq, %arg0, %c0_i32_279 : i32
    %668 = arith.extui %667 : i1 to i32
    %c0_i32_280 = arith.constant 0 : i32
    %669 = arith.cmpi ne, %668, %c0_i32_280 : i32
    scf.if %669 {
      %c0_281 = arith.constant 0 : index
      %c0_282 = arith.constant 0 : index
      %c0_283 = arith.constant 0 : index
      %670 = vector.load %arg7[%c0_281, %c0_282, %c0_283] : memref<2x16x128xf32, #tpu.memory_space<vmem>>, vector<2x16x128xf32>
      %c0_284 = arith.constant 0 : index
      %c0_285 = arith.constant 0 : index
      %c0_286 = arith.constant 0 : index
      %671 = vector.load %arg6[%c0_284, %c0_285, %c0_286] : memref<2x16x128xf32, #tpu.memory_space<vmem>>, vector<2x16x128xf32>
      tpu.vector_store %arg6[%c0_284, %c0_285, %c0_286], %670 {strides = array<i32>} : memref<2x16x128xf32, #tpu.memory_space<vmem>>, vector<2x16x128xf32>,
    } else {
    }
    return
  }
  func.func @transform_0(%arg0: i32) -> (i32, i32, i32) {
    %c0_i32 = arith.constant 0 : i32
    %c0_i32_0 = arith.constant 0 : i32
    %c0_i32_1 = arith.constant 0 : i32
    return %arg0, %c0_i32, %c0_i32_0 : i32, i32, i32
  }
  func.func @transform_1(%arg0: i32) -> (i32, i32) {
    %c0_i32 = arith.constant 0 : i32
    %c0_i32_0 = arith.constant 0 : i32
    %c0_i32_1 = arith.constant 0 : i32
    return %c0_i32, %c0_i32_0 : i32, i32
  }
  func.func @transform_2(%arg0: i32) -> (i32, i32, i32) {
    %c0_i32 = arith.constant 0 : i32
    %c0_i32_0 = arith.constant 0 : i32
    %c0_i32_1 = arith.constant 0 : i32
    %c0_i32_2 = arith.constant 0 : i32
    return %c0_i32, %c0_i32_0, %c0_i32_1 : i32, i32, i32
  }
  func.func @transform_3(%arg0: i32) -> (i32, i32, i32) {
    %c0_i32 = arith.constant 0 : i32
    %c0_i32_0 = arith.constant 0 : i32
    %c0_i32_1 = arith.constant 0 : i32
    %c0_i32_2 = arith.constant 0 : i32
    return %c0_i32, %c0_i32_0, %c0_i32_1 : i32, i32, i32
  }
  func.func @transform_4(%arg0: i32) -> (i32, i32, i32) {
    %c0_i32 = arith.constant 0 : i32
    %c0_i32_0 = arith.constant 0 : i32
    %c0_i32_1 = arith.constant 0 : i32
    %c0_i32_2 = arith.constant 0 : i32
    return %c0_i32, %c0_i32_0, %c0_i32_1 : i32, i32, i32
  }
  func.func @transform_5(%arg0: i32) -> (i32, i32, i32) {
    %c0_i32 = arith.constant 0 : i32
    %c0_i32_0 = arith.constant 0 : i32
    %c0_i32_1 = arith.constant 0 : i32
    %c0_i32_2 = arith.constant 0 : i32
    return %c0_i32, %c0_i32_0, %c0_i32_1 : i32, i32, i32
  }
}

</mosaic_0001>

<llo_original>
// kernel: encoder_forward.1
$region0: #{encoder_forward.1}
  #allocation0 [shape = 'u32[]', space=smem, size = 0x4, offset = 0x4, fixed_abs, tag = 'smem constant byte address 0x4 - core index']
  #allocation1 [shape = 'u32[144,128]{1,0:T(1,128)}', space=vmem, size = 0x12000, scoped, tag = 'internal scratch']
  #allocation2 [shape = 'f32[2,16,128]{2,1,0:T(8,128)}', space=vmem, size = 0x4000, scoped, tag = 'scratch operand']
  #allocation3 [shape = 'f32[2,16,128]{2,1,0:T(8,128)}', space=vmem, size = 0x4000, scoped, tag = 'scratch operand']
  #allocation4 [shape = 'bf16[8,16,512]{2,1,0:T(16,128)(2,1)}', space=vmem, size = 0x20000, scoped, tag = 'scratch operand']
  #allocation5 [shape = 'bf16[8,16,128]{2,1,0:T(16,128)(2,1)}', space=vmem, size = 0x8000, scoped, tag = 'scratch operand']
  %s0 = inlined_call_operand.vmem [shape: bf16[8,16,128], index: 0, kind: input, shape index: {}]
  %s1 = inlined_call_operand.hbm [shape: bf16[128,512], index: 1, kind: input, shape index: {}]
  %s2 = inlined_call_operand.hbm [shape: bf16[1,128,512], index: 2, kind: input, shape index: {}]
  %s3 = inlined_call_operand.hbm [shape: bf16[2,128,512], index: 3, kind: input, shape index: {}]
  %s4 = inlined_call_operand.vmem [shape: f32[2,1,512], index: 4, kind: input, shape index: {}]
  %s5 = inlined_call_operand.vmem [shape: f32[2,16,128], index: 5, kind: output, shape index: {}]
  %s6 = sld [smem:[#allocation0]]
  $region50: #{encoder_forward.1} parent=0
    _
  %s8 = ssub.s32 1, %s6
  %s9 = scalar_select 0, %s8, %s6
  $region1: #{encoder_forward.1} parent=0
    #allocation6 [shape = 'u8[131072]{0}', space=vmem, size = 0x20000, scoped, tag = 'input window, operand 1, single buffered']
    #allocation7 [shape = 's32[1]{0}', space=sflag, size = 0x4, scoped, tag = 'scoped memory for encoder_forward.1']
    #allocation8 [shape = 'u8[131072]{0}', space=vmem, size = 0x20000, scoped, tag = 'input window, operand 2, single buffered']
    #allocation9 [shape = 's32[1]{0}', space=sflag, size = 0x4, scoped, tag = 'scoped memory for encoder_forward.1']
    #allocation10 [shape = 'u8[262144]{0}', space=vmem, size = 0x40000, scoped, tag = 'input window, operand 3, single buffered']
    %10 = vsyncpa [#allocation7], 0
    %11 = vsyncpa [#allocation9], 0
    // Predicated region
    $region2: #{encoder_forward.1} parent=1 // pred_check
      _
    $region3: #{encoder_forward.1} parent=1 // pred_check_branch
      %13 = sbr.rel (0) target = $region5
    $region4: #{encoder_forward.1} parent=1 // pred_region
      _
    $region5: #{encoder_forward.1} parent=1 // pred_fallthru
      _
    // Predicated region
    $region6: #{encoder_forward.1} parent=1 // pred_check
      _
    $region7: #{encoder_forward.1} parent=1 // pred_check_branch
      %15 = sbr.rel (0) target = $region9
    $region8: #{encoder_forward.1} parent=1 // pred_region
      %s17 = ssub.s32 4096, 4096
      %18 = vsyncadd [#allocation7], %s17
      %s19 = sshll.u32 [#allocation6], 4
      %s20 = int_to_ptr.vmem [resolvable:$true] %s19
      %25 = dma.hbm_to_vmem [thread:$0]  %s1, 4096, %s20, [#allocation7], 256, 256, 16
    $region9: #{encoder_forward.1} parent=1 // pred_fallthru
      _
    // Predicated region
    $region10: #{encoder_forward.1} parent=1 // pred_check
      _
    $region11: #{encoder_forward.1} parent=1 // pred_check_branch
      %27 = sbr.rel (0) target = $region13
    $region12: #{encoder_forward.1} parent=1 // pred_region
      %s29 = ssub.s32 4096, 4096
      %30 = vsyncadd [#allocation9], %s29
      %s31 = sshll.u32 [#allocation8], 4
      %s32 = int_to_ptr.vmem [resolvable:$true] %s31
      %37 = dma.hbm_to_vmem [thread:$0]  %s2, 4096, %s32, [#allocation9], 256, 256, 16
    $region13: #{encoder_forward.1} parent=1 // pred_fallthru
      _
    // Predicated region
    $region14: #{encoder_forward.1} parent=1 // pred_check
      _
    $region15: #{encoder_forward.1} parent=1 // pred_check_branch
      %39 = sbr.rel (0) target = $region17
    $region16: #{encoder_forward.1} parent=1 // pred_region
      %s41 = ssub.s32 8192, 8192
      %42 = vsyncadd [#allocation9], %s41
      %s43 = sshll.u32 [#allocation10], 4
      %s44 = int_to_ptr.vmem [resolvable:$true] %s43
      %49 = dma.hbm_to_vmem [thread:$0]  %s3, 8192, %s44, [#allocation9], 256, 256, 16
    $region17: #{encoder_forward.1} parent=1 // pred_fallthru
      _
    // Predicated region
    $region18: #{encoder_forward.1} parent=1 // pred_check
      _
    $region19: #{encoder_forward.1} parent=1 // pred_check_branch
      %51 = sbr.rel (0) target = $region21
    $region20: #{encoder_forward.1} parent=1 // pred_region
      _
    $region21: #{encoder_forward.1} parent=1 // pred_fallthru
      _
    // Predicated region
    $region22: #{encoder_forward.1} parent=1 // pred_check
      _
    $region23: #{encoder_forward.1} parent=1 // pred_check_branch
      %53 = sbr.rel (0) target = $region25
    $region24: #{encoder_forward.1} parent=1 // pred_region
      %54 = dma.done [#allocation7], 4096
    $region25: #{encoder_forward.1} parent=1 // pred_fallthru
      _
    // Predicated region
    $region26: #{encoder_forward.1} parent=1 // pred_check
      _
    $region27: #{encoder_forward.1} parent=1 // pred_check_branch
      %56 = sbr.rel (0) target = $region29
    $region28: #{encoder_forward.1} parent=1 // pred_region
      %57 = dma.done [#allocation9], 4096
    $region29: #{encoder_forward.1} parent=1 // pred_fallthru
      _
    // Predicated region
    $region30: #{encoder_forward.1} parent=1 // pred_check
      _
    $region31: #{encoder_forward.1} parent=1 // pred_check_branch
      %59 = sbr.rel (0) target = $region33
    $region32: #{encoder_forward.1} parent=1 // pred_region
      %60 = dma.done [#allocation9], 8192
    $region33: #{encoder_forward.1} parent=1 // pred_fallthru
      _
    %p62 = scmp.eq.s32.totalorder 0, 0
    // Predicated region
    $region34: #{encoder_forward.1} parent=1 // pred_check
      %p63 = pneg %p62
    $region35: #{encoder_forward.1} parent=1 // pred_check_branch
      %65 = sbr.rel (%p63) target = $region37
    $region36: #{encoder_forward.1} parent=1 // pred_region
      %66 = vst [vmem:[#allocation2] sm:$0xff] 0.0
      %67 = vst [vmem:[#allocation2 + $0x8] sm:$0xff] 0.0
      %68 = vst [vmem:[#allocation2 + $0x10] sm:$0xff] 0.0
      %69 = vst [vmem:[#allocation2 + $0x18] sm:$0xff] 0.0
      %70 = vst [vmem:[#allocation3] sm:$0xff] 0.0
      %71 = vst [vmem:[#allocation3 + $0x8] sm:$0xff] 0.0
      %72 = vst [vmem:[#allocation3 + $0x10] sm:$0xff] 0.0
      %73 = vst [vmem:[#allocation3 + $0x18] sm:$0xff] 0.0
    $region37: #{encoder_forward.1} parent=1 // pred_fallthru
      _
    %v74 = vld [vmem:[%s0] sm:$0xf]
    %v75 = vld [vmem:[%s0 + $0x4] sm:$0xf]
    %v76 = vld [vmem:[%s0 + $0x8] sm:$0xf]
    %v77 = vld [vmem:[%s0 + $0xc] sm:$0xf]
    %v78 = vld [vmem:[%s0 + $0x10] sm:$0xf]
    %v79 = vld [vmem:[%s0 + $0x14] sm:$0xf]
    %v80 = vld [vmem:[%s0 + $0x18] sm:$0xf]
    %v81 = vld [vmem:[%s0 + $0x1c] sm:$0xf]
    %v82 = vld [vmem:[%s0 + $0x20] sm:$0xf]
    %v83 = vld [vmem:[%s0 + $0x24] sm:$0xf]
    %v84 = vld [vmem:[%s0 + $0x28] sm:$0xf]
    %v85 = vld [vmem:[%s0 + $0x2c] sm:$0xf]
    %v86 = vld [vmem:[%s0 + $0x30] sm:$0xf]
    %v87 = vld [vmem:[%s0 + $0x34] sm:$0xf]
    %v88 = vld [vmem:[%s0 + $0x38] sm:$0xf]
    %v89 = vld [vmem:[%s0 + $0x3c] sm:$0xf]
    %v90 = vld [vmem:[#allocation6] sm:$0xff]
    %v91 = vld [vmem:[#allocation6 + $0x8] sm:$0xff]
    %v92 = vld [vmem:[#allocation6 + $0x10] sm:$0xff]
    %v93 = vld [vmem:[#allocation6 + $0x18] sm:$0xff]
    %v94 = vld [vmem:[#allocation6 + $0x20] sm:$0xff]
    %v95 = vld [vmem:[#allocation6 + $0x28] sm:$0xff]
    %v96 = vld [vmem:[#allocation6 + $0x30] sm:$0xff]
    %v97 = vld [vmem:[#allocation6 + $0x38] sm:$0xff]
    %v98 = vld [vmem:[#allocation6 + $0x40] sm:$0xff]
    %v99 = vld [vmem:[#allocation6 + $0x48] sm:$0xff]
    %v100 = vld [vmem:[#allocation6 + $0x50] sm:$0xff]
    %v101 = vld [vmem:[#allocation6 + $0x58] sm:$0xff]
    %v102 = vld [vmem:[#allocation6 + $0x60] sm:$0xff]
    %v103 = vld [vmem:[#allocation6 + $0x68] sm:$0xff]
    %v104 = vld [vmem:[#allocation6 + $0x70] sm:$0xff]
    %v105 = vld [vmem:[#allocation6 + $0x78] sm:$0xff]
    %v106 = vld [vmem:[#allocation6 + $0x80] sm:$0xff]
    %v107 = vld [vmem:[#allocation6 + $0x88] sm:$0xff]
    %v108 = vld [vmem:[#allocation6 + $0x90] sm:$0xff]
    %v109 = vld [vmem:[#allocation6 + $0x98] sm:$0xff]
    %v110 = vld [vmem:[#allocation6 + $0xa0] sm:$0xff]
    %v111 = vld [vmem:[#allocation6 + $0xa8] sm:$0xff]
    %v112 = vld [vmem:[#allocation6 + $0xb0] sm:$0xff]
    %v113 = vld [vmem:[#allocation6 + $0xb8] sm:$0xff]
    %v114 = vld [vmem:[#allocation6 + $0xc0] sm:$0xff]
    %v115 = vld [vmem:[#allocation6 + $0xc8] sm:$0xff]
    %v116 = vld [vmem:[#allocation6 + $0xd0] sm:$0xff]
    %v117 = vld [vmem:[#allocation6 + $0xd8] sm:$0xff]
    %v118 = vld [vmem:[#allocation6 + $0xe0] sm:$0xff]
    %v119 = vld [vmem:[#allocation6 + $0xe8] sm:$0xff]
    %v120 = vld [vmem:[#allocation6 + $0xf0] sm:$0xff]
    %v121 = vld [vmem:[#allocation6 + $0xf8] sm:$0xff]
    %v122 = vld [vmem:[#allocation10] sm:$0xff]
    %v123 = vld [vmem:[#allocation10 + $0x8] sm:$0xff]
    %v124 = vld [vmem:[#allocation10 + $0x10] sm:$0xff]
    %v125 = vld [vmem:[#allocation10 + $0x18] sm:$0xff]
    %v126 = vld [vmem:[#allocation10 + $0x20] sm:$0xff]
    %v127 = vld [vmem:[#allocation10 + $0x28] sm:$0xff]
    %v128 = vld [vmem:[#allocation10 + $0x30] sm:$0xff]
    %v129 = vld [vmem:[#allocation10 + $0x38] sm:$0xff]
    %v130 = vld [vmem:[#allocation10 + $0x40] sm:$0xff]
    %v131 = vld [vmem:[#allocation10 + $0x48] sm:$0xff]
    %v132 = vld [vmem:[#allocation10 + $0x50] sm:$0xff]
    %v133 = vld [vmem:[#allocation10 + $0x58] sm:$0xff]
    %v134 = vld [vmem:[#allocation10 + $0x60] sm:$0xff]
    %v135 = vld [vmem:[#allocation10 + $0x68] sm:$0xff]
    %v136 = vld [vmem:[#allocation10 + $0x70] sm:$0xff]
    %v137 = vld [vmem:[#allocation10 + $0x78] sm:$0xff]
    %v138 = vld [vmem:[#allocation10 + $0x80] sm:$0xff]
    %v139 = vld [vmem:[#allocation10 + $0x88] sm:$0xff]
    %v140 = vld [vmem:[#allocation10 + $0x90] sm:$0xff]
    %v141 = vld [vmem:[#allocation10 + $0x98] sm:$0xff]
    %v142 = vld [vmem:[#allocation10 + $0xa0] sm:$0xff]
    %v143 = vld [vmem:[#allocation10 + $0xa8] sm:$0xff]
    %v144 = vld [vmem:[#allocation10 + $0xb0] sm:$0xff]
    %v145 = vld [vmem:[#allocation10 + $0xb8] sm:$0xff]
    %v146 = vld [vmem:[#allocation10 + $0xc0] sm:$0xff]
    %v147 = vld [vmem:[#allocation10 + $0xc8] sm:$0xff]
    %v148 = vld [vmem:[#allocation10 + $0xd0] sm:$0xff]
    %v149 = vld [vmem:[#allocation10 + $0xd8] sm:$0xff]
    %v150 = vld [vmem:[#allocation10 + $0xe0] sm:$0xff]
    %v151 = vld [vmem:[#allocation10 + $0xe8] sm:$0xff]
    %v152 = vld [vmem:[#allocation10 + $0xf0] sm:$0xff]
    %v153 = vld [vmem:[#allocation10 + $0xf8] sm:$0xff]
    %v154 = vld [vmem:[%s4] sm:$0xf]
    %v156 = vlaneseq
    %v157 = vshrl.u32 %v156, 7
    %v158 = vsub.s32 0, %v157
    %v159 = vrot.slane %v154, %v158
    %v160 = vlaneseq
    %v161 = vshrl.u32 %v160, 7
    %v162 = vsub.s32 1, %v161
    %v163 = vrot.slane %v154, %v162
    %v164 = vlaneseq
    %v165 = vshrl.u32 %v164, 7
    %v166 = vsub.s32 2, %v165
    %v167 = vrot.slane %v154, %v166
    %v168 = vlaneseq
    %v169 = vshrl.u32 %v168, 7
    %v170 = vsub.s32 3, %v169
    %v171 = vrot.slane %v154, %v170
    %v192 = vunpack.c.l.b16 %v74
    %v193 = vunpack.c.l.b16 %v75
    %v194 = vunpack.c.l.b16 %v76
    %v195 = vunpack.c.l.b16 %v77
    %v196 = vunpack.c.l.b16 %v78
    %v197 = vunpack.c.l.b16 %v79
    %v198 = vunpack.c.l.b16 %v80
    %v199 = vunpack.c.l.b16 %v81
    %v200 = vunpack.c.l.b16 %v82
    %v201 = vunpack.c.l.b16 %v83
    %v202 = vunpack.c.l.b16 %v84
    %v203 = vunpack.c.l.b16 %v85
    %v204 = vunpack.c.l.b16 %v86
    %v205 = vunpack.c.l.b16 %v87
    %v206 = vunpack.c.l.b16 %v88
    %v207 = vunpack.c.l.b16 %v89
    %v208 = vpack.c.b16 %v193, %v192
    %v209 = vpack.c.b16 %v195, %v194
    %v210 = vpack.c.b16 %v197, %v196
    %v211 = vpack.c.b16 %v199, %v198
    %v212 = vpack.c.b16 %v201, %v200
    %v213 = vpack.c.b16 %v203, %v202
    %v214 = vpack.c.b16 %v205, %v204
    %v215 = vpack.c.b16 %v207, %v206
    %v256 = vunpack.c.l.b16 %v90
    %v257 = vunpack.c.h.b16 %v90
    %v258 = vunpack.c.l.b16 %v91
    %v259 = vunpack.c.h.b16 %v91
    %v260 = vunpack.c.l.b16 %v92
    %v261 = vunpack.c.h.b16 %v92
    %v262 = vunpack.c.l.b16 %v93
    %v263 = vunpack.c.h.b16 %v93
    %v264 = vunpack.c.l.b16 %v94
    %v265 = vunpack.c.h.b16 %v94
    %v266 = vunpack.c.l.b16 %v95
    %v267 = vunpack.c.h.b16 %v95
    %v268 = vunpack.c.l.b16 %v96
    %v269 = vunpack.c.h.b16 %v96
    %v270 = vunpack.c.l.b16 %v97
    %v271 = vunpack.c.h.b16 %v97
    %v272 = vunpack.c.l.b16 %v98
    %v273 = vunpack.c.h.b16 %v98
    %v274 = vunpack.c.l.b16 %v99
    %v275 = vunpack.c.h.b16 %v99
    %v276 = vunpack.c.l.b16 %v100
    %v277 = vunpack.c.h.b16 %v100
    %v278 = vunpack.c.l.b16 %v101
    %v279 = vunpack.c.h.b16 %v101
    %v280 = vunpack.c.l.b16 %v102
    %v281 = vunpack.c.h.b16 %v102
    %v282 = vunpack.c.l.b16 %v103
    %v283 = vunpack.c.h.b16 %v103
    %v284 = vunpack.c.l.b16 %v104
    %v285 = vunpack.c.h.b16 %v104
    %v286 = vunpack.c.l.b16 %v105
    %v287 = vunpack.c.h.b16 %v105
    %v288 = vunpack.c.l.b16 %v106
    %v289 = vunpack.c.h.b16 %v106
    %v290 = vunpack.c.l.b16 %v107
    %v291 = vunpack.c.h.b16 %v107
    %v292 = vunpack.c.l.b16 %v108
    %v293 = vunpack.c.h.b16 %v108
    %v294 = vunpack.c.l.b16 %v109
    %v295 = vunpack.c.h.b16 %v109
    %v296 = vunpack.c.l.b16 %v110
    %v297 = vunpack.c.h.b16 %v110
    %v298 = vunpack.c.l.b16 %v111
    %v299 = vunpack.c.h.b16 %v111
    %v300 = vunpack.c.l.b16 %v112
    %v301 = vunpack.c.h.b16 %v112
    %v302 = vunpack.c.l.b16 %v113
    %v303 = vunpack.c.h.b16 %v113
    %v304 = vunpack.c.l.b16 %v114
    %v305 = vunpack.c.h.b16 %v114
    %v306 = vunpack.c.l.b16 %v115
    %v307 = vunpack.c.h.b16 %v115
    %v308 = vunpack.c.l.b16 %v116
    %v309 = vunpack.c.h.b16 %v116
    %v310 = vunpack.c.l.b16 %v117
    %v311 = vunpack.c.h.b16 %v117
    %v312 = vunpack.c.l.b16 %v118
    %v313 = vunpack.c.h.b16 %v118
    %v314 = vunpack.c.l.b16 %v119
    %v315 = vunpack.c.h.b16 %v119
    %v316 = vunpack.c.l.b16 %v120
    %v317 = vunpack.c.h.b16 %v120
    %v318 = vunpack.c.l.b16 %v121
    %v319 = vunpack.c.h.b16 %v121
    %v320 = vpack.c.b16 %v260, %v256
    %v321 = vpack.c.b16 %v261, %v257
    %v322 = vpack.c.b16 %v262, %v258
    %v323 = vpack.c.b16 %v263, %v259
    %v324 = vpack.c.b16 %v268, %v264
    %v325 = vpack.c.b16 %v269, %v265
    %v326 = vpack.c.b16 %v270, %v266
    %v327 = vpack.c.b16 %v271, %v267
    %v328 = vpack.c.b16 %v276, %v272
    %v329 = vpack.c.b16 %v277, %v273
    %v330 = vpack.c.b16 %v278, %v274
    %v331 = vpack.c.b16 %v279, %v275
    %v332 = vpack.c.b16 %v284, %v280
    %v333 = vpack.c.b16 %v285, %v281
    %v334 = vpack.c.b16 %v286, %v282
    %v335 = vpack.c.b16 %v287, %v283
    %v336 = vpack.c.b16 %v292, %v288
    %v337 = vpack.c.b16 %v293, %v289
    %v338 = vpack.c.b16 %v294, %v290
    %v339 = vpack.c.b16 %v295, %v291
    %v340 = vpack.c.b16 %v300, %v296
    %v341 = vpack.c.b16 %v301, %v297
    %v342 = vpack.c.b16 %v302, %v298
    %v343 = vpack.c.b16 %v303, %v299
    %v344 = vpack.c.b16 %v308, %v304
    %v345 = vpack.c.b16 %v309, %v305
    %v346 = vpack.c.b16 %v310, %v306
    %v347 = vpack.c.b16 %v311, %v307
    %v348 = vpack.c.b16 %v316, %v312
    %v349 = vpack.c.b16 %v317, %v313
    %v350 = vpack.c.b16 %v318, %v314
    %v351 = vpack.c.b16 %v319, %v315
    %384 = vmatprep.subr.bf16.mxu0 %v321
    %385 = vmatpush1.bf16.msra.mxu0 %v320
    %386 = vmatprep.subr.bf16.mxu0 %v325
    %387 = vmatpush1.bf16.msra.mxu0 %v324
    %388 = vmatprep.subr.bf16.mxu0 %v329
    %389 = vmatpush1.bf16.msra.mxu0 %v328
    %390 = vmatprep.subr.bf16.mxu0 %v333
    %391 = vmatpush1.bf16.msra.mxu0 %v332
    %392 = vmatprep.subr.bf16.mxu0 %v337
    %393 = vmatpush1.bf16.msra.mxu0 %v336
    %394 = vmatprep.subr.bf16.mxu0 %v341
    %395 = vmatpush1.bf16.msra.mxu0 %v340
    %396 = vmatprep.subr.bf16.mxu0 %v345
    %397 = vmatpush1.bf16.msra.mxu0 %v344
    %398 = vmatprep.subr.bf16.mxu0 %v349
    %399 = vmatpush1.bf16.msra.mxu0 %v348
    %400 = vmatprep.subr.bf16.mxu0 0
    %401 = vmatpush1.bf16.msra.mxu0 0
    %402 = vmatprep.subr.bf16.mxu0 0
    %403 = vmatpush1.bf16.msra.mxu0 0
    %404 = vmatprep.subr.bf16.mxu0 0
    %405 = vmatpush1.bf16.msra.mxu0 0
    %406 = vmatprep.subr.bf16.mxu0 0
    %407 = vmatpush1.bf16.msra.mxu0 0
    %408 = vmatprep.subr.bf16.mxu0 0
    %409 = vmatpush1.bf16.msra.mxu0 0
    %410 = vmatprep.subr.bf16.mxu0 0
    %411 = vmatpush1.bf16.msra.mxu0 0
    %412 = vmatprep.subr.bf16.mxu0 0
    %413 = vmatpush1.bf16.msra.mxu0 0
    %414 = vmatprep.subr.bf16.mxu0 0
    %415 = vmatpush1.bf16.msra.mxu0 0
    %416 = vmatprep.mubr.bf16.mxu0 0
    %417 = vmatmul.mubr.bf16.gmra.mrb[0].mxu0 %v208
    %v418 = vpop.f32.mrb[0].mxu0
    %v419 = vadd.f32 %v159, %v418
    %v420 = vpop.f32.mrb[0].mxu0
    %v421 = vadd.f32 %v163, %v420
    %v422 = vpop.f32.mrb[0].mxu0
    %v423 = vadd.f32 %v159, %v422
    %v424 = vpop.f32.mrb[0].mxu0
    %v425 = vadd.f32 %v163, %v424
    %426 = vmatprep.mubr.bf16.mxu0 0
    %427 = vmatmul.mubr.bf16.gmra.mrb[0].mxu0 %v209
    %v428 = vpop.f32.mrb[0].mxu0
    %v429 = vadd.f32 %v159, %v428
    %v430 = vpop.f32.mrb[0].mxu0
    %v431 = vadd.f32 %v163, %v430
    %v432 = vpop.f32.mrb[0].mxu0
    %v433 = vadd.f32 %v159, %v432
    %v434 = vpop.f32.mrb[0].mxu0
    %v435 = vadd.f32 %v163, %v434
    %436 = vmatprep.mubr.bf16.mxu0 0
    %437 = vmatmul.mubr.bf16.gmra.mrb[0].mxu0 %v210
    %v438 = vpop.f32.mrb[0].mxu0
    %v439 = vadd.f32 %v159, %v438
    %v440 = vpop.f32.mrb[0].mxu0
    %v441 = vadd.f32 %v163, %v440
    %v442 = vpop.f32.mrb[0].mxu0
    %v443 = vadd.f32 %v159, %v442
    %v444 = vpop.f32.mrb[0].mxu0
    %v445 = vadd.f32 %v163, %v444
    %446 = vmatprep.mubr.bf16.mxu0 0
    %447 = vmatmul.mubr.bf16.gmra.mrb[0].mxu0 %v211
    %v448 = vpop.f32.mrb[0].mxu0
    %v449 = vadd.f32 %v159, %v448
    %v450 = vpop.f32.mrb[0].mxu0
    %v451 = vadd.f32 %v163, %v450
    %v452 = vpop.f32.mrb[0].mxu0
    %v453 = vadd.f32 %v159, %v452
    %v454 = vpop.f32.mrb[0].mxu0
    %v455 = vadd.f32 %v163, %v454
    %456 = vmatprep.mubr.bf16.mxu0 0
    %457 = vmatmul.mubr.bf16.gmra.mrb[0].mxu0 %v212
    %v458 = vpop.f32.mrb[0].mxu0
    %v459 = vadd.f32 %v159, %v458
    %v460 = vpop.f32.mrb[0].mxu0
    %v461 = vadd.f32 %v163, %v460
    %v462 = vpop.f32.mrb[0].mxu0
    %v463 = vadd.f32 %v159, %v462
    %v464 = vpop.f32.mrb[0].mxu0
    %v465 = vadd.f32 %v163, %v464
    %466 = vmatprep.mubr.bf16.mxu0 0
    %467 = vmatmul.mubr.bf16.gmra.mrb[0].mxu0 %v213
    %v468 = vpop.f32.mrb[0].mxu0
    %v469 = vadd.f32 %v159, %v468
    %v470 = vpop.f32.mrb[0].mxu0
    %v471 = vadd.f32 %v163, %v470
    %v472 = vpop.f32.mrb[0].mxu0
    %v473 = vadd.f32 %v159, %v472
    %v474 = vpop.f32.mrb[0].mxu0
    %v475 = vadd.f32 %v163, %v474
    %476 = vmatprep.mubr.bf16.mxu0 0
    %477 = vmatmul.mubr.bf16.gmra.mrb[0].mxu0 %v214
    %v478 = vpop.f32.mrb[0].mxu0
    %v479 = vadd.f32 %v159, %v478
    %v480 = vpop.f32.mrb[0].mxu0
    %v481 = vadd.f32 %v163, %v480
    %v482 = vpop.f32.mrb[0].mxu0
    %v483 = vadd.f32 %v159, %v482
    %v484 = vpop.f32.mrb[0].mxu0
    %v485 = vadd.f32 %v163, %v484
    %486 = vmatprep.mubr.bf16.mxu0 0
    %487 = vmatmul.mubr.bf16.gmra.mrb[0].mxu0 %v215
    %v488 = vpop.f32.mrb[0].mxu0
    %v489 = vadd.f32 %v159, %v488
    %v490 = vpop.f32.mrb[0].mxu0
    %v491 = vadd.f32 %v163, %v490
    %v492 = vpop.f32.mrb[0].mxu0
    %v493 = vadd.f32 %v159, %v492
    %v494 = vpop.f32.mrb[0].mxu0
    %v495 = vadd.f32 %v163, %v494
    %496 = vdwg.mxu0
    %497 = vmatprep.subr.bf16.mxu0 %v323
    %498 = vmatpush1.bf16.msra.mxu0 %v322
    %499 = vmatprep.subr.bf16.mxu0 %v327
    %500 = vmatpush1.bf16.msra.mxu0 %v326
    %501 = vmatprep.subr.bf16.mxu0 %v331
    %502 = vmatpush1.bf16.msra.mxu0 %v330
    %503 = vmatprep.subr.bf16.mxu0 %v335
    %504 = vmatpush1.bf16.msra.mxu0 %v334
    %505 = vmatprep.subr.bf16.mxu0 %v339
    %506 = vmatpush1.bf16.msra.mxu0 %v338
    %507 = vmatprep.subr.bf16.mxu0 %v343
    %508 = vmatpush1.bf16.msra.mxu0 %v342
    %509 = vmatprep.subr.bf16.mxu0 %v347
    %510 = vmatpush1.bf16.msra.mxu0 %v346
    %511 = vmatprep.subr.bf16.mxu0 %v351
    %512 = vmatpush1.bf16.msra.mxu0 %v350
    %513 = vmatprep.subr.bf16.mxu0 0
    %514 = vmatpush1.bf16.msra.mxu0 0
    %515 = vmatprep.subr.bf16.mxu0 0
    %516 = vmatpush1.bf16.msra.mxu0 0
    %517 = vmatprep.subr.bf16.mxu0 0
    %518 = vmatpush1.bf16.msra.mxu0 0
    %519 = vmatprep.subr.bf16.mxu0 0
    %520 = vmatpush1.bf16.msra.mxu0 0
    %521 = vmatprep.subr.bf16.mxu0 0
    %522 = vmatpush1.bf16.msra.mxu0 0
    %523 = vmatprep.subr.bf16.mxu0 0
    %524 = vmatpush1.bf16.msra.mxu0 0
    %525 = vmatprep.subr.bf16.mxu0 0
    %526 = vmatpush1.bf16.msra.mxu0 0
    %527 = vmatprep.subr.bf16.mxu0 0
    %528 = vmatpush1.bf16.msra.mxu0 0
    %529 = vmatprep.mubr.bf16.mxu0 0
    %530 = vmatmul.mubr.bf16.gmra.mrb[0].mxu0 %v208
    %v531 = vpop.f32.mrb[0].mxu0
    %v532 = vadd.f32 %v167, %v531
    %v533 = vpop.f32.mrb[0].mxu0
    %v534 = vadd.f32 %v171, %v533
    %v535 = vpop.f32.mrb[0].mxu0
    %v536 = vadd.f32 %v167, %v535
    %v537 = vpop.f32.mrb[0].mxu0
    %v538 = vadd.f32 %v171, %v537
    %539 = vmatprep.mubr.bf16.mxu0 0
    %540 = vmatmul.mubr.bf16.gmra.mrb[0].mxu0 %v209
    %v541 = vpop.f32.mrb[0].mxu0
    %v542 = vadd.f32 %v167, %v541
    %v543 = vpop.f32.mrb[0].mxu0
    %v544 = vadd.f32 %v171, %v543
    %v545 = vpop.f32.mrb[0].mxu0
    %v546 = vadd.f32 %v167, %v545
    %v547 = vpop.f32.mrb[0].mxu0
    %v548 = vadd.f32 %v171, %v547
    %549 = vmatprep.mubr.bf16.mxu0 0
    %550 = vmatmul.mubr.bf16.gmra.mrb[0].mxu0 %v210
    %v551 = vpop.f32.mrb[0].mxu0
    %v552 = vadd.f32 %v167, %v551
    %v553 = vpop.f32.mrb[0].mxu0
    %v554 = vadd.f32 %v171, %v553
    %v555 = vpop.f32.mrb[0].mxu0
    %v556 = vadd.f32 %v167, %v555
    %v557 = vpop.f32.mrb[0].mxu0
    %v558 = vadd.f32 %v171, %v557
    %559 = vmatprep.mubr.bf16.mxu0 0
    %560 = vmatmul.mubr.bf16.gmra.mrb[0].mxu0 %v211
    %v561 = vpop.f32.mrb[0].mxu0
    %v562 = vadd.f32 %v167, %v561
    %v563 = vpop.f32.mrb[0].mxu0
    %v564 = vadd.f32 %v171, %v563
    %v565 = vpop.f32.mrb[0].mxu0
    %v566 = vadd.f32 %v167, %v565
    %v567 = vpop.f32.mrb[0].mxu0
    %v568 = vadd.f32 %v171, %v567
    %569 = vmatprep.mubr.bf16.mxu0 0
    %570 = vmatmul.mubr.bf16.gmra.mrb[0].mxu0 %v212
    %v571 = vpop.f32.mrb[0].mxu0
    %v572 = vadd.f32 %v167, %v571
    %v573 = vpop.f32.mrb[0].mxu0
    %v574 = vadd.f32 %v171, %v573
    %v575 = vpop.f32.mrb[0].mxu0
    %v576 = vadd.f32 %v167, %v575
    %v577 = vpop.f32.mrb[0].mxu0
    %v578 = vadd.f32 %v171, %v577
    %579 = vmatprep.mubr.bf16.mxu0 0
    %580 = vmatmul.mubr.bf16.gmra.mrb[0].mxu0 %v213
    %v581 = vpop.f32.mrb[0].mxu0
    %v582 = vadd.f32 %v167, %v581
    %v583 = vpop.f32.mrb[0].mxu0
    %v584 = vadd.f32 %v171, %v583
    %v585 = vpop.f32.mrb[0].mxu0
    %v586 = vadd.f32 %v167, %v585
    %v587 = vpop.f32.mrb[0].mxu0
    %v588 = vadd.f32 %v171, %v587
    %589 = vmatprep.mubr.bf16.mxu0 0
    %590 = vmatmul.mubr.bf16.gmra.mrb[0].mxu0 %v214
    %v591 = vpop.f32.mrb[0].mxu0
    %v592 = vadd.f32 %v167, %v591
    %v593 = vpop.f32.mrb[0].mxu0
    %v594 = vadd.f32 %v171, %v593
    %v595 = vpop.f32.mrb[0].mxu0
    %v596 = vadd.f32 %v167, %v595
    %v597 = vpop.f32.mrb[0].mxu0
    %v598 = vadd.f32 %v171, %v597
    %599 = vmatprep.mubr.bf16.mxu0 0
    %600 = vmatmul.mubr.bf16.gmra.mrb[0].mxu0 %v215
    %v601 = vpop.f32.mrb[0].mxu0
    %v602 = vadd.f32 %v167, %v601
    %v603 = vpop.f32.mrb[0].mxu0
    %v604 = vadd.f32 %v171, %v603
    %v605 = vpop.f32.mrb[0].mxu0
    %v606 = vadd.f32 %v167, %v605
    %v607 = vpop.f32.mrb[0].mxu0
    %v608 = vadd.f32 %v171, %v607
    %609 = vdwg.mxu0
    %v610 = vpack.c.bf16 %v423, %v419
    %v611 = vpack.c.bf16 %v425, %v421
    %v612 = vpack.c.bf16 %v536, %v532
    %v613 = vpack.c.bf16 %v538, %v534
    %v614 = vpack.c.bf16 %v433, %v429
    %v615 = vpack.c.bf16 %v435, %v431
    %v616 = vpack.c.bf16 %v546, %v542
    %v617 = vpack.c.bf16 %v548, %v544
    %v618 = vpack.c.bf16 %v443, %v439
    %v619 = vpack.c.bf16 %v445, %v441
    %v620 = vpack.c.bf16 %v556, %v552
    %v621 = vpack.c.bf16 %v558, %v554
    %v622 = vpack.c.bf16 %v453, %v449
    %v623 = vpack.c.bf16 %v455, %v451
    %v624 = vpack.c.bf16 %v566, %v562
    %v625 = vpack.c.bf16 %v568, %v564
    %v626 = vpack.c.bf16 %v463, %v459
    %v627 = vpack.c.bf16 %v465, %v461
    %v628 = vpack.c.bf16 %v576, %v572
    %v629 = vpack.c.bf16 %v578, %v574
    %v630 = vpack.c.bf16 %v473, %v469
    %v631 = vpack.c.bf16 %v475, %v471
    %v632 = vpack.c.bf16 %v586, %v582
    %v633 = vpack.c.bf16 %v588, %v584
    %v634 = vpack.c.bf16 %v483, %v479
    %v635 = vpack.c.bf16 %v485, %v481
    %v636 = vpack.c.bf16 %v596, %v592
    %v637 = vpack.c.bf16 %v598, %v594
    %v638 = vpack.c.bf16 %v493, %v489
    %v639 = vpack.c.bf16 %v495, %v491
    %v640 = vpack.c.bf16 %v606, %v602
    %v641 = vpack.c.bf16 %v608, %v604
    %642 = vst [vmem:[#allocation4] sm:$0xff] %v610
    %643 = vst [vmem:[#allocation4 + $0x8] sm:$0xff] %v611
    %644 = vst [vmem:[#allocation4 + $0x10] sm:$0xff] %v612
    %645 = vst [vmem:[#allocation4 + $0x18] sm:$0xff] %v613
    %646 = vst [vmem:[#allocation4 + $0x20] sm:$0xff] %v614
    %647 = vst [vmem:[#allocation4 + $0x28] sm:$0xff] %v615
    %648 = vst [vmem:[#allocation4 + $0x30] sm:$0xff] %v616
    %649 = vst [vmem:[#allocation4 + $0x38] sm:$0xff] %v617
    %650 = vst [vmem:[#allocation4 + $0x40] sm:$0xff] %v618
    %651 = vst [vmem:[#allocation4 + $0x48] sm:$0xff] %v619
    %652 = vst [vmem:[#allocation4 + $0x50] sm:$0xff] %v620
    %653 = vst [vmem:[#allocation4 + $0x58] sm:$0xff] %v621
    %654 = vst [vmem:[#allocation4 + $0x60] sm:$0xff] %v622
    %655 = vst [vmem:[#allocation4 + $0x68] sm:$0xff] %v623
    %656 = vst [vmem:[#allocation4 + $0x70] sm:$0xff] %v624
    %657 = vst [vmem:[#allocation4 + $0x78] sm:$0xff] %v625
    %658 = vst [vmem:[#allocation4 + $0x80] sm:$0xff] %v626
    %659 = vst [vmem:[#allocation4 + $0x88] sm:$0xff] %v627
    %660 = vst [vmem:[#allocation4 + $0x90] sm:$0xff] %v628
    %661 = vst [vmem:[#allocation4 + $0x98] sm:$0xff] %v629
    %662 = vst [vmem:[#allocation4 + $0xa0] sm:$0xff] %v630
    %663 = vst [vmem:[#allocation4 + $0xa8] sm:$0xff] %v631
    %664 = vst [vmem:[#allocation4 + $0xb0] sm:$0xff] %v632
    %665 = vst [vmem:[#allocation4 + $0xb8] sm:$0xff] %v633
    %666 = vst [vmem:[#allocation4 + $0xc0] sm:$0xff] %v634
    %667 = vst [vmem:[#allocation4 + $0xc8] sm:$0xff] %v635
    %668 = vst [vmem:[#allocation4 + $0xd0] sm:$0xff] %v636
    %669 = vst [vmem:[#allocation4 + $0xd8] sm:$0xff] %v637
    %670 = vst [vmem:[#allocation4 + $0xe0] sm:$0xff] %v638
    %671 = vst [vmem:[#allocation4 + $0xe8] sm:$0xff] %v639
    %672 = vst [vmem:[#allocation4 + $0xf0] sm:$0xff] %v640
    %673 = vst [vmem:[#allocation4 + $0xf8] sm:$0xff] %v641
    %v674 = vld [vmem:[#allocation2] sm:$0xff]
    %v675 = vld [vmem:[#allocation2 + $0x8] sm:$0xff]
    %v676 = vld [vmem:[#allocation3] sm:$0xff]
    %v677 = vld [vmem:[#allocation3 + $0x8] sm:$0xff]
    %v678 = vpack.c.bf16 %v675, %v674
    %v679 = vld [vmem:[#allocation4] sm:$0xff]
    %v680 = vld [vmem:[#allocation4 + $0x8] sm:$0xff]
    %v681 = vld [vmem:[#allocation4 + $0x10] sm:$0xff]
    %v682 = vld [vmem:[#allocation4 + $0x18] sm:$0xff]
    %v683 = vunpack.c.l.bf16 %v679
    %v684 = vunpack.c.l.bf16 %v680
    %v685 = vunpack.c.l.bf16 %v681
    %v686 = vunpack.c.l.bf16 %v682
    %v687 = vunpack.c.h.bf16 %v679
    %v688 = vunpack.c.h.bf16 %v680
    %v689 = vunpack.c.h.bf16 %v681
    %v690 = vunpack.c.h.bf16 %v682
    %v723 = vunpack.c.l.b16 %v122
    %v724 = vunpack.c.h.b16 %v122
    %v725 = vunpack.c.l.b16 %v123
    %v726 = vunpack.c.h.b16 %v123
    %v727 = vunpack.c.l.b16 %v124
    %v728 = vunpack.c.h.b16 %v124
    %v729 = vunpack.c.l.b16 %v125
    %v730 = vunpack.c.h.b16 %v125
    %v731 = vunpack.c.l.b16 %v126
    %v732 = vunpack.c.h.b16 %v126
    %v733 = vunpack.c.l.b16 %v127
    %v734 = vunpack.c.h.b16 %v127
    %v735 = vunpack.c.l.b16 %v128
    %v736 = vunpack.c.h.b16 %v128
    %v737 = vunpack.c.l.b16 %v129
    %v738 = vunpack.c.h.b16 %v129
    %v739 = vunpack.c.l.b16 %v130
    %v740 = vunpack.c.h.b16 %v130
    %v741 = vunpack.c.l.b16 %v131
    %v742 = vunpack.c.h.b16 %v131
    %v743 = vunpack.c.l.b16 %v132
    %v744 = vunpack.c.h.b16 %v132
    %v745 = vunpack.c.l.b16 %v133
    %v746 = vunpack.c.h.b16 %v133
    %v747 = vunpack.c.l.b16 %v134
    %v748 = vunpack.c.h.b16 %v134
    %v749 = vunpack.c.l.b16 %v135
    %v750 = vunpack.c.h.b16 %v135
    %v751 = vunpack.c.l.b16 %v136
    %v752 = vunpack.c.h.b16 %v136
    %v753 = vunpack.c.l.b16 %v137
    %v754 = vunpack.c.h.b16 %v137
    %v755 = vunpack.c.l.b16 %v138
    %v756 = vunpack.c.h.b16 %v138
    %v757 = vunpack.c.l.b16 %v139
    %v758 = vunpack.c.h.b16 %v139
    %v759 = vunpack.c.l.b16 %v140
    %v760 = vunpack.c.h.b16 %v140
    %v761 = vunpack.c.l.b16 %v141
    %v762 = vunpack.c.h.b16 %v141
    %v763 = vunpack.c.l.b16 %v142
    %v764 = vunpack.c.h.b16 %v142
    %v765 = vunpack.c.l.b16 %v143
    %v766 = vunpack.c.h.b16 %v143
    %v767 = vunpack.c.l.b16 %v144
    %v768 = vunpack.c.h.b16 %v144
    %v769 = vunpack.c.l.b16 %v145
    %v770 = vunpack.c.h.b16 %v145
    %v771 = vunpack.c.l.b16 %v146
    %v772 = vunpack.c.h.b16 %v146
    %v773 = vunpack.c.l.b16 %v147
    %v774 = vunpack.c.h.b16 %v147
    %v775 = vunpack.c.l.b16 %v148
    %v776 = vunpack.c.h.b16 %v148
    %v777 = vunpack.c.l.b16 %v149
    %v778 = vunpack.c.h.b16 %v149
    %v779 = vunpack.c.l.b16 %v150
    %v780 = vunpack.c.h.b16 %v150
    %v781 = vunpack.c.l.b16 %v151
    %v782 = vunpack.c.h.b16 %v151
    %v783 = vunpack.c.l.b16 %v152
    %v784 = vunpack.c.h.b16 %v152
    %v785 = vunpack.c.l.b16 %v153
    %v786 = vunpack.c.h.b16 %v153
    %v787 = vpack.c.b16 %v727, %v723
    %v788 = vpack.c.b16 %v728, %v724
    %v789 = vpack.c.b16 %v729, %v725
    %v790 = vpack.c.b16 %v730, %v726
    %v791 = vpack.c.b16 %v735, %v731
    %v792 = vpack.c.b16 %v736, %v732
    %v793 = vpack.c.b16 %v737, %v733
    %v794 = vpack.c.b16 %v738, %v734
    %v795 = vpack.c.b16 %v743, %v739
    %v796 = vpack.c.b16 %v744, %v740
    %v797 = vpack.c.b16 %v745, %v741
    %v798 = vpack.c.b16 %v746, %v742
    %v799 = vpack.c.b16 %v751, %v747
    %v800 = vpack.c.b16 %v752, %v748
    %v801 = vpack.c.b16 %v753, %v749
    %v802 = vpack.c.b16 %v754, %v750
    %v803 = vpack.c.b16 %v759, %v755
    %v804 = vpack.c.b16 %v760, %v756
    %v805 = vpack.c.b16 %v761, %v757
    %v806 = vpack.c.b16 %v762, %v758
    %v807 = vpack.c.b16 %v767, %v763
    %v808 = vpack.c.b16 %v768, %v764
    %v809 = vpack.c.b16 %v769, %v765
    %v810 = vpack.c.b16 %v770, %v766
    %v811 = vpack.c.b16 %v775, %v771
    %v812 = vpack.c.b16 %v776, %v772
    %v813 = vpack.c.b16 %v777, %v773
    %v814 = vpack.c.b16 %v778, %v774
    %v815 = vpack.c.b16 %v783, %v779
    %v816 = vpack.c.b16 %v784, %v780
    %v817 = vpack.c.b16 %v785, %v781
    %v818 = vpack.c.b16 %v786, %v782
    %851 = vmatprep.subr.bf16.mxu0 %v788
    %852 = vmatpush1.bf16.msra.mxu0 %v787
    %853 = vmatprep.subr.bf16.mxu0 %v792
    %854 = vmatpush1.bf16.msra.mxu0 %v791
    %855 = vmatprep.subr.bf16.mxu0 %v796
    %856 = vmatpush1.bf16.msra.mxu0 %v795
    %857 = vmatprep.subr.bf16.mxu0 %v800
    %858 = vmatpush1.bf16.msra.mxu0 %v799
    %859 = vmatprep.subr.bf16.mxu0 %v804
    %860 = vmatpush1.bf16.msra.mxu0 %v803
    %861 = vmatprep.subr.bf16.mxu0 %v808
    %862 = vmatpush1.bf16.msra.mxu0 %v807
    %863 = vmatprep.subr.bf16.mxu0 %v812
    %864 = vmatpush1.bf16.msra.mxu0 %v811
    %865 = vmatprep.subr.bf16.mxu0 %v816
    %866 = vmatpush1.bf16.msra.mxu0 %v815
    %867 = vmatprep.subr.bf16.mxu0 0
    %868 = vmatpush1.bf16.msra.mxu0 0
    %869 = vmatprep.subr.bf16.mxu0 0
    %870 = vmatpush1.bf16.msra.mxu0 0
    %871 = vmatprep.subr.bf16.mxu0 0
    %872 = vmatpush1.bf16.msra.mxu0 0
    %873 = vmatprep.subr.bf16.mxu0 0
    %874 = vmatpush1.bf16.msra.mxu0 0
    %875 = vmatprep.subr.bf16.mxu0 0
    %876 = vmatpush1.bf16.msra.mxu0 0
    %877 = vmatprep.subr.bf16.mxu0 0
    %878 = vmatpush1.bf16.msra.mxu0 0
    %879 = vmatprep.subr.bf16.mxu0 0
    %880 = vmatpush1.bf16.msra.mxu0 0
    %881 = vmatprep.subr.bf16.mxu0 0
    %882 = vmatpush1.bf16.msra.mxu0 0
    %883 = vmatprep.mubr.bf16.mxu0 0
    %884 = vmatmul.mubr.bf16.gmra.mrb[0].mxu0 %v678
    %v885 = vpop.f32.mrb[0].mxu0
    %v886 = vadd.f32 0.0, %v885
    %v887 = vpop.f32.mrb[0].mxu0
    %v888 = vadd.f32 0.0, %v887
    %v889 = vpop.f32.mrb[0].mxu0
    %v890 = vadd.f32 0.0, %v889
    %v891 = vpop.f32.mrb[0].mxu0
    %v892 = vadd.f32 0.0, %v891
    %893 = vdwg.mxu0
    %894 = vmatprep.subr.bf16.mxu0 %v790
    %895 = vmatpush1.bf16.msra.mxu0 %v789
    %896 = vmatprep.subr.bf16.mxu0 %v794
    %897 = vmatpush1.bf16.msra.mxu0 %v793
    %898 = vmatprep.subr.bf16.mxu0 %v798
    %899 = vmatpush1.bf16.msra.mxu0 %v797
    %900 = vmatprep.subr.bf16.mxu0 %v802
    %901 = vmatpush1.bf16.msra.mxu0 %v801
    %902 = vmatprep.subr.bf16.mxu0 %v806
    %903 = vmatpush1.bf16.msra.mxu0 %v805
    %904 = vmatprep.subr.bf16.mxu0 %v810
    %905 = vmatpush1.bf16.msra.mxu0 %v809
    %906 = vmatprep.subr.bf16.mxu0 %v814
    %907 = vmatpush1.bf16.msra.mxu0 %v813
    %908 = vmatprep.subr.bf16.mxu0 %v818
    %909 = vmatpush1.bf16.msra.mxu0 %v817
    %910 = vmatprep.subr.bf16.mxu0 0
    %911 = vmatpush1.bf16.msra.mxu0 0
    %912 = vmatprep.subr.bf16.mxu0 0
    %913 = vmatpush1.bf16.msra.mxu0 0
    %914 = vmatprep.subr.bf16.mxu0 0
    %915 = vmatpush1.bf16.msra.mxu0 0
    %916 = vmatprep.subr.bf16.mxu0 0
    %917 = vmatpush1.bf16.msra.mxu0 0
    %918 = vmatprep.subr.bf16.mxu0 0
    %919 = vmatpush1.bf16.msra.mxu0 0
    %920 = vmatprep.subr.bf16.mxu0 0
    %921 = vmatpush1.bf16.msra.mxu0 0
    %922 = vmatprep.subr.bf16.mxu0 0
    %923 = vmatpush1.bf16.msra.mxu0 0
    %924 = vmatprep.subr.bf16.mxu0 0
    %925 = vmatpush1.bf16.msra.mxu0 0
    %926 = vmatprep.mubr.bf16.mxu0 0
    %927 = vmatmul.mubr.bf16.gmra.mrb[0].mxu0 %v678
    %v928 = vpop.f32.mrb[0].mxu0
    %v929 = vadd.f32 0.0, %v928
    %v930 = vpop.f32.mrb[0].mxu0
    %v931 = vadd.f32 0.0, %v930
    %v932 = vpop.f32.mrb[0].mxu0
    %v933 = vadd.f32 0.0, %v932
    %v934 = vpop.f32.mrb[0].mxu0
    %v935 = vadd.f32 0.0, %v934
    %936 = vdwg.mxu0
    %v937 = vadd.f32 %v683, %v886
    %v938 = vadd.f32 %v684, %v888
    %v939 = vadd.f32 %v685, %v929
    %v940 = vadd.f32 %v686, %v931
    %v941 = vadd.f32 %v687, %v890
    %v942 = vadd.f32 %v688, %v892
    %v943 = vadd.f32 %v689, %v933
    %v944 = vadd.f32 %v690, %v935
    %v945 = vmul.f32 %v937, 0.5
    %v946 = vmul.f32 %v941, 0.5
    %v947 = vtanh.pop %v945
    %v948 = vtanh.pop %v946
    %v949 = vadd.f32 %v947, 1.0
    %v950 = vadd.f32 %v948, 1.0
    %v951 = vmul.f32 %v949, 0.5
    %v952 = vmul.f32 %v950, 0.5
    %v953 = vmul.f32 %v938, 0.5
    %v954 = vmul.f32 %v942, 0.5
    %v955 = vtanh.pop %v953
    %v956 = vtanh.pop %v954
    %v957 = vadd.f32 %v955, 1.0
    %v958 = vadd.f32 %v956, 1.0
    %v959 = vmul.f32 %v957, 0.5
    %v960 = vmul.f32 %v958, 0.5
    %v961 = vtanh.pop %v939
    %v962 = vtanh.pop %v943
    %v963 = vmul.f32 %v940, 0.5
    %v964 = vmul.f32 %v944, 0.5
    %v965 = vtanh.pop %v963
    %v966 = vtanh.pop %v964
    %v967 = vadd.f32 %v965, 1.0
    %v968 = vadd.f32 %v966, 1.0
    %v969 = vmul.f32 %v967, 0.5
    %v970 = vmul.f32 %v968, 0.5
    %v971 = vmul.f32 %v959, %v676
    %v972 = vmul.f32 %v960, %v677
    %v973 = vmul.f32 %v951, %v961
    %v974 = vmul.f32 %v952, %v962
    %v975 = vadd.f32 %v971, %v973
    %v976 = vadd.f32 %v972, %v974
    %v977 = vtanh.pop %v975
    %v978 = vtanh.pop %v976
    %v979 = vmul.f32 %v969, %v977
    %v980 = vmul.f32 %v970, %v978
    %v981 = vpack.c.bf16 %v980, %v979
    %982 = vst [vmem:[#allocation5] sm:$0xff] %v981
    %s983 = scalar_lea.vmem [#allocation4], 32
    %v984 = vld [vmem:[%s983] sm:$0xff]
    %v985 = vld [vmem:[%s983 + $0x8] sm:$0xff]
    %v986 = vld [vmem:[%s983 + $0x10] sm:$0xff]
    %v987 = vld [vmem:[%s983 + $0x18] sm:$0xff]
    %v988 = vunpack.c.l.bf16 %v984
    %v989 = vunpack.c.l.bf16 %v985
    %v990 = vunpack.c.l.bf16 %v986
    %v991 = vunpack.c.l.bf16 %v987
    %v992 = vunpack.c.h.bf16 %v984
    %v993 = vunpack.c.h.bf16 %v985
    %v994 = vunpack.c.h.bf16 %v986
    %v995 = vunpack.c.h.bf16 %v987
    %996 = vmatprep.subr.bf16.mxu0 %v788
    %997 = vmatpush1.bf16.msra.mxu0 %v787
    %998 = vmatprep.subr.bf16.mxu0 %v792
    %999 = vmatpush1.bf16.msra.mxu0 %v791
    %1000 = vmatprep.subr.bf16.mxu0 %v796
    %1001 = vmatpush1.bf16.msra.mxu0 %v795
    %1002 = vmatprep.subr.bf16.mxu0 %v800
    %1003 = vmatpush1.bf16.msra.mxu0 %v799
    %1004 = vmatprep.subr.bf16.mxu0 %v804
    %1005 = vmatpush1.bf16.msra.mxu0 %v803
    %1006 = vmatprep.subr.bf16.mxu0 %v808
    %1007 = vmatpush1.bf16.msra.mxu0 %v807
    %1008 = vmatprep.subr.bf16.mxu0 %v812
    %1009 = vmatpush1.bf16.msra.mxu0 %v811
    %1010 = vmatprep.subr.bf16.mxu0 %v816
    %1011 = vmatpush1.bf16.msra.mxu0 %v815
    %1012 = vmatprep.subr.bf16.mxu0 0
    %1013 = vmatpush1.bf16.msra.mxu0 0
    %1014 = vmatprep.subr.bf16.mxu0 0
    %1015 = vmatpush1.bf16.msra.mxu0 0
    %1016 = vmatprep.subr.bf16.mxu0 0
    %1017 = vmatpush1.bf16.msra.mxu0 0
    %1018 = vmatprep.subr.bf16.mxu0 0
    %1019 = vmatpush1.bf16.msra.mxu0 0
    %1020 = vmatprep.subr.bf16.mxu0 0
    %1021 = vmatpush1.bf16.msra.mxu0 0
    %1022 = vmatprep.subr.bf16.mxu0 0
    %1023 = vmatpush1.bf16.msra.mxu0 0
    %1024 = vmatprep.subr.bf16.mxu0 0
    %1025 = vmatpush1.bf16.msra.mxu0 0
    %1026 = vmatprep.subr.bf16.mxu0 0
    %1027 = vmatpush1.bf16.msra.mxu0 0
    %1028 = vmatprep.mubr.bf16.mxu0 0
    %1029 = vmatmul.mubr.bf16.gmra.mrb[0].mxu0 %v981
    %v1030 = vpop.f32.mrb[0].mxu0
    %v1031 = vadd.f32 0.0, %v1030
    %v1032 = vpop.f32.mrb[0].mxu0
    %v1033 = vadd.f32 0.0, %v1032
    %v1034 = vpop.f32.mrb[0].mxu0
    %v1035 = vadd.f32 0.0, %v1034
    %v1036 = vpop.f32.mrb[0].mxu0
    %v1037 = vadd.f32 0.0, %v1036
    %1038 = vdwg.mxu0
    %1039 = vmatprep.subr.bf16.mxu0 %v790
    %1040 = vmatpush1.bf16.msra.mxu0 %v789
    %1041 = vmatprep.subr.bf16.mxu0 %v794
    %1042 = vmatpush1.bf16.msra.mxu0 %v793
    %1043 = vmatprep.subr.bf16.mxu0 %v798
    %1044 = vmatpush1.bf16.msra.mxu0 %v797
    %1045 = vmatprep.subr.bf16.mxu0 %v802
    %1046 = vmatpush1.bf16.msra.mxu0 %v801
    %1047 = vmatprep.subr.bf16.mxu0 %v806
    %1048 = vmatpush1.bf16.msra.mxu0 %v805
    %1049 = vmatprep.subr.bf16.mxu0 %v810
    %1050 = vmatpush1.bf16.msra.mxu0 %v809
    %1051 = vmatprep.subr.bf16.mxu0 %v814
    %1052 = vmatpush1.bf16.msra.mxu0 %v813
    %1053 = vmatprep.subr.bf16.mxu0 %v818
    %1054 = vmatpush1.bf16.msra.mxu0 %v817
    %1055 = vmatprep.subr.bf16.mxu0 0
    %1056 = vmatpush1.bf16.msra.mxu0 0
    %1057 = vmatprep.subr.bf16.mxu0 0
    %1058 = vmatpush1.bf16.msra.mxu0 0
    %1059 = vmatprep.subr.bf16.mxu0 0
    %1060 = vmatpush1.bf16.msra.mxu0 0
    %1061 = vmatprep.subr.bf16.mxu0 0
    %1062 = vmatpush1.bf16.msra.mxu0 0
    %1063 = vmatprep.subr.bf16.mxu0 0
    %1064 = vmatpush1.bf16.msra.mxu0 0
    %1065 = vmatprep.subr.bf16.mxu0 0
    %1066 = vmatpush1.bf16.msra.mxu0 0
    %1067 = vmatprep.subr.bf16.mxu0 0
    %1068 = vmatpush1.bf16.msra.mxu0 0
    %1069 = vmatprep.subr.bf16.mxu0 0
    %1070 = vmatpush1.bf16.msra.mxu0 0
    %1071 = vmatprep.mubr.bf16.mxu0 0
    %1072 = vmatmul.mubr.bf16.gmra.mrb[0].mxu0 %v981
    %v1073 = vpop.f32.mrb[0].mxu0
    %v1074 = vadd.f32 0.0, %v1073
    %v1075 = vpop.f32.mrb[0].mxu0
    %v1076 = vadd.f32 0.0, %v1075
    %v1077 = vpop.f32.mrb[0].mxu0
    %v1078 = vadd.f32 0.0, %v1077
    %v1079 = vpop.f32.mrb[0].mxu0
    %v1080 = vadd.f32 0.0, %v1079
    %1081 = vdwg.mxu0
    %v1082 = vadd.f32 %v988, %v1031
    %v1083 = vadd.f32 %v989, %v1033
    %v1084 = vadd.f32 %v990, %v1074
    %v1085 = vadd.f32 %v991, %v1076
    %v1086 = vadd.f32 %v992, %v1035
    %v1087 = vadd.f32 %v993, %v1037
    %v1088 = vadd.f32 %v994, %v1078
    %v1089 = vadd.f32 %v995, %v1080
    %v1090 = vmul.f32 %v1082, 0.5
    %v1091 = vmul.f32 %v1086, 0.5
    %v1092 = vtanh.pop %v1090
    %v1093 = vtanh.pop %v1091
    %v1094 = vadd.f32 %v1092, 1.0
    %v1095 = vadd.f32 %v1093, 1.0
    %v1096 = vmul.f32 %v1094, 0.5
    %v1097 = vmul.f32 %v1095, 0.5
    %v1098 = vmul.f32 %v1083, 0.5
    %v1099 = vmul.f32 %v1087, 0.5
    %v1100 = vtanh.pop %v1098
    %v1101 = vtanh.pop %v1099
    %v1102 = vadd.f32 %v1100, 1.0
    %v1103 = vadd.f32 %v1101, 1.0
    %v1104 = vmul.f32 %v1102, 0.5
    %v1105 = vmul.f32 %v1103, 0.5
    %v1106 = vtanh.pop %v1084
    %v1107 = vtanh.pop %v1088
    %v1108 = vmul.f32 %v1085, 0.5
    %v1109 = vmul.f32 %v1089, 0.5
    %v1110 = vtanh.pop %v1108
    %v1111 = vtanh.pop %v1109
    %v1112 = vadd.f32 %v1110, 1.0
    %v1113 = vadd.f32 %v1111, 1.0
    %v1114 = vmul.f32 %v1112, 0.5
    %v1115 = vmul.f32 %v1113, 0.5
    %v1116 = vmul.f32 %v1104, %v975
    %v1117 = vmul.f32 %v1105, %v976
    %v1118 = vmul.f32 %v1096, %v1106
    %v1119 = vmul.f32 %v1097, %v1107
    %v1120 = vadd.f32 %v1116, %v1118
    %v1121 = vadd.f32 %v1117, %v1119
    %v1122 = vtanh.pop %v1120
    %v1123 = vtanh.pop %v1121
    %v1124 = vmul.f32 %v1114, %v1122
    %v1125 = vmul.f32 %v1115, %v1123
    %v1126 = vpack.c.bf16 %v1125, %v1124
    %s1127 = scalar_lea.vmem [#allocation5], 8
    %1128 = vst [vmem:[%s1127] sm:$0xff] %v1126
    %s1129 = scalar_lea.vmem [#allocation4], 64
    %v1130 = vld [vmem:[%s1129] sm:$0xff]
    %v1131 = vld [vmem:[%s1129 + $0x8] sm:$0xff]
    %v1132 = vld [vmem:[%s1129 + $0x10] sm:$0xff]
    %v1133 = vld [vmem:[%s1129 + $0x18] sm:$0xff]
    %v1134 = vunpack.c.l.bf16 %v1130
    %v1135 = vunpack.c.l.bf16 %v1131
    %v1136 = vunpack.c.l.bf16 %v1132
    %v1137 = vunpack.c.l.bf16 %v1133
    %v1138 = vunpack.c.h.bf16 %v1130
    %v1139 = vunpack.c.h.bf16 %v1131
    %v1140 = vunpack.c.h.bf16 %v1132
    %v1141 = vunpack.c.h.bf16 %v1133
    %1142 = vmatprep.subr.bf16.mxu0 %v788
    %1143 = vmatpush1.bf16.msra.mxu0 %v787
    %1144 = vmatprep.subr.bf16.mxu0 %v792
    %1145 = vmatpush1.bf16.msra.mxu0 %v791
    %1146 = vmatprep.subr.bf16.mxu0 %v796
    %1147 = vmatpush1.bf16.msra.mxu0 %v795
    %1148 = vmatprep.subr.bf16.mxu0 %v800
    %1149 = vmatpush1.bf16.msra.mxu0 %v799
    %1150 = vmatprep.subr.bf16.mxu0 %v804
    %1151 = vmatpush1.bf16.msra.mxu0 %v803
    %1152 = vmatprep.subr.bf16.mxu0 %v808
    %1153 = vmatpush1.bf16.msra.mxu0 %v807
    %1154 = vmatprep.subr.bf16.mxu0 %v812
    %1155 = vmatpush1.bf16.msra.mxu0 %v811
    %1156 = vmatprep.subr.bf16.mxu0 %v816
    %1157 = vmatpush1.bf16.msra.mxu0 %v815
    %1158 = vmatprep.subr.bf16.mxu0 0
    %1159 = vmatpush1.bf16.msra.mxu0 0
    %1160 = vmatprep.subr.bf16.mxu0 0
    %1161 = vmatpush1.bf16.msra.mxu0 0
    %1162 = vmatprep.subr.bf16.mxu0 0
    %1163 = vmatpush1.bf16.msra.mxu0 0
    %1164 = vmatprep.subr.bf16.mxu0 0
    %1165 = vmatpush1.bf16.msra.mxu0 0
    %1166 = vmatprep.subr.bf16.mxu0 0
    %1167 = vmatpush1.bf16.msra.mxu0 0
    %1168 = vmatprep.subr.bf16.mxu0 0
    %1169 = vmatpush1.bf16.msra.mxu0 0
    %1170 = vmatprep.subr.bf16.mxu0 0
    %1171 = vmatpush1.bf16.msra.mxu0 0
    %1172 = vmatprep.subr.bf16.mxu0 0
    %1173 = vmatpush1.bf16.msra.mxu0 0
    %1174 = vmatprep.mubr.bf16.mxu0 0
    %1175 = vmatmul.mubr.bf16.gmra.mrb[0].mxu0 %v1126
    %v1176 = vpop.f32.mrb[0].mxu0
    %v1177 = vadd.f32 0.0, %v1176
    %v1178 = vpop.f32.mrb[0].mxu0
    %v1179 = vadd.f32 0.0, %v1178
    %v1180 = vpop.f32.mrb[0].mxu0
    %v1181 = vadd.f32 0.0, %v1180
    %v1182 = vpop.f32.mrb[0].mxu0
    %v1183 = vadd.f32 0.0, %v1182
    %1184 = vdwg.mxu0
    %1185 = vmatprep.subr.bf16.mxu0 %v790
    %1186 = vmatpush1.bf16.msra.mxu0 %v789
    %1187 = vmatprep.subr.bf16.mxu0 %v794
    %1188 = vmatpush1.bf16.msra.mxu0 %v793
    %1189 = vmatprep.subr.bf16.mxu0 %v798
    %1190 = vmatpush1.bf16.msra.mxu0 %v797
    %1191 = vmatprep.subr.bf16.mxu0 %v802
    %1192 = vmatpush1.bf16.msra.mxu0 %v801
    %1193 = vmatprep.subr.bf16.mxu0 %v806
    %1194 = vmatpush1.bf16.msra.mxu0 %v805
    %1195 = vmatprep.subr.bf16.mxu0 %v810
    %1196 = vmatpush1.bf16.msra.mxu0 %v809
    %1197 = vmatprep.subr.bf16.mxu0 %v814
    %1198 = vmatpush1.bf16.msra.mxu0 %v813
    %1199 = vmatprep.subr.bf16.mxu0 %v818
    %1200 = vmatpush1.bf16.msra.mxu0 %v817
    %1201 = vmatprep.subr.bf16.mxu0 0
    %1202 = vmatpush1.bf16.msra.mxu0 0
    %1203 = vmatprep.subr.bf16.mxu0 0
    %1204 = vmatpush1.bf16.msra.mxu0 0
    %1205 = vmatprep.subr.bf16.mxu0 0
    %1206 = vmatpush1.bf16.msra.mxu0 0
    %1207 = vmatprep.subr.bf16.mxu0 0
    %1208 = vmatpush1.bf16.msra.mxu0 0
    %1209 = vmatprep.subr.bf16.mxu0 0
    %1210 = vmatpush1.bf16.msra.mxu0 0
    %1211 = vmatprep.subr.bf16.mxu0 0
    %1212 = vmatpush1.bf16.msra.mxu0 0
    %1213 = vmatprep.subr.bf16.mxu0 0
    %1214 = vmatpush1.bf16.msra.mxu0 0
    %1215 = vmatprep.subr.bf16.mxu0 0
    %1216 = vmatpush1.bf16.msra.mxu0 0
    %1217 = vmatprep.mubr.bf16.mxu0 0
    %1218 = vmatmul.mubr.bf16.gmra.mrb[0].mxu0 %v1126
    %v1219 = vpop.f32.mrb[0].mxu0
    %v1220 = vadd.f32 0.0, %v1219
    %v1221 = vpop.f32.mrb[0].mxu0
    %v1222 = vadd.f32 0.0, %v1221
    %v1223 = vpop.f32.mrb[0].mxu0
    %v1224 = vadd.f32 0.0, %v1223
    %v1225 = vpop.f32.mrb[0].mxu0
    %v1226 = vadd.f32 0.0, %v1225
    %1227 = vdwg.mxu0
    %v1228 = vadd.f32 %v1134, %v1177
    %v1229 = vadd.f32 %v1135, %v1179
    %v1230 = vadd.f32 %v1136, %v1220
    %v1231 = vadd.f32 %v1137, %v1222
    %v1232 = vadd.f32 %v1138, %v1181
    %v1233 = vadd.f32 %v1139, %v1183
    %v1234 = vadd.f32 %v1140, %v1224
    %v1235 = vadd.f32 %v1141, %v1226
    %v1236 = vmul.f32 %v1228, 0.5
    %v1237 = vmul.f32 %v1232, 0.5
    %v1238 = vtanh.pop %v1236
    %v1239 = vtanh.pop %v1237
    %v1240 = vadd.f32 %v1238, 1.0
    %v1241 = vadd.f32 %v1239, 1.0
    %v1242 = vmul.f32 %v1240, 0.5
    %v1243 = vmul.f32 %v1241, 0.5
    %v1244 = vmul.f32 %v1229, 0.5
    %v1245 = vmul.f32 %v1233, 0.5
    %v1246 = vtanh.pop %v1244
    %v1247 = vtanh.pop %v1245
    %v1248 = vadd.f32 %v1246, 1.0
    %v1249 = vadd.f32 %v1247, 1.0
    %v1250 = vmul.f32 %v1248, 0.5
    %v1251 = vmul.f32 %v1249, 0.5
    %v1252 = vtanh.pop %v1230
    %v1253 = vtanh.pop %v1234
    %v1254 = vmul.f32 %v1231, 0.5
    %v1255 = vmul.f32 %v1235, 0.5
    %v1256 = vtanh.pop %v1254
    %v1257 = vtanh.pop %v1255
    %v1258 = vadd.f32 %v1256, 1.0
    %v1259 = vadd.f32 %v1257, 1.0
    %v1260 = vmul.f32 %v1258, 0.5
    %v1261 = vmul.f32 %v1259, 0.5
    %v1262 = vmul.f32 %v1250, %v1120
    %v1263 = vmul.f32 %v1251, %v1121
    %v1264 = vmul.f32 %v1242, %v1252
    %v1265 = vmul.f32 %v1243, %v1253
    %v1266 = vadd.f32 %v1262, %v1264
    %v1267 = vadd.f32 %v1263, %v1265
    %v1268 = vtanh.pop %v1266
    %v1269 = vtanh.pop %v1267
    %v1270 = vmul.f32 %v1260, %v1268
    %v1271 = vmul.f32 %v1261, %v1269
    %v1272 = vpack.c.bf16 %v1271, %v1270
    %s1273 = scalar_lea.vmem [#allocation5], 16
    %1274 = vst [vmem:[%s1273] sm:$0xff] %v1272
    %s1275 = scalar_lea.vmem [#allocation4], 96
    %v1276 = vld [vmem:[%s1275] sm:$0xff]
    %v1277 = vld [vmem:[%s1275 + $0x8] sm:$0xff]
    %v1278 = vld [vmem:[%s1275 + $0x10] sm:$0xff]
    %v1279 = vld [vmem:[%s1275 + $0x18] sm:$0xff]
    %v1280 = vunpack.c.l.bf16 %v1276
    %v1281 = vunpack.c.l.bf16 %v1277
    %v1282 = vunpack.c.l.bf16 %v1278
    %v1283 = vunpack.c.l.bf16 %v1279
    %v1284 = vunpack.c.h.bf16 %v1276
    %v1285 = vunpack.c.h.bf16 %v1277
    %v1286 = vunpack.c.h.bf16 %v1278
    %v1287 = vunpack.c.h.bf16 %v1279
    %1288 = vmatprep.subr.bf16.mxu0 %v788
    %1289 = vmatpush1.bf16.msra.mxu0 %v787
    %1290 = vmatprep.subr.bf16.mxu0 %v792
    %1291 = vmatpush1.bf16.msra.mxu0 %v791
    %1292 = vmatprep.subr.bf16.mxu0 %v796
    %1293 = vmatpush1.bf16.msra.mxu0 %v795
    %1294 = vmatprep.subr.bf16.mxu0 %v800
    %1295 = vmatpush1.bf16.msra.mxu0 %v799
    %1296 = vmatprep.subr.bf16.mxu0 %v804
    %1297 = vmatpush1.bf16.msra.mxu0 %v803
    %1298 = vmatprep.subr.bf16.mxu0 %v808
    %1299 = vmatpush1.bf16.msra.mxu0 %v807
    %1300 = vmatprep.subr.bf16.mxu0 %v812
    %1301 = vmatpush1.bf16.msra.mxu0 %v811
    %1302 = vmatprep.subr.bf16.mxu0 %v816
    %1303 = vmatpush1.bf16.msra.mxu0 %v815
    %1304 = vmatprep.subr.bf16.mxu0 0
    %1305 = vmatpush1.bf16.msra.mxu0 0
    %1306 = vmatprep.subr.bf16.mxu0 0
    %1307 = vmatpush1.bf16.msra.mxu0 0
    %1308 = vmatprep.subr.bf16.mxu0 0
    %1309 = vmatpush1.bf16.msra.mxu0 0
    %1310 = vmatprep.subr.bf16.mxu0 0
    %1311 = vmatpush1.bf16.msra.mxu0 0
    %1312 = vmatprep.subr.bf16.mxu0 0
    %1313 = vmatpush1.bf16.msra.mxu0 0
    %1314 = vmatprep.subr.bf16.mxu0 0
    %1315 = vmatpush1.bf16.msra.mxu0 0
    %1316 = vmatprep.subr.bf16.mxu0 0
    %1317 = vmatpush1.bf16.msra.mxu0 0
    %1318 = vmatprep.subr.bf16.mxu0 0
    %1319 = vmatpush1.bf16.msra.mxu0 0
    %1320 = vmatprep.mubr.bf16.mxu0 0
    %1321 = vmatmul.mubr.bf16.gmra.mrb[0].mxu0 %v1272
    %v1322 = vpop.f32.mrb[0].mxu0
    %v1323 = vadd.f32 0.0, %v1322
    %v1324 = vpop.f32.mrb[0].mxu0
    %v1325 = vadd.f32 0.0, %v1324
    %v1326 = vpop.f32.mrb[0].mxu0
    %v1327 = vadd.f32 0.0, %v1326
    %v1328 = vpop.f32.mrb[0].mxu0
    %v1329 = vadd.f32 0.0, %v1328
    %1330 = vdwg.mxu0
    %1331 = vmatprep.subr.bf16.mxu0 %v790
    %1332 = vmatpush1.bf16.msra.mxu0 %v789
    %1333 = vmatprep.subr.bf16.mxu0 %v794
    %1334 = vmatpush1.bf16.msra.mxu0 %v793
    %1335 = vmatprep.subr.bf16.mxu0 %v798
    %1336 = vmatpush1.bf16.msra.mxu0 %v797
    %1337 = vmatprep.subr.bf16.mxu0 %v802
    %1338 = vmatpush1.bf16.msra.mxu0 %v801
    %1339 = vmatprep.subr.bf16.mxu0 %v806
    %1340 = vmatpush1.bf16.msra.mxu0 %v805
    %1341 = vmatprep.subr.bf16.mxu0 %v810
    %1342 = vmatpush1.bf16.msra.mxu0 %v809
    %1343 = vmatprep.subr.bf16.mxu0 %v814
    %1344 = vmatpush1.bf16.msra.mxu0 %v813
    %1345 = vmatprep.subr.bf16.mxu0 %v818
    %1346 = vmatpush1.bf16.msra.mxu0 %v817
    %1347 = vmatprep.subr.bf16.mxu0 0
    %1348 = vmatpush1.bf16.msra.mxu0 0
    %1349 = vmatprep.subr.bf16.mxu0 0
    %1350 = vmatpush1.bf16.msra.mxu0 0
    %1351 = vmatprep.subr.bf16.mxu0 0
    %1352 = vmatpush1.bf16.msra.mxu0 0
    %1353 = vmatprep.subr.bf16.mxu0 0
    %1354 = vmatpush1.bf16.msra.mxu0 0
    %1355 = vmatprep.subr.bf16.mxu0 0
    %1356 = vmatpush1.bf16.msra.mxu0 0
    %1357 = vmatprep.subr.bf16.mxu0 0
    %1358 = vmatpush1.bf16.msra.mxu0 0
    %1359 = vmatprep.subr.bf16.mxu0 0
    %1360 = vmatpush1.bf16.msra.mxu0 0
    %1361 = vmatprep.subr.bf16.mxu0 0
    %1362 = vmatpush1.bf16.msra.mxu0 0
    %1363 = vmatprep.mubr.bf16.mxu0 0
    %1364 = vmatmul.mubr.bf16.gmra.mrb[0].mxu0 %v1272
    %v1365 = vpop.f32.mrb[0].mxu0
    %v1366 = vadd.f32 0.0, %v1365
    %v1367 = vpop.f32.mrb[0].mxu0
    %v1368 = vadd.f32 0.0, %v1367
    %v1369 = vpop.f32.mrb[0].mxu0
    %v1370 = vadd.f32 0.0, %v1369
    %v1371 = vpop.f32.mrb[0].mxu0
    %v1372 = vadd.f32 0.0, %v1371
    %1373 = vdwg.mxu0
    %v1374 = vadd.f32 %v1280, %v1323
    %v1375 = vadd.f32 %v1281, %v1325
    %v1376 = vadd.f32 %v1282, %v1366
    %v1377 = vadd.f32 %v1283, %v1368
    %v1378 = vadd.f32 %v1284, %v1327
    %v1379 = vadd.f32 %v1285, %v1329
    %v1380 = vadd.f32 %v1286, %v1370
    %v1381 = vadd.f32 %v1287, %v1372
    %v1382 = vmul.f32 %v1374, 0.5
    %v1383 = vmul.f32 %v1378, 0.5
    %v1384 = vtanh.pop %v1382
    %v1385 = vtanh.pop %v1383
    %v1386 = vadd.f32 %v1384, 1.0
    %v1387 = vadd.f32 %v1385, 1.0
    %v1388 = vmul.f32 %v1386, 0.5
    %v1389 = vmul.f32 %v1387, 0.5
    %v1390 = vmul.f32 %v1375, 0.5
    %v1391 = vmul.f32 %v1379, 0.5
    %v1392 = vtanh.pop %v1390
    %v1393 = vtanh.pop %v1391
    %v1394 = vadd.f32 %v1392, 1.0
    %v1395 = vadd.f32 %v1393, 1.0
    %v1396 = vmul.f32 %v1394, 0.5
    %v1397 = vmul.f32 %v1395, 0.5
    %v1398 = vtanh.pop %v1376
    %v1399 = vtanh.pop %v1380
    %v1400 = vmul.f32 %v1377, 0.5
    %v1401 = vmul.f32 %v1381, 0.5
    %v1402 = vtanh.pop %v1400
    %v1403 = vtanh.pop %v1401
    %v1404 = vadd.f32 %v1402, 1.0
    %v1405 = vadd.f32 %v1403, 1.0
    %v1406 = vmul.f32 %v1404, 0.5
    %v1407 = vmul.f32 %v1405, 0.5
    %v1408 = vmul.f32 %v1396, %v1266
    %v1409 = vmul.f32 %v1397, %v1267
    %v1410 = vmul.f32 %v1388, %v1398
    %v1411 = vmul.f32 %v1389, %v1399
    %v1412 = vadd.f32 %v1408, %v1410
    %v1413 = vadd.f32 %v1409, %v1411
    %v1414 = vtanh.pop %v1412
    %v1415 = vtanh.pop %v1413
    %v1416 = vmul.f32 %v1406, %v1414
    %v1417 = vmul.f32 %v1407, %v1415
    %v1418 = vpack.c.bf16 %v1417, %v1416
    %s1419 = scalar_lea.vmem [#allocation5], 24
    %1420 = vst [vmem:[%s1419] sm:$0xff] %v1418
    %s1421 = scalar_lea.vmem [#allocation4], 128
    %v1422 = vld [vmem:[%s1421] sm:$0xff]
    %v1423 = vld [vmem:[%s1421 + $0x8] sm:$0xff]
    %v1424 = vld [vmem:[%s1421 + $0x10] sm:$0xff]
    %v1425 = vld [vmem:[%s1421 + $0x18] sm:$0xff]
    %v1426 = vunpack.c.l.bf16 %v1422
    %v1427 = vunpack.c.l.bf16 %v1423
    %v1428 = vunpack.c.l.bf16 %v1424
    %v1429 = vunpack.c.l.bf16 %v1425
    %v1430 = vunpack.c.h.bf16 %v1422
    %v1431 = vunpack.c.h.bf16 %v1423
    %v1432 = vunpack.c.h.bf16 %v1424
    %v1433 = vunpack.c.h.bf16 %v1425
    %1434 = vmatprep.subr.bf16.mxu0 %v788
    %1435 = vmatpush1.bf16.msra.mxu0 %v787
    %1436 = vmatprep.subr.bf16.mxu0 %v792
    %1437 = vmatpush1.bf16.msra.mxu0 %v791
    %1438 = vmatprep.subr.bf16.mxu0 %v796
    %1439 = vmatpush1.bf16.msra.mxu0 %v795
    %1440 = vmatprep.subr.bf16.mxu0 %v800
    %1441 = vmatpush1.bf16.msra.mxu0 %v799
    %1442 = vmatprep.subr.bf16.mxu0 %v804
    %1443 = vmatpush1.bf16.msra.mxu0 %v803
    %1444 = vmatprep.subr.bf16.mxu0 %v808
    %1445 = vmatpush1.bf16.msra.mxu0 %v807
    %1446 = vmatprep.subr.bf16.mxu0 %v812
    %1447 = vmatpush1.bf16.msra.mxu0 %v811
    %1448 = vmatprep.subr.bf16.mxu0 %v816
    %1449 = vmatpush1.bf16.msra.mxu0 %v815
    %1450 = vmatprep.subr.bf16.mxu0 0
    %1451 = vmatpush1.bf16.msra.mxu0 0
    %1452 = vmatprep.subr.bf16.mxu0 0
    %1453 = vmatpush1.bf16.msra.mxu0 0
    %1454 = vmatprep.subr.bf16.mxu0 0
    %1455 = vmatpush1.bf16.msra.mxu0 0
    %1456 = vmatprep.subr.bf16.mxu0 0
    %1457 = vmatpush1.bf16.msra.mxu0 0
    %1458 = vmatprep.subr.bf16.mxu0 0
    %1459 = vmatpush1.bf16.msra.mxu0 0
    %1460 = vmatprep.subr.bf16.mxu0 0
    %1461 = vmatpush1.bf16.msra.mxu0 0
    %1462 = vmatprep.subr.bf16.mxu0 0
    %1463 = vmatpush1.bf16.msra.mxu0 0
    %1464 = vmatprep.subr.bf16.mxu0 0
    %1465 = vmatpush1.bf16.msra.mxu0 0
    %1466 = vmatprep.mubr.bf16.mxu0 0
    %1467 = vmatmul.mubr.bf16.gmra.mrb[0].mxu0 %v1418
    %v1468 = vpop.f32.mrb[0].mxu0
    %v1469 = vadd.f32 0.0, %v1468
    %v1470 = vpop.f32.mrb[0].mxu0
    %v1471 = vadd.f32 0.0, %v1470
    %v1472 = vpop.f32.mrb[0].mxu0
    %v1473 = vadd.f32 0.0, %v1472
    %v1474 = vpop.f32.mrb[0].mxu0
    %v1475 = vadd.f32 0.0, %v1474
    %1476 = vdwg.mxu0
    %1477 = vmatprep.subr.bf16.mxu0 %v790
    %1478 = vmatpush1.bf16.msra.mxu0 %v789
    %1479 = vmatprep.subr.bf16.mxu0 %v794
    %1480 = vmatpush1.bf16.msra.mxu0 %v793
    %1481 = vmatprep.subr.bf16.mxu0 %v798
    %1482 = vmatpush1.bf16.msra.mxu0 %v797
    %1483 = vmatprep.subr.bf16.mxu0 %v802
    %1484 = vmatpush1.bf16.msra.mxu0 %v801
    %1485 = vmatprep.subr.bf16.mxu0 %v806
    %1486 = vmatpush1.bf16.msra.mxu0 %v805
    %1487 = vmatprep.subr.bf16.mxu0 %v810
    %1488 = vmatpush1.bf16.msra.mxu0 %v809
    %1489 = vmatprep.subr.bf16.mxu0 %v814
    %1490 = vmatpush1.bf16.msra.mxu0 %v813
    %1491 = vmatprep.subr.bf16.mxu0 %v818
    %1492 = vmatpush1.bf16.msra.mxu0 %v817
    %1493 = vmatprep.subr.bf16.mxu0 0
    %1494 = vmatpush1.bf16.msra.mxu0 0
    %1495 = vmatprep.subr.bf16.mxu0 0
    %1496 = vmatpush1.bf16.msra.mxu0 0
    %1497 = vmatprep.subr.bf16.mxu0 0
    %1498 = vmatpush1.bf16.msra.mxu0 0
    %1499 = vmatprep.subr.bf16.mxu0 0
    %1500 = vmatpush1.bf16.msra.mxu0 0
    %1501 = vmatprep.subr.bf16.mxu0 0
    %1502 = vmatpush1.bf16.msra.mxu0 0
    %1503 = vmatprep.subr.bf16.mxu0 0
    %1504 = vmatpush1.bf16.msra.mxu0 0
    %1505 = vmatprep.subr.bf16.mxu0 0
    %1506 = vmatpush1.bf16.msra.mxu0 0
    %1507 = vmatprep.subr.bf16.mxu0 0
    %1508 = vmatpush1.bf16.msra.mxu0 0
    %1509 = vmatprep.mubr.bf16.mxu0 0
    %1510 = vmatmul.mubr.bf16.gmra.mrb[0].mxu0 %v1418
    %v1511 = vpop.f32.mrb[0].mxu0
    %v1512 = vadd.f32 0.0, %v1511
    %v1513 = vpop.f32.mrb[0].mxu0
    %v1514 = vadd.f32 0.0, %v1513
    %v1515 = vpop.f32.mrb[0].mxu0
    %v1516 = vadd.f32 0.0, %v1515
    %v1517 = vpop.f32.mrb[0].mxu0
    %v1518 = vadd.f32 0.0, %v1517
    %1519 = vdwg.mxu0
    %v1520 = vadd.f32 %v1426, %v1469
    %v1521 = vadd.f32 %v1427, %v1471
    %v1522 = vadd.f32 %v1428, %v1512
    %v1523 = vadd.f32 %v1429, %v1514
    %v1524 = vadd.f32 %v1430, %v1473
    %v1525 = vadd.f32 %v1431, %v1475
    %v1526 = vadd.f32 %v1432, %v1516
    %v1527 = vadd.f32 %v1433, %v1518
    %v1528 = vmul.f32 %v1520, 0.5
    %v1529 = vmul.f32 %v1524, 0.5
    %v1530 = vtanh.pop %v1528
    %v1531 = vtanh.pop %v1529
    %v1532 = vadd.f32 %v1530, 1.0
    %v1533 = vadd.f32 %v1531, 1.0
    %v1534 = vmul.f32 %v1532, 0.5
    %v1535 = vmul.f32 %v1533, 0.5
    %v1536 = vmul.f32 %v1521, 0.5
    %v1537 = vmul.f32 %v1525, 0.5
    %v1538 = vtanh.pop %v1536
    %v1539 = vtanh.pop %v1537
    %v1540 = vadd.f32 %v1538, 1.0
    %v1541 = vadd.f32 %v1539, 1.0
    %v1542 = vmul.f32 %v1540, 0.5
    %v1543 = vmul.f32 %v1541, 0.5
    %v1544 = vtanh.pop %v1522
    %v1545 = vtanh.pop %v1526
    %v1546 = vmul.f32 %v1523, 0.5
    %v1547 = vmul.f32 %v1527, 0.5
    %v1548 = vtanh.pop %v1546
    %v1549 = vtanh.pop %v1547
    %v1550 = vadd.f32 %v1548, 1.0
    %v1551 = vadd.f32 %v1549, 1.0
    %v1552 = vmul.f32 %v1550, 0.5
    %v1553 = vmul.f32 %v1551, 0.5
    %v1554 = vmul.f32 %v1542, %v1412
    %v1555 = vmul.f32 %v1543, %v1413
    %v1556 = vmul.f32 %v1534, %v1544
    %v1557 = vmul.f32 %v1535, %v1545
    %v1558 = vadd.f32 %v1554, %v1556
    %v1559 = vadd.f32 %v1555, %v1557
    %v1560 = vtanh.pop %v1558
    %v1561 = vtanh.pop %v1559
    %v1562 = vmul.f32 %v1552, %v1560
    %v1563 = vmul.f32 %v1553, %v1561
    %v1564 = vpack.c.bf16 %v1563, %v1562
    %s1565 = scalar_lea.vmem [#allocation5], 32
    %1566 = vst [vmem:[%s1565] sm:$0xff] %v1564
    %s1567 = scalar_lea.vmem [#allocation4], 160
    %v1568 = vld [vmem:[%s1567] sm:$0xff]
    %v1569 = vld [vmem:[%s1567 + $0x8] sm:$0xff]
    %v1570 = vld [vmem:[%s1567 + $0x10] sm:$0xff]
    %v1571 = vld [vmem:[%s1567 + $0x18] sm:$0xff]
    %v1572 = vunpack.c.l.bf16 %v1568
    %v1573 = vunpack.c.l.bf16 %v1569
    %v1574 = vunpack.c.l.bf16 %v1570
    %v1575 = vunpack.c.l.bf16 %v1571
    %v1576 = vunpack.c.h.bf16 %v1568
    %v1577 = vunpack.c.h.bf16 %v1569
    %v1578 = vunpack.c.h.bf16 %v1570
    %v1579 = vunpack.c.h.bf16 %v1571
    %1580 = vmatprep.subr.bf16.mxu0 %v788
    %1581 = vmatpush1.bf16.msra.mxu0 %v787
    %1582 = vmatprep.subr.bf16.mxu0 %v792
    %1583 = vmatpush1.bf16.msra.mxu0 %v791
    %1584 = vmatprep.subr.bf16.mxu0 %v796
    %1585 = vmatpush1.bf16.msra.mxu0 %v795
    %1586 = vmatprep.subr.bf16.mxu0 %v800
    %1587 = vmatpush1.bf16.msra.mxu0 %v799
    %1588 = vmatprep.subr.bf16.mxu0 %v804
    %1589 = vmatpush1.bf16.msra.mxu0 %v803
    %1590 = vmatprep.subr.bf16.mxu0 %v808
    %1591 = vmatpush1.bf16.msra.mxu0 %v807
    %1592 = vmatprep.subr.bf16.mxu0 %v812
    %1593 = vmatpush1.bf16.msra.mxu0 %v811
    %1594 = vmatprep.subr.bf16.mxu0 %v816
    %1595 = vmatpush1.bf16.msra.mxu0 %v815
    %1596 = vmatprep.subr.bf16.mxu0 0
    %1597 = vmatpush1.bf16.msra.mxu0 0
    %1598 = vmatprep.subr.bf16.mxu0 0
    %1599 = vmatpush1.bf16.msra.mxu0 0
    %1600 = vmatprep.subr.bf16.mxu0 0
    %1601 = vmatpush1.bf16.msra.mxu0 0
    %1602 = vmatprep.subr.bf16.mxu0 0
    %1603 = vmatpush1.bf16.msra.mxu0 0
    %1604 = vmatprep.subr.bf16.mxu0 0
    %1605 = vmatpush1.bf16.msra.mxu0 0
    %1606 = vmatprep.subr.bf16.mxu0 0
    %1607 = vmatpush1.bf16.msra.mxu0 0
    %1608 = vmatprep.subr.bf16.mxu0 0
    %1609 = vmatpush1.bf16.msra.mxu0 0
    %1610 = vmatprep.subr.bf16.mxu0 0
    %1611 = vmatpush1.bf16.msra.mxu0 0
    %1612 = vmatprep.mubr.bf16.mxu0 0
    %1613 = vmatmul.mubr.bf16.gmra.mrb[0].mxu0 %v1564
    %v1614 = vpop.f32.mrb[0].mxu0
    %v1615 = vadd.f32 0.0, %v1614
    %v1616 = vpop.f32.mrb[0].mxu0
    %v1617 = vadd.f32 0.0, %v1616
    %v1618 = vpop.f32.mrb[0].mxu0
    %v1619 = vadd.f32 0.0, %v1618
    %v1620 = vpop.f32.mrb[0].mxu0
    %v1621 = vadd.f32 0.0, %v1620
    %1622 = vdwg.mxu0
    %1623 = vmatprep.subr.bf16.mxu0 %v790
    %1624 = vmatpush1.bf16.msra.mxu0 %v789
    %1625 = vmatprep.subr.bf16.mxu0 %v794
    %1626 = vmatpush1.bf16.msra.mxu0 %v793
    %1627 = vmatprep.subr.bf16.mxu0 %v798
    %1628 = vmatpush1.bf16.msra.mxu0 %v797
    %1629 = vmatprep.subr.bf16.mxu0 %v802
    %1630 = vmatpush1.bf16.msra.mxu0 %v801
    %1631 = vmatprep.subr.bf16.mxu0 %v806
    %1632 = vmatpush1.bf16.msra.mxu0 %v805
    %1633 = vmatprep.subr.bf16.mxu0 %v810
    %1634 = vmatpush1.bf16.msra.mxu0 %v809
    %1635 = vmatprep.subr.bf16.mxu0 %v814
    %1636 = vmatpush1.bf16.msra.mxu0 %v813
    %1637 = vmatprep.subr.bf16.mxu0 %v818
    %1638 = vmatpush1.bf16.msra.mxu0 %v817
    %1639 = vmatprep.subr.bf16.mxu0 0
    %1640 = vmatpush1.bf16.msra.mxu0 0
    %1641 = vmatprep.subr.bf16.mxu0 0
    %1642 = vmatpush1.bf16.msra.mxu0 0
    %1643 = vmatprep.subr.bf16.mxu0 0
    %1644 = vmatpush1.bf16.msra.mxu0 0
    %1645 = vmatprep.subr.bf16.mxu0 0
    %1646 = vmatpush1.bf16.msra.mxu0 0
    %1647 = vmatprep.subr.bf16.mxu0 0
    %1648 = vmatpush1.bf16.msra.mxu0 0
    %1649 = vmatprep.subr.bf16.mxu0 0
    %1650 = vmatpush1.bf16.msra.mxu0 0
    %1651 = vmatprep.subr.bf16.mxu0 0
    %1652 = vmatpush1.bf16.msra.mxu0 0
    %1653 = vmatprep.subr.bf16.mxu0 0
    %1654 = vmatpush1.bf16.msra.mxu0 0
    %1655 = vmatprep.mubr.bf16.mxu0 0
    %1656 = vmatmul.mubr.bf16.gmra.mrb[0].mxu0 %v1564
    %v1657 = vpop.f32.mrb[0].mxu0
    %v1658 = vadd.f32 0.0, %v1657
    %v1659 = vpop.f32.mrb[0].mxu0
    %v1660 = vadd.f32 0.0, %v1659
    %v1661 = vpop.f32.mrb[0].mxu0
    %v1662 = vadd.f32 0.0, %v1661
    %v1663 = vpop.f32.mrb[0].mxu0
    %v1664 = vadd.f32 0.0, %v1663
    %1665 = vdwg.mxu0
    %v1666 = vadd.f32 %v1572, %v1615
    %v1667 = vadd.f32 %v1573, %v1617
    %v1668 = vadd.f32 %v1574, %v1658
    %v1669 = vadd.f32 %v1575, %v1660
    %v1670 = vadd.f32 %v1576, %v1619
    %v1671 = vadd.f32 %v1577, %v1621
    %v1672 = vadd.f32 %v1578, %v1662
    %v1673 = vadd.f32 %v1579, %v1664
    %v1674 = vmul.f32 %v1666, 0.5
    %v1675 = vmul.f32 %v1670, 0.5
    %v1676 = vtanh.pop %v1674
    %v1677 = vtanh.pop %v1675
    %v1678 = vadd.f32 %v1676, 1.0
    %v1679 = vadd.f32 %v1677, 1.0
    %v1680 = vmul.f32 %v1678, 0.5
    %v1681 = vmul.f32 %v1679, 0.5
    %v1682 = vmul.f32 %v1667, 0.5
    %v1683 = vmul.f32 %v1671, 0.5
    %v1684 = vtanh.pop %v1682
    %v1685 = vtanh.pop %v1683
    %v1686 = vadd.f32 %v1684, 1.0
    %v1687 = vadd.f32 %v1685, 1.0
    %v1688 = vmul.f32 %v1686, 0.5
    %v1689 = vmul.f32 %v1687, 0.5
    %v1690 = vtanh.pop %v1668
    %v1691 = vtanh.pop %v1672
    %v1692 = vmul.f32 %v1669, 0.5
    %v1693 = vmul.f32 %v1673, 0.5
    %v1694 = vtanh.pop %v1692
    %v1695 = vtanh.pop %v1693
    %v1696 = vadd.f32 %v1694, 1.0
    %v1697 = vadd.f32 %v1695, 1.0
    %v1698 = vmul.f32 %v1696, 0.5
    %v1699 = vmul.f32 %v1697, 0.5
    %v1700 = vmul.f32 %v1688, %v1558
    %v1701 = vmul.f32 %v1689, %v1559
    %v1702 = vmul.f32 %v1680, %v1690
    %v1703 = vmul.f32 %v1681, %v1691
    %v1704 = vadd.f32 %v1700, %v1702
    %v1705 = vadd.f32 %v1701, %v1703
    %v1706 = vtanh.pop %v1704
    %v1707 = vtanh.pop %v1705
    %v1708 = vmul.f32 %v1698, %v1706
    %v1709 = vmul.f32 %v1699, %v1707
    %v1710 = vpack.c.bf16 %v1709, %v1708
    %s1711 = scalar_lea.vmem [#allocation5], 40
    %1712 = vst [vmem:[%s1711] sm:$0xff] %v1710
    %s1713 = scalar_lea.vmem [#allocation4], 192
    %v1714 = vld [vmem:[%s1713] sm:$0xff]
    %v1715 = vld [vmem:[%s1713 + $0x8] sm:$0xff]
    %v1716 = vld [vmem:[%s1713 + $0x10] sm:$0xff]
    %v1717 = vld [vmem:[%s1713 + $0x18] sm:$0xff]
    %v1718 = vunpack.c.l.bf16 %v1714
    %v1719 = vunpack.c.l.bf16 %v1715
    %v1720 = vunpack.c.l.bf16 %v1716
    %v1721 = vunpack.c.l.bf16 %v1717
    %v1722 = vunpack.c.h.bf16 %v1714
    %v1723 = vunpack.c.h.bf16 %v1715
    %v1724 = vunpack.c.h.bf16 %v1716
    %v1725 = vunpack.c.h.bf16 %v1717
    %1726 = vmatprep.subr.bf16.mxu0 %v788
    %1727 = vmatpush1.bf16.msra.mxu0 %v787
    %1728 = vmatprep.subr.bf16.mxu0 %v792
    %1729 = vmatpush1.bf16.msra.mxu0 %v791
    %1730 = vmatprep.subr.bf16.mxu0 %v796
    %1731 = vmatpush1.bf16.msra.mxu0 %v795
    %1732 = vmatprep.subr.bf16.mxu0 %v800
    %1733 = vmatpush1.bf16.msra.mxu0 %v799
    %1734 = vmatprep.subr.bf16.mxu0 %v804
    %1735 = vmatpush1.bf16.msra.mxu0 %v803
    %1736 = vmatprep.subr.bf16.mxu0 %v808
    %1737 = vmatpush1.bf16.msra.mxu0 %v807
    %1738 = vmatprep.subr.bf16.mxu0 %v812
    %1739 = vmatpush1.bf16.msra.mxu0 %v811
    %1740 = vmatprep.subr.bf16.mxu0 %v816
    %1741 = vmatpush1.bf16.msra.mxu0 %v815
    %1742 = vmatprep.subr.bf16.mxu0 0
    %1743 = vmatpush1.bf16.msra.mxu0 0
    %1744 = vmatprep.subr.bf16.mxu0 0
    %1745 = vmatpush1.bf16.msra.mxu0 0
    %1746 = vmatprep.subr.bf16.mxu0 0
    %1747 = vmatpush1.bf16.msra.mxu0 0
    %1748 = vmatprep.subr.bf16.mxu0 0
    %1749 = vmatpush1.bf16.msra.mxu0 0
    %1750 = vmatprep.subr.bf16.mxu0 0
    %1751 = vmatpush1.bf16.msra.mxu0 0
    %1752 = vmatprep.subr.bf16.mxu0 0
    %1753 = vmatpush1.bf16.msra.mxu0 0
    %1754 = vmatprep.subr.bf16.mxu0 0
    %1755 = vmatpush1.bf16.msra.mxu0 0
    %1756 = vmatprep.subr.bf16.mxu0 0
    %1757 = vmatpush1.bf16.msra.mxu0 0
    %1758 = vmatprep.mubr.bf16.mxu0 0
    %1759 = vmatmul.mubr.bf16.gmra.mrb[0].mxu0 %v1710
    %v1760 = vpop.f32.mrb[0].mxu0
    %v1761 = vadd.f32 0.0, %v1760
    %v1762 = vpop.f32.mrb[0].mxu0
    %v1763 = vadd.f32 0.0, %v1762
    %v1764 = vpop.f32.mrb[0].mxu0
    %v1765 = vadd.f32 0.0, %v1764
    %v1766 = vpop.f32.mrb[0].mxu0
    %v1767 = vadd.f32 0.0, %v1766
    %1768 = vdwg.mxu0
    %1769 = vmatprep.subr.bf16.mxu0 %v790
    %1770 = vmatpush1.bf16.msra.mxu0 %v789
    %1771 = vmatprep.subr.bf16.mxu0 %v794
    %1772 = vmatpush1.bf16.msra.mxu0 %v793
    %1773 = vmatprep.subr.bf16.mxu0 %v798
    %1774 = vmatpush1.bf16.msra.mxu0 %v797
    %1775 = vmatprep.subr.bf16.mxu0 %v802
    %1776 = vmatpush1.bf16.msra.mxu0 %v801
    %1777 = vmatprep.subr.bf16.mxu0 %v806
    %1778 = vmatpush1.bf16.msra.mxu0 %v805
    %1779 = vmatprep.subr.bf16.mxu0 %v810
    %1780 = vmatpush1.bf16.msra.mxu0 %v809
    %1781 = vmatprep.subr.bf16.mxu0 %v814
    %1782 = vmatpush1.bf16.msra.mxu0 %v813
    %1783 = vmatprep.subr.bf16.mxu0 %v818
    %1784 = vmatpush1.bf16.msra.mxu0 %v817
    %1785 = vmatprep.subr.bf16.mxu0 0
    %1786 = vmatpush1.bf16.msra.mxu0 0
    %1787 = vmatprep.subr.bf16.mxu0 0
    %1788 = vmatpush1.bf16.msra.mxu0 0
    %1789 = vmatprep.subr.bf16.mxu0 0
    %1790 = vmatpush1.bf16.msra.mxu0 0
    %1791 = vmatprep.subr.bf16.mxu0 0
    %1792 = vmatpush1.bf16.msra.mxu0 0
    %1793 = vmatprep.subr.bf16.mxu0 0
    %1794 = vmatpush1.bf16.msra.mxu0 0
    %1795 = vmatprep.subr.bf16.mxu0 0
    %1796 = vmatpush1.bf16.msra.mxu0 0
    %1797 = vmatprep.subr.bf16.mxu0 0
    %1798 = vmatpush1.bf16.msra.mxu0 0
    %1799 = vmatprep.subr.bf16.mxu0 0
    %1800 = vmatpush1.bf16.msra.mxu0 0
    %1801 = vmatprep.mubr.bf16.mxu0 0
    %1802 = vmatmul.mubr.bf16.gmra.mrb[0].mxu0 %v1710
    %v1803 = vpop.f32.mrb[0].mxu0
    %v1804 = vadd.f32 0.0, %v1803
    %v1805 = vpop.f32.mrb[0].mxu0
    %v1806 = vadd.f32 0.0, %v1805
    %v1807 = vpop.f32.mrb[0].mxu0
    %v1808 = vadd.f32 0.0, %v1807
    %v1809 = vpop.f32.mrb[0].mxu0
    %v1810 = vadd.f32 0.0, %v1809
    %1811 = vdwg.mxu0
    %v1812 = vadd.f32 %v1718, %v1761
    %v1813 = vadd.f32 %v1719, %v1763
    %v1814 = vadd.f32 %v1720, %v1804
    %v1815 = vadd.f32 %v1721, %v1806
    %v1816 = vadd.f32 %v1722, %v1765
    %v1817 = vadd.f32 %v1723, %v1767
    %v1818 = vadd.f32 %v1724, %v1808
    %v1819 = vadd.f32 %v1725, %v1810
    %v1820 = vmul.f32 %v1812, 0.5
    %v1821 = vmul.f32 %v1816, 0.5
    %v1822 = vtanh.pop %v1820
    %v1823 = vtanh.pop %v1821
    %v1824 = vadd.f32 %v1822, 1.0
    %v1825 = vadd.f32 %v1823, 1.0
    %v1826 = vmul.f32 %v1824, 0.5
    %v1827 = vmul.f32 %v1825, 0.5
    %v1828 = vmul.f32 %v1813, 0.5
    %v1829 = vmul.f32 %v1817, 0.5
    %v1830 = vtanh.pop %v1828
    %v1831 = vtanh.pop %v1829
    %v1832 = vadd.f32 %v1830, 1.0
    %v1833 = vadd.f32 %v1831, 1.0
    %v1834 = vmul.f32 %v1832, 0.5
    %v1835 = vmul.f32 %v1833, 0.5
    %v1836 = vtanh.pop %v1814
    %v1837 = vtanh.pop %v1818
    %v1838 = vmul.f32 %v1815, 0.5
    %v1839 = vmul.f32 %v1819, 0.5
    %v1840 = vtanh.pop %v1838
    %v1841 = vtanh.pop %v1839
    %v1842 = vadd.f32 %v1840, 1.0
    %v1843 = vadd.f32 %v1841, 1.0
    %v1844 = vmul.f32 %v1842, 0.5
    %v1845 = vmul.f32 %v1843, 0.5
    %v1846 = vmul.f32 %v1834, %v1704
    %v1847 = vmul.f32 %v1835, %v1705
    %v1848 = vmul.f32 %v1826, %v1836
    %v1849 = vmul.f32 %v1827, %v1837
    %v1850 = vadd.f32 %v1846, %v1848
    %v1851 = vadd.f32 %v1847, %v1849
    %v1852 = vtanh.pop %v1850
    %v1853 = vtanh.pop %v1851
    %v1854 = vmul.f32 %v1844, %v1852
    %v1855 = vmul.f32 %v1845, %v1853
    %v1856 = vpack.c.bf16 %v1855, %v1854
    %s1857 = scalar_lea.vmem [#allocation5], 48
    %1858 = vst [vmem:[%s1857] sm:$0xff] %v1856
    %s1859 = scalar_lea.vmem [#allocation4], 224
    %v1860 = vld [vmem:[%s1859] sm:$0xff]
    %v1861 = vld [vmem:[%s1859 + $0x8] sm:$0xff]
    %v1862 = vld [vmem:[%s1859 + $0x10] sm:$0xff]
    %v1863 = vld [vmem:[%s1859 + $0x18] sm:$0xff]
    %v1864 = vunpack.c.l.bf16 %v1860
    %v1865 = vunpack.c.l.bf16 %v1861
    %v1866 = vunpack.c.l.bf16 %v1862
    %v1867 = vunpack.c.l.bf16 %v1863
    %v1868 = vunpack.c.h.bf16 %v1860
    %v1869 = vunpack.c.h.bf16 %v1861
    %v1870 = vunpack.c.h.bf16 %v1862
    %v1871 = vunpack.c.h.bf16 %v1863
    %1872 = vmatprep.subr.bf16.mxu0 %v788
    %1873 = vmatpush1.bf16.msra.mxu0 %v787
    %1874 = vmatprep.subr.bf16.mxu0 %v792
    %1875 = vmatpush1.bf16.msra.mxu0 %v791
    %1876 = vmatprep.subr.bf16.mxu0 %v796
    %1877 = vmatpush1.bf16.msra.mxu0 %v795
    %1878 = vmatprep.subr.bf16.mxu0 %v800
    %1879 = vmatpush1.bf16.msra.mxu0 %v799
    %1880 = vmatprep.subr.bf16.mxu0 %v804
    %1881 = vmatpush1.bf16.msra.mxu0 %v803
    %1882 = vmatprep.subr.bf16.mxu0 %v808
    %1883 = vmatpush1.bf16.msra.mxu0 %v807
    %1884 = vmatprep.subr.bf16.mxu0 %v812
    %1885 = vmatpush1.bf16.msra.mxu0 %v811
    %1886 = vmatprep.subr.bf16.mxu0 %v816
    %1887 = vmatpush1.bf16.msra.mxu0 %v815
    %1888 = vmatprep.subr.bf16.mxu0 0
    %1889 = vmatpush1.bf16.msra.mxu0 0
    %1890 = vmatprep.subr.bf16.mxu0 0
    %1891 = vmatpush1.bf16.msra.mxu0 0
    %1892 = vmatprep.subr.bf16.mxu0 0
    %1893 = vmatpush1.bf16.msra.mxu0 0
    %1894 = vmatprep.subr.bf16.mxu0 0
    %1895 = vmatpush1.bf16.msra.mxu0 0
    %1896 = vmatprep.subr.bf16.mxu0 0
    %1897 = vmatpush1.bf16.msra.mxu0 0
    %1898 = vmatprep.subr.bf16.mxu0 0
    %1899 = vmatpush1.bf16.msra.mxu0 0
    %1900 = vmatprep.subr.bf16.mxu0 0
    %1901 = vmatpush1.bf16.msra.mxu0 0
    %1902 = vmatprep.subr.bf16.mxu0 0
    %1903 = vmatpush1.bf16.msra.mxu0 0
    %1904 = vmatprep.mubr.bf16.mxu0 0
    %1905 = vmatmul.mubr.bf16.gmra.mrb[0].mxu0 %v1856
    %v1906 = vpop.f32.mrb[0].mxu0
    %v1907 = vadd.f32 0.0, %v1906
    %v1908 = vpop.f32.mrb[0].mxu0
    %v1909 = vadd.f32 0.0, %v1908
    %v1910 = vpop.f32.mrb[0].mxu0
    %v1911 = vadd.f32 0.0, %v1910
    %v1912 = vpop.f32.mrb[0].mxu0
    %v1913 = vadd.f32 0.0, %v1912
    %1914 = vdwg.mxu0
    %1915 = vmatprep.subr.bf16.mxu0 %v790
    %1916 = vmatpush1.bf16.msra.mxu0 %v789
    %1917 = vmatprep.subr.bf16.mxu0 %v794
    %1918 = vmatpush1.bf16.msra.mxu0 %v793
    %1919 = vmatprep.subr.bf16.mxu0 %v798
    %1920 = vmatpush1.bf16.msra.mxu0 %v797
    %1921 = vmatprep.subr.bf16.mxu0 %v802
    %1922 = vmatpush1.bf16.msra.mxu0 %v801
    %1923 = vmatprep.subr.bf16.mxu0 %v806
    %1924 = vmatpush1.bf16.msra.mxu0 %v805
    %1925 = vmatprep.subr.bf16.mxu0 %v810
    %1926 = vmatpush1.bf16.msra.mxu0 %v809
    %1927 = vmatprep.subr.bf16.mxu0 %v814
    %1928 = vmatpush1.bf16.msra.mxu0 %v813
    %1929 = vmatprep.subr.bf16.mxu0 %v818
    %1930 = vmatpush1.bf16.msra.mxu0 %v817
    %1931 = vmatprep.subr.bf16.mxu0 0
    %1932 = vmatpush1.bf16.msra.mxu0 0
    %1933 = vmatprep.subr.bf16.mxu0 0
    %1934 = vmatpush1.bf16.msra.mxu0 0
    %1935 = vmatprep.subr.bf16.mxu0 0
    %1936 = vmatpush1.bf16.msra.mxu0 0
    %1937 = vmatprep.subr.bf16.mxu0 0
    %1938 = vmatpush1.bf16.msra.mxu0 0
    %1939 = vmatprep.subr.bf16.mxu0 0
    %1940 = vmatpush1.bf16.msra.mxu0 0
    %1941 = vmatprep.subr.bf16.mxu0 0
    %1942 = vmatpush1.bf16.msra.mxu0 0
    %1943 = vmatprep.subr.bf16.mxu0 0
    %1944 = vmatpush1.bf16.msra.mxu0 0
    %1945 = vmatprep.subr.bf16.mxu0 0
    %1946 = vmatpush1.bf16.msra.mxu0 0
    %1947 = vmatprep.mubr.bf16.mxu0 0
    %1948 = vmatmul.mubr.bf16.gmra.mrb[0].mxu0 %v1856
    %v1949 = vpop.f32.mrb[0].mxu0
    %v1950 = vadd.f32 0.0, %v1949
    %v1951 = vpop.f32.mrb[0].mxu0
    %v1952 = vadd.f32 0.0, %v1951
    %v1953 = vpop.f32.mrb[0].mxu0
    %v1954 = vadd.f32 0.0, %v1953
    %v1955 = vpop.f32.mrb[0].mxu0
    %v1956 = vadd.f32 0.0, %v1955
    %1957 = vdwg.mxu0
    %v1958 = vadd.f32 %v1864, %v1907
    %v1959 = vadd.f32 %v1865, %v1909
    %v1960 = vadd.f32 %v1866, %v1950
    %v1961 = vadd.f32 %v1867, %v1952
    %v1962 = vadd.f32 %v1868, %v1911
    %v1963 = vadd.f32 %v1869, %v1913
    %v1964 = vadd.f32 %v1870, %v1954
    %v1965 = vadd.f32 %v1871, %v1956
    %v1966 = vmul.f32 %v1958, 0.5
    %v1967 = vmul.f32 %v1962, 0.5
    %v1968 = vtanh.pop %v1966
    %v1969 = vtanh.pop %v1967
    %v1970 = vadd.f32 %v1968, 1.0
    %v1971 = vadd.f32 %v1969, 1.0
    %v1972 = vmul.f32 %v1970, 0.5
    %v1973 = vmul.f32 %v1971, 0.5
    %v1974 = vmul.f32 %v1959, 0.5
    %v1975 = vmul.f32 %v1963, 0.5
    %v1976 = vtanh.pop %v1974
    %v1977 = vtanh.pop %v1975
    %v1978 = vadd.f32 %v1976, 1.0
    %v1979 = vadd.f32 %v1977, 1.0
    %v1980 = vmul.f32 %v1978, 0.5
    %v1981 = vmul.f32 %v1979, 0.5
    %v1982 = vtanh.pop %v1960
    %v1983 = vtanh.pop %v1964
    %v1984 = vmul.f32 %v1961, 0.5
    %v1985 = vmul.f32 %v1965, 0.5
    %v1986 = vtanh.pop %v1984
    %v1987 = vtanh.pop %v1985
    %v1988 = vadd.f32 %v1986, 1.0
    %v1989 = vadd.f32 %v1987, 1.0
    %v1990 = vmul.f32 %v1988, 0.5
    %v1991 = vmul.f32 %v1989, 0.5
    %v1992 = vmul.f32 %v1980, %v1850
    %v1993 = vmul.f32 %v1981, %v1851
    %v1994 = vmul.f32 %v1972, %v1982
    %v1995 = vmul.f32 %v1973, %v1983
    %v1996 = vadd.f32 %v1992, %v1994
    %v1997 = vadd.f32 %v1993, %v1995
    %v1998 = vtanh.pop %v1996
    %v1999 = vtanh.pop %v1997
    %v2000 = vmul.f32 %v1990, %v1998
    %v2001 = vmul.f32 %v1991, %v1999
    %v2002 = vpack.c.bf16 %v2001, %v2000
    %s2003 = scalar_lea.vmem [#allocation5], 56
    %2004 = vst [vmem:[%s2003] sm:$0xff] %v2002
    %2005 = vst [vmem:[#allocation2] sm:$0xff] %v2000
    %2006 = vst [vmem:[#allocation2 + $0x8] sm:$0xff] %v2001
    %2007 = vst [vmem:[#allocation3] sm:$0xff] %v1996
    %2008 = vst [vmem:[#allocation3 + $0x8] sm:$0xff] %v1997
    %v2009 = vld [vmem:[#allocation5] sm:$0xff]
    %v2010 = vld [vmem:[#allocation5 + $0x8] sm:$0xff]
    %v2011 = vld [vmem:[#allocation5 + $0x10] sm:$0xff]
    %v2012 = vld [vmem:[#allocation5 + $0x18] sm:$0xff]
    %v2013 = vld [vmem:[#allocation5 + $0x20] sm:$0xff]
    %v2014 = vld [vmem:[#allocation5 + $0x28] sm:$0xff]
    %v2015 = vld [vmem:[#allocation5 + $0x30] sm:$0xff]
    %v2016 = vld [vmem:[#allocation5 + $0x38] sm:$0xff]
    %v2017 = vld [vmem:[#allocation8] sm:$0xff]
    %v2018 = vld [vmem:[#allocation8 + $0x8] sm:$0xff]
    %v2019 = vld [vmem:[#allocation8 + $0x10] sm:$0xff]
    %v2020 = vld [vmem:[#allocation8 + $0x18] sm:$0xff]
    %v2021 = vld [vmem:[#allocation8 + $0x20] sm:$0xff]
    %v2022 = vld [vmem:[#allocation8 + $0x28] sm:$0xff]
    %v2023 = vld [vmem:[#allocation8 + $0x30] sm:$0xff]
    %v2024 = vld [vmem:[#allocation8 + $0x38] sm:$0xff]
    %v2025 = vld [vmem:[#allocation8 + $0x40] sm:$0xff]
    %v2026 = vld [vmem:[#allocation8 + $0x48] sm:$0xff]
    %v2027 = vld [vmem:[#allocation8 + $0x50] sm:$0xff]
    %v2028 = vld [vmem:[#allocation8 + $0x58] sm:$0xff]
    %v2029 = vld [vmem:[#allocation8 + $0x60] sm:$0xff]
    %v2030 = vld [vmem:[#allocation8 + $0x68] sm:$0xff]
    %v2031 = vld [vmem:[#allocation8 + $0x70] sm:$0xff]
    %v2032 = vld [vmem:[#allocation8 + $0x78] sm:$0xff]
    %v2033 = vld [vmem:[#allocation8 + $0x80] sm:$0xff]
    %v2034 = vld [vmem:[#allocation8 + $0x88] sm:$0xff]
    %v2035 = vld [vmem:[#allocation8 + $0x90] sm:$0xff]
    %v2036 = vld [vmem:[#allocation8 + $0x98] sm:$0xff]
    %v2037 = vld [vmem:[#allocation8 + $0xa0] sm:$0xff]
    %v2038 = vld [vmem:[#allocation8 + $0xa8] sm:$0xff]
    %v2039 = vld [vmem:[#allocation8 + $0xb0] sm:$0xff]
    %v2040 = vld [vmem:[#allocation8 + $0xb8] sm:$0xff]
    %v2041 = vld [vmem:[#allocation8 + $0xc0] sm:$0xff]
    %v2042 = vld [vmem:[#allocation8 + $0xc8] sm:$0xff]
    %v2043 = vld [vmem:[#allocation8 + $0xd0] sm:$0xff]
    %v2044 = vld [vmem:[#allocation8 + $0xd8] sm:$0xff]
    %v2045 = vld [vmem:[#allocation8 + $0xe0] sm:$0xff]
    %v2046 = vld [vmem:[#allocation8 + $0xe8] sm:$0xff]
    %v2047 = vld [vmem:[#allocation8 + $0xf0] sm:$0xff]
    %v2048 = vld [vmem:[#allocation8 + $0xf8] sm:$0xff]
    %s2049 = scalar_lea.vmem [#allocation10], 256
    %v2050 = vld [vmem:[%s2049] sm:$0xff]
    %v2051 = vld [vmem:[%s2049 + $0x8] sm:$0xff]
    %v2052 = vld [vmem:[%s2049 + $0x10] sm:$0xff]
    %v2053 = vld [vmem:[%s2049 + $0x18] sm:$0xff]
    %v2054 = vld [vmem:[%s2049 + $0x20] sm:$0xff]
    %v2055 = vld [vmem:[%s2049 + $0x28] sm:$0xff]
    %v2056 = vld [vmem:[%s2049 + $0x30] sm:$0xff]
    %v2057 = vld [vmem:[%s2049 + $0x38] sm:$0xff]
    %v2058 = vld [vmem:[%s2049 + $0x40] sm:$0xff]
    %v2059 = vld [vmem:[%s2049 + $0x48] sm:$0xff]
    %v2060 = vld [vmem:[%s2049 + $0x50] sm:$0xff]
    %v2061 = vld [vmem:[%s2049 + $0x58] sm:$0xff]
    %v2062 = vld [vmem:[%s2049 + $0x60] sm:$0xff]
    %v2063 = vld [vmem:[%s2049 + $0x68] sm:$0xff]
    %v2064 = vld [vmem:[%s2049 + $0x70] sm:$0xff]
    %v2065 = vld [vmem:[%s2049 + $0x78] sm:$0xff]
    %v2066 = vld [vmem:[%s2049 + $0x80] sm:$0xff]
    %v2067 = vld [vmem:[%s2049 + $0x88] sm:$0xff]
    %v2068 = vld [vmem:[%s2049 + $0x90] sm:$0xff]
    %v2069 = vld [vmem:[%s2049 + $0x98] sm:$0xff]
    %v2070 = vld [vmem:[%s2049 + $0xa0] sm:$0xff]
    %v2071 = vld [vmem:[%s2049 + $0xa8] sm:$0xff]
    %v2072 = vld [vmem:[%s2049 + $0xb0] sm:$0xff]
    %v2073 = vld [vmem:[%s2049 + $0xb8] sm:$0xff]
    %v2074 = vld [vmem:[%s2049 + $0xc0] sm:$0xff]
    %v2075 = vld [vmem:[%s2049 + $0xc8] sm:$0xff]
    %v2076 = vld [vmem:[%s2049 + $0xd0] sm:$0xff]
    %v2077 = vld [vmem:[%s2049 + $0xd8] sm:$0xff]
    %v2078 = vld [vmem:[%s2049 + $0xe0] sm:$0xff]
    %v2079 = vld [vmem:[%s2049 + $0xe8] sm:$0xff]
    %v2080 = vld [vmem:[%s2049 + $0xf0] sm:$0xff]
    %v2081 = vld [vmem:[%s2049 + $0xf8] sm:$0xff]
    %s2082 = scalar_lea.vmem %s4, 4
    %v2083 = vld [vmem:[%s2082] sm:$0xf]
    %v2085 = vlaneseq
    %v2086 = vshrl.u32 %v2085, 7
    %v2087 = vsub.s32 0, %v2086
    %v2088 = vrot.slane %v2083, %v2087
    %v2089 = vlaneseq
    %v2090 = vshrl.u32 %v2089, 7
    %v2091 = vsub.s32 1, %v2090
    %v2092 = vrot.slane %v2083, %v2091
    %v2093 = vlaneseq
    %v2094 = vshrl.u32 %v2093, 7
    %v2095 = vsub.s32 2, %v2094
    %v2096 = vrot.slane %v2083, %v2095
    %v2097 = vlaneseq
    %v2098 = vshrl.u32 %v2097, 7
    %v2099 = vsub.s32 3, %v2098
    %v2100 = vrot.slane %v2083, %v2099
    %v2137 = vunpack.c.l.b16 %v2017
    %v2138 = vunpack.c.h.b16 %v2017
    %v2139 = vunpack.c.l.b16 %v2018
    %v2140 = vunpack.c.h.b16 %v2018
    %v2141 = vunpack.c.l.b16 %v2019
    %v2142 = vunpack.c.h.b16 %v2019
    %v2143 = vunpack.c.l.b16 %v2020
    %v2144 = vunpack.c.h.b16 %v2020
    %v2145 = vunpack.c.l.b16 %v2021
    %v2146 = vunpack.c.h.b16 %v2021
    %v2147 = vunpack.c.l.b16 %v2022
    %v2148 = vunpack.c.h.b16 %v2022
    %v2149 = vunpack.c.l.b16 %v2023
    %v2150 = vunpack.c.h.b16 %v2023
    %v2151 = vunpack.c.l.b16 %v2024
    %v2152 = vunpack.c.h.b16 %v2024
    %v2153 = vunpack.c.l.b16 %v2025
    %v2154 = vunpack.c.h.b16 %v2025
    %v2155 = vunpack.c.l.b16 %v2026
    %v2156 = vunpack.c.h.b16 %v2026
    %v2157 = vunpack.c.l.b16 %v2027
    %v2158 = vunpack.c.h.b16 %v2027
    %v2159 = vunpack.c.l.b16 %v2028
    %v2160 = vunpack.c.h.b16 %v2028
    %v2161 = vunpack.c.l.b16 %v2029
    %v2162 = vunpack.c.h.b16 %v2029
    %v2163 = vunpack.c.l.b16 %v2030
    %v2164 = vunpack.c.h.b16 %v2030
    %v2165 = vunpack.c.l.b16 %v2031
    %v2166 = vunpack.c.h.b16 %v2031
    %v2167 = vunpack.c.l.b16 %v2032
    %v2168 = vunpack.c.h.b16 %v2032
    %v2169 = vunpack.c.l.b16 %v2033
    %v2170 = vunpack.c.h.b16 %v2033
    %v2171 = vunpack.c.l.b16 %v2034
    %v2172 = vunpack.c.h.b16 %v2034
    %v2173 = vunpack.c.l.b16 %v2035
    %v2174 = vunpack.c.h.b16 %v2035
    %v2175 = vunpack.c.l.b16 %v2036
    %v2176 = vunpack.c.h.b16 %v2036
    %v2177 = vunpack.c.l.b16 %v2037
    %v2178 = vunpack.c.h.b16 %v2037
    %v2179 = vunpack.c.l.b16 %v2038
    %v2180 = vunpack.c.h.b16 %v2038
    %v2181 = vunpack.c.l.b16 %v2039
    %v2182 = vunpack.c.h.b16 %v2039
    %v2183 = vunpack.c.l.b16 %v2040
    %v2184 = vunpack.c.h.b16 %v2040
    %v2185 = vunpack.c.l.b16 %v2041
    %v2186 = vunpack.c.h.b16 %v2041
    %v2187 = vunpack.c.l.b16 %v2042
    %v2188 = vunpack.c.h.b16 %v2042
    %v2189 = vunpack.c.l.b16 %v2043
    %v2190 = vunpack.c.h.b16 %v2043
    %v2191 = vunpack.c.l.b16 %v2044
    %v2192 = vunpack.c.h.b16 %v2044
    %v2193 = vunpack.c.l.b16 %v2045
    %v2194 = vunpack.c.h.b16 %v2045
    %v2195 = vunpack.c.l.b16 %v2046
    %v2196 = vunpack.c.h.b16 %v2046
    %v2197 = vunpack.c.l.b16 %v2047
    %v2198 = vunpack.c.h.b16 %v2047
    %v2199 = vunpack.c.l.b16 %v2048
    %v2200 = vunpack.c.h.b16 %v2048
    %v2201 = vpack.c.b16 %v2141, %v2137
    %v2202 = vpack.c.b16 %v2142, %v2138
    %v2203 = vpack.c.b16 %v2143, %v2139
    %v2204 = vpack.c.b16 %v2144, %v2140
    %v2205 = vpack.c.b16 %v2149, %v2145
    %v2206 = vpack.c.b16 %v2150, %v2146
    %v2207 = vpack.c.b16 %v2151, %v2147
    %v2208 = vpack.c.b16 %v2152, %v2148
    %v2209 = vpack.c.b16 %v2157, %v2153
    %v2210 = vpack.c.b16 %v2158, %v2154
    %v2211 = vpack.c.b16 %v2159, %v2155
    %v2212 = vpack.c.b16 %v2160, %v2156
    %v2213 = vpack.c.b16 %v2165, %v2161
    %v2214 = vpack.c.b16 %v2166, %v2162
    %v2215 = vpack.c.b16 %v2167, %v2163
    %v2216 = vpack.c.b16 %v2168, %v2164
    %v2217 = vpack.c.b16 %v2173, %v2169
    %v2218 = vpack.c.b16 %v2174, %v2170
    %v2219 = vpack.c.b16 %v2175, %v2171
    %v2220 = vpack.c.b16 %v2176, %v2172
    %v2221 = vpack.c.b16 %v2181, %v2177
    %v2222 = vpack.c.b16 %v2182, %v2178
    %v2223 = vpack.c.b16 %v2183, %v2179
    %v2224 = vpack.c.b16 %v2184, %v2180
    %v2225 = vpack.c.b16 %v2189, %v2185
    %v2226 = vpack.c.b16 %v2190, %v2186
    %v2227 = vpack.c.b16 %v2191, %v2187
    %v2228 = vpack.c.b16 %v2192, %v2188
    %v2229 = vpack.c.b16 %v2197, %v2193
    %v2230 = vpack.c.b16 %v2198, %v2194
    %v2231 = vpack.c.b16 %v2199, %v2195
    %v2232 = vpack.c.b16 %v2200, %v2196
    %2265 = vmatprep.subr.bf16.mxu0 %v2202
    %2266 = vmatpush1.bf16.msra.mxu0 %v2201
    %2267 = vmatprep.subr.bf16.mxu0 %v2206
    %2268 = vmatpush1.bf16.msra.mxu0 %v2205
    %2269 = vmatprep.subr.bf16.mxu0 %v2210
    %2270 = vmatpush1.bf16.msra.mxu0 %v2209
    %2271 = vmatprep.subr.bf16.mxu0 %v2214
    %2272 = vmatpush1.bf16.msra.mxu0 %v2213
    %2273 = vmatprep.subr.bf16.mxu0 %v2218
    %2274 = vmatpush1.bf16.msra.mxu0 %v2217
    %2275 = vmatprep.subr.bf16.mxu0 %v2222
    %2276 = vmatpush1.bf16.msra.mxu0 %v2221
    %2277 = vmatprep.subr.bf16.mxu0 %v2226
    %2278 = vmatpush1.bf16.msra.mxu0 %v2225
    %2279 = vmatprep.subr.bf16.mxu0 %v2230
    %2280 = vmatpush1.bf16.msra.mxu0 %v2229
    %2281 = vmatprep.subr.bf16.mxu0 0
    %2282 = vmatpush1.bf16.msra.mxu0 0
    %2283 = vmatprep.subr.bf16.mxu0 0
    %2284 = vmatpush1.bf16.msra.mxu0 0
    %2285 = vmatprep.subr.bf16.mxu0 0
    %2286 = vmatpush1.bf16.msra.mxu0 0
    %2287 = vmatprep.subr.bf16.mxu0 0
    %2288 = vmatpush1.bf16.msra.mxu0 0
    %2289 = vmatprep.subr.bf16.mxu0 0
    %2290 = vmatpush1.bf16.msra.mxu0 0
    %2291 = vmatprep.subr.bf16.mxu0 0
    %2292 = vmatpush1.bf16.msra.mxu0 0
    %2293 = vmatprep.subr.bf16.mxu0 0
    %2294 = vmatpush1.bf16.msra.mxu0 0
    %2295 = vmatprep.subr.bf16.mxu0 0
    %2296 = vmatpush1.bf16.msra.mxu0 0
    %2297 = vmatprep.mubr.bf16.mxu0 0
    %2298 = vmatmul.mubr.bf16.gmra.mrb[0].mxu0 %v2009
    %v2299 = vpop.f32.mrb[0].mxu0
    %v2300 = vadd.f32 %v2088, %v2299
    %v2301 = vpop.f32.mrb[0].mxu0
    %v2302 = vadd.f32 %v2092, %v2301
    %v2303 = vpop.f32.mrb[0].mxu0
    %v2304 = vadd.f32 %v2088, %v2303
    %v2305 = vpop.f32.mrb[0].mxu0
    %v2306 = vadd.f32 %v2092, %v2305
    %2307 = vmatprep.mubr.bf16.mxu0 0
    %2308 = vmatmul.mubr.bf16.gmra.mrb[0].mxu0 %v2010
    %v2309 = vpop.f32.mrb[0].mxu0
    %v2310 = vadd.f32 %v2088, %v2309
    %v2311 = vpop.f32.mrb[0].mxu0
    %v2312 = vadd.f32 %v2092, %v2311
    %v2313 = vpop.f32.mrb[0].mxu0
    %v2314 = vadd.f32 %v2088, %v2313
    %v2315 = vpop.f32.mrb[0].mxu0
    %v2316 = vadd.f32 %v2092, %v2315
    %2317 = vmatprep.mubr.bf16.mxu0 0
    %2318 = vmatmul.mubr.bf16.gmra.mrb[0].mxu0 %v2011
    %v2319 = vpop.f32.mrb[0].mxu0
    %v2320 = vadd.f32 %v2088, %v2319
    %v2321 = vpop.f32.mrb[0].mxu0
    %v2322 = vadd.f32 %v2092, %v2321
    %v2323 = vpop.f32.mrb[0].mxu0
    %v2324 = vadd.f32 %v2088, %v2323
    %v2325 = vpop.f32.mrb[0].mxu0
    %v2326 = vadd.f32 %v2092, %v2325
    %2327 = vmatprep.mubr.bf16.mxu0 0
    %2328 = vmatmul.mubr.bf16.gmra.mrb[0].mxu0 %v2012
    %v2329 = vpop.f32.mrb[0].mxu0
    %v2330 = vadd.f32 %v2088, %v2329
    %v2331 = vpop.f32.mrb[0].mxu0
    %v2332 = vadd.f32 %v2092, %v2331
    %v2333 = vpop.f32.mrb[0].mxu0
    %v2334 = vadd.f32 %v2088, %v2333
    %v2335 = vpop.f32.mrb[0].mxu0
    %v2336 = vadd.f32 %v2092, %v2335
    %2337 = vmatprep.mubr.bf16.mxu0 0
    %2338 = vmatmul.mubr.bf16.gmra.mrb[0].mxu0 %v2013
    %v2339 = vpop.f32.mrb[0].mxu0
    %v2340 = vadd.f32 %v2088, %v2339
    %v2341 = vpop.f32.mrb[0].mxu0
    %v2342 = vadd.f32 %v2092, %v2341
    %v2343 = vpop.f32.mrb[0].mxu0
    %v2344 = vadd.f32 %v2088, %v2343
    %v2345 = vpop.f32.mrb[0].mxu0
    %v2346 = vadd.f32 %v2092, %v2345
    %2347 = vmatprep.mubr.bf16.mxu0 0
    %2348 = vmatmul.mubr.bf16.gmra.mrb[0].mxu0 %v2014
    %v2349 = vpop.f32.mrb[0].mxu0
    %v2350 = vadd.f32 %v2088, %v2349
    %v2351 = vpop.f32.mrb[0].mxu0
    %v2352 = vadd.f32 %v2092, %v2351
    %v2353 = vpop.f32.mrb[0].mxu0
    %v2354 = vadd.f32 %v2088, %v2353
    %v2355 = vpop.f32.mrb[0].mxu0
    %v2356 = vadd.f32 %v2092, %v2355
    %2357 = vmatprep.mubr.bf16.mxu0 0
    %2358 = vmatmul.mubr.bf16.gmra.mrb[0].mxu0 %v2015
    %v2359 = vpop.f32.mrb[0].mxu0
    %v2360 = vadd.f32 %v2088, %v2359
    %v2361 = vpop.f32.mrb[0].mxu0
    %v2362 = vadd.f32 %v2092, %v2361
    %v2363 = vpop.f32.mrb[0].mxu0
    %v2364 = vadd.f32 %v2088, %v2363
    %v2365 = vpop.f32.mrb[0].mxu0
    %v2366 = vadd.f32 %v2092, %v2365
    %2367 = vmatprep.mubr.bf16.mxu0 0
    %2368 = vmatmul.mubr.bf16.gmra.mrb[0].mxu0 %v2016
    %v2369 = vpop.f32.mrb[0].mxu0
    %v2370 = vadd.f32 %v2088, %v2369
    %v2371 = vpop.f32.mrb[0].mxu0
    %v2372 = vadd.f32 %v2092, %v2371
    %v2373 = vpop.f32.mrb[0].mxu0
    %v2374 = vadd.f32 %v2088, %v2373
    %v2375 = vpop.f32.mrb[0].mxu0
    %v2376 = vadd.f32 %v2092, %v2375
    %2377 = vdwg.mxu0
    %2378 = vmatprep.subr.bf16.mxu0 %v2204
    %2379 = vmatpush1.bf16.msra.mxu0 %v2203
    %2380 = vmatprep.subr.bf16.mxu0 %v2208
    %2381 = vmatpush1.bf16.msra.mxu0 %v2207
    %2382 = vmatprep.subr.bf16.mxu0 %v2212
    %2383 = vmatpush1.bf16.msra.mxu0 %v2211
    %2384 = vmatprep.subr.bf16.mxu0 %v2216
    %2385 = vmatpush1.bf16.msra.mxu0 %v2215
    %2386 = vmatprep.subr.bf16.mxu0 %v2220
    %2387 = vmatpush1.bf16.msra.mxu0 %v2219
    %2388 = vmatprep.subr.bf16.mxu0 %v2224
    %2389 = vmatpush1.bf16.msra.mxu0 %v2223
    %2390 = vmatprep.subr.bf16.mxu0 %v2228
    %2391 = vmatpush1.bf16.msra.mxu0 %v2227
    %2392 = vmatprep.subr.bf16.mxu0 %v2232
    %2393 = vmatpush1.bf16.msra.mxu0 %v2231
    %2394 = vmatprep.subr.bf16.mxu0 0
    %2395 = vmatpush1.bf16.msra.mxu0 0
    %2396 = vmatprep.subr.bf16.mxu0 0
    %2397 = vmatpush1.bf16.msra.mxu0 0
    %2398 = vmatprep.subr.bf16.mxu0 0
    %2399 = vmatpush1.bf16.msra.mxu0 0
    %2400 = vmatprep.subr.bf16.mxu0 0
    %2401 = vmatpush1.bf16.msra.mxu0 0
    %2402 = vmatprep.subr.bf16.mxu0 0
    %2403 = vmatpush1.bf16.msra.mxu0 0
    %2404 = vmatprep.subr.bf16.mxu0 0
    %2405 = vmatpush1.bf16.msra.mxu0 0
    %2406 = vmatprep.subr.bf16.mxu0 0
    %2407 = vmatpush1.bf16.msra.mxu0 0
    %2408 = vmatprep.subr.bf16.mxu0 0
    %2409 = vmatpush1.bf16.msra.mxu0 0
    %2410 = vmatprep.mubr.bf16.mxu0 0
    %2411 = vmatmul.mubr.bf16.gmra.mrb[0].mxu0 %v2009
    %v2412 = vpop.f32.mrb[0].mxu0
    %v2413 = vadd.f32 %v2096, %v2412
    %v2414 = vpop.f32.mrb[0].mxu0
    %v2415 = vadd.f32 %v2100, %v2414
    %v2416 = vpop.f32.mrb[0].mxu0
    %v2417 = vadd.f32 %v2096, %v2416
    %v2418 = vpop.f32.mrb[0].mxu0
    %v2419 = vadd.f32 %v2100, %v2418
    %2420 = vmatprep.mubr.bf16.mxu0 0
    %2421 = vmatmul.mubr.bf16.gmra.mrb[0].mxu0 %v2010
    %v2422 = vpop.f32.mrb[0].mxu0
    %v2423 = vadd.f32 %v2096, %v2422
    %v2424 = vpop.f32.mrb[0].mxu0
    %v2425 = vadd.f32 %v2100, %v2424
    %v2426 = vpop.f32.mrb[0].mxu0
    %v2427 = vadd.f32 %v2096, %v2426
    %v2428 = vpop.f32.mrb[0].mxu0
    %v2429 = vadd.f32 %v2100, %v2428
    %2430 = vmatprep.mubr.bf16.mxu0 0
    %2431 = vmatmul.mubr.bf16.gmra.mrb[0].mxu0 %v2011
    %v2432 = vpop.f32.mrb[0].mxu0
    %v2433 = vadd.f32 %v2096, %v2432
    %v2434 = vpop.f32.mrb[0].mxu0
    %v2435 = vadd.f32 %v2100, %v2434
    %v2436 = vpop.f32.mrb[0].mxu0
    %v2437 = vadd.f32 %v2096, %v2436
    %v2438 = vpop.f32.mrb[0].mxu0
    %v2439 = vadd.f32 %v2100, %v2438
    %2440 = vmatprep.mubr.bf16.mxu0 0
    %2441 = vmatmul.mubr.bf16.gmra.mrb[0].mxu0 %v2012
    %v2442 = vpop.f32.mrb[0].mxu0
    %v2443 = vadd.f32 %v2096, %v2442
    %v2444 = vpop.f32.mrb[0].mxu0
    %v2445 = vadd.f32 %v2100, %v2444
    %v2446 = vpop.f32.mrb[0].mxu0
    %v2447 = vadd.f32 %v2096, %v2446
    %v2448 = vpop.f32.mrb[0].mxu0
    %v2449 = vadd.f32 %v2100, %v2448
    %2450 = vmatprep.mubr.bf16.mxu0 0
    %2451 = vmatmul.mubr.bf16.gmra.mrb[0].mxu0 %v2013
    %v2452 = vpop.f32.mrb[0].mxu0
    %v2453 = vadd.f32 %v2096, %v2452
    %v2454 = vpop.f32.mrb[0].mxu0
    %v2455 = vadd.f32 %v2100, %v2454
    %v2456 = vpop.f32.mrb[0].mxu0
    %v2457 = vadd.f32 %v2096, %v2456
    %v2458 = vpop.f32.mrb[0].mxu0
    %v2459 = vadd.f32 %v2100, %v2458
    %2460 = vmatprep.mubr.bf16.mxu0 0
    %2461 = vmatmul.mubr.bf16.gmra.mrb[0].mxu0 %v2014
    %v2462 = vpop.f32.mrb[0].mxu0
    %v2463 = vadd.f32 %v2096, %v2462
    %v2464 = vpop.f32.mrb[0].mxu0
    %v2465 = vadd.f32 %v2100, %v2464
    %v2466 = vpop.f32.mrb[0].mxu0
    %v2467 = vadd.f32 %v2096, %v2466
    %v2468 = vpop.f32.mrb[0].mxu0
    %v2469 = vadd.f32 %v2100, %v2468
    %2470 = vmatprep.mubr.bf16.mxu0 0
    %2471 = vmatmul.mubr.bf16.gmra.mrb[0].mxu0 %v2015
    %v2472 = vpop.f32.mrb[0].mxu0
    %v2473 = vadd.f32 %v2096, %v2472
    %v2474 = vpop.f32.mrb[0].mxu0
    %v2475 = vadd.f32 %v2100, %v2474
    %v2476 = vpop.f32.mrb[0].mxu0
    %v2477 = vadd.f32 %v2096, %v2476
    %v2478 = vpop.f32.mrb[0].mxu0
    %v2479 = vadd.f32 %v2100, %v2478
    %2480 = vmatprep.mubr.bf16.mxu0 0
    %2481 = vmatmul.mubr.bf16.gmra.mrb[0].mxu0 %v2016
    %v2482 = vpop.f32.mrb[0].mxu0
    %v2483 = vadd.f32 %v2096, %v2482
    %v2484 = vpop.f32.mrb[0].mxu0
    %v2485 = vadd.f32 %v2100, %v2484
    %v2486 = vpop.f32.mrb[0].mxu0
    %v2487 = vadd.f32 %v2096, %v2486
    %v2488 = vpop.f32.mrb[0].mxu0
    %v2489 = vadd.f32 %v2100, %v2488
    %2490 = vdwg.mxu0
    %v2491 = vpack.c.bf16 %v2304, %v2300
    %v2492 = vpack.c.bf16 %v2306, %v2302
    %v2493 = vpack.c.bf16 %v2417, %v2413
    %v2494 = vpack.c.bf16 %v2419, %v2415
    %v2495 = vpack.c.bf16 %v2314, %v2310
    %v2496 = vpack.c.bf16 %v2316, %v2312
    %v2497 = vpack.c.bf16 %v2427, %v2423
    %v2498 = vpack.c.bf16 %v2429, %v2425
    %v2499 = vpack.c.bf16 %v2324, %v2320
    %v2500 = vpack.c.bf16 %v2326, %v2322
    %v2501 = vpack.c.bf16 %v2437, %v2433
    %v2502 = vpack.c.bf16 %v2439, %v2435
    %v2503 = vpack.c.bf16 %v2334, %v2330
    %v2504 = vpack.c.bf16 %v2336, %v2332
    %v2505 = vpack.c.bf16 %v2447, %v2443
    %v2506 = vpack.c.bf16 %v2449, %v2445
    %v2507 = vpack.c.bf16 %v2344, %v2340
    %v2508 = vpack.c.bf16 %v2346, %v2342
    %v2509 = vpack.c.bf16 %v2457, %v2453
    %v2510 = vpack.c.bf16 %v2459, %v2455
    %v2511 = vpack.c.bf16 %v2354, %v2350
    %v2512 = vpack.c.bf16 %v2356, %v2352
    %v2513 = vpack.c.bf16 %v2467, %v2463
    %v2514 = vpack.c.bf16 %v2469, %v2465
    %v2515 = vpack.c.bf16 %v2364, %v2360
    %v2516 = vpack.c.bf16 %v2366, %v2362
    %v2517 = vpack.c.bf16 %v2477, %v2473
    %v2518 = vpack.c.bf16 %v2479, %v2475
    %v2519 = vpack.c.bf16 %v2374, %v2370
    %v2520 = vpack.c.bf16 %v2376, %v2372
    %v2521 = vpack.c.bf16 %v2487, %v2483
    %v2522 = vpack.c.bf16 %v2489, %v2485
    %2523 = vst [vmem:[#allocation4] sm:$0xff] %v2491
    %2524 = vst [vmem:[#allocation4 + $0x8] sm:$0xff] %v2492
    %2525 = vst [vmem:[#allocation4 + $0x10] sm:$0xff] %v2493
    %2526 = vst [vmem:[#allocation4 + $0x18] sm:$0xff] %v2494
    %2527 = vst [vmem:[#allocation4 + $0x20] sm:$0xff] %v2495
    %2528 = vst [vmem:[#allocation4 + $0x28] sm:$0xff] %v2496
    %2529 = vst [vmem:[#allocation4 + $0x30] sm:$0xff] %v2497
    %2530 = vst [vmem:[#allocation4 + $0x38] sm:$0xff] %v2498
    %2531 = vst [vmem:[#allocation4 + $0x40] sm:$0xff] %v2499
    %2532 = vst [vmem:[#allocation4 + $0x48] sm:$0xff] %v2500
    %2533 = vst [vmem:[#allocation4 + $0x50] sm:$0xff] %v2501
    %2534 = vst [vmem:[#allocation4 + $0x58] sm:$0xff] %v2502
    %2535 = vst [vmem:[#allocation4 + $0x60] sm:$0xff] %v2503
    %2536 = vst [vmem:[#allocation4 + $0x68] sm:$0xff] %v2504
    %2537 = vst [vmem:[#allocation4 + $0x70] sm:$0xff] %v2505
    %2538 = vst [vmem:[#allocation4 + $0x78] sm:$0xff] %v2506
    %2539 = vst [vmem:[#allocation4 + $0x80] sm:$0xff] %v2507
    %2540 = vst [vmem:[#allocation4 + $0x88] sm:$0xff] %v2508
    %2541 = vst [vmem:[#allocation4 + $0x90] sm:$0xff] %v2509
    %2542 = vst [vmem:[#allocation4 + $0x98] sm:$0xff] %v2510
    %2543 = vst [vmem:[#allocation4 + $0xa0] sm:$0xff] %v2511
    %2544 = vst [vmem:[#allocation4 + $0xa8] sm:$0xff] %v2512
    %2545 = vst [vmem:[#allocation4 + $0xb0] sm:$0xff] %v2513
    %2546 = vst [vmem:[#allocation4 + $0xb8] sm:$0xff] %v2514
    %2547 = vst [vmem:[#allocation4 + $0xc0] sm:$0xff] %v2515
    %2548 = vst [vmem:[#allocation4 + $0xc8] sm:$0xff] %v2516
    %2549 = vst [vmem:[#allocation4 + $0xd0] sm:$0xff] %v2517
    %2550 = vst [vmem:[#allocation4 + $0xd8] sm:$0xff] %v2518
    %2551 = vst [vmem:[#allocation4 + $0xe0] sm:$0xff] %v2519
    %2552 = vst [vmem:[#allocation4 + $0xe8] sm:$0xff] %v2520
    %2553 = vst [vmem:[#allocation4 + $0xf0] sm:$0xff] %v2521
    %2554 = vst [vmem:[#allocation4 + $0xf8] sm:$0xff] %v2522
    %s2555 = scalar_lea.vmem [#allocation2], 16
    %v2556 = vld [vmem:[%s2555] sm:$0xff]
    %v2557 = vld [vmem:[%s2555 + $0x8] sm:$0xff]
    %s2558 = scalar_lea.vmem [#allocation3], 16
    %v2559 = vld [vmem:[%s2558] sm:$0xff]
    %v2560 = vld [vmem:[%s2558 + $0x8] sm:$0xff]
    %v2561 = vpack.c.bf16 %v2557, %v2556
    %v2562 = vld [vmem:[#allocation4] sm:$0xff]
    %v2563 = vld [vmem:[#allocation4 + $0x8] sm:$0xff]
    %v2564 = vld [vmem:[#allocation4 + $0x10] sm:$0xff]
    %v2565 = vld [vmem:[#allocation4 + $0x18] sm:$0xff]
    %v2566 = vunpack.c.l.bf16 %v2562
    %v2567 = vunpack.c.l.bf16 %v2563
    %v2568 = vunpack.c.l.bf16 %v2564
    %v2569 = vunpack.c.l.bf16 %v2565
    %v2570 = vunpack.c.h.bf16 %v2562
    %v2571 = vunpack.c.h.bf16 %v2563
    %v2572 = vunpack.c.h.bf16 %v2564
    %v2573 = vunpack.c.h.bf16 %v2565
    %v2606 = vunpack.c.l.b16 %v2050
    %v2607 = vunpack.c.h.b16 %v2050
    %v2608 = vunpack.c.l.b16 %v2051
    %v2609 = vunpack.c.h.b16 %v2051
    %v2610 = vunpack.c.l.b16 %v2052
    %v2611 = vunpack.c.h.b16 %v2052
    %v2612 = vunpack.c.l.b16 %v2053
    %v2613 = vunpack.c.h.b16 %v2053
    %v2614 = vunpack.c.l.b16 %v2054
    %v2615 = vunpack.c.h.b16 %v2054
    %v2616 = vunpack.c.l.b16 %v2055
    %v2617 = vunpack.c.h.b16 %v2055
    %v2618 = vunpack.c.l.b16 %v2056
    %v2619 = vunpack.c.h.b16 %v2056
    %v2620 = vunpack.c.l.b16 %v2057
    %v2621 = vunpack.c.h.b16 %v2057
    %v2622 = vunpack.c.l.b16 %v2058
    %v2623 = vunpack.c.h.b16 %v2058
    %v2624 = vunpack.c.l.b16 %v2059
    %v2625 = vunpack.c.h.b16 %v2059
    %v2626 = vunpack.c.l.b16 %v2060
    %v2627 = vunpack.c.h.b16 %v2060
    %v2628 = vunpack.c.l.b16 %v2061
    %v2629 = vunpack.c.h.b16 %v2061
    %v2630 = vunpack.c.l.b16 %v2062
    %v2631 = vunpack.c.h.b16 %v2062
    %v2632 = vunpack.c.l.b16 %v2063
    %v2633 = vunpack.c.h.b16 %v2063
    %v2634 = vunpack.c.l.b16 %v2064
    %v2635 = vunpack.c.h.b16 %v2064
    %v2636 = vunpack.c.l.b16 %v2065
    %v2637 = vunpack.c.h.b16 %v2065
    %v2638 = vunpack.c.l.b16 %v2066
    %v2639 = vunpack.c.h.b16 %v2066
    %v2640 = vunpack.c.l.b16 %v2067
    %v2641 = vunpack.c.h.b16 %v2067
    %v2642 = vunpack.c.l.b16 %v2068
    %v2643 = vunpack.c.h.b16 %v2068
    %v2644 = vunpack.c.l.b16 %v2069
    %v2645 = vunpack.c.h.b16 %v2069
    %v2646 = vunpack.c.l.b16 %v2070
    %v2647 = vunpack.c.h.b16 %v2070
    %v2648 = vunpack.c.l.b16 %v2071
    %v2649 = vunpack.c.h.b16 %v2071
    %v2650 = vunpack.c.l.b16 %v2072
    %v2651 = vunpack.c.h.b16 %v2072
    %v2652 = vunpack.c.l.b16 %v2073
    %v2653 = vunpack.c.h.b16 %v2073
    %v2654 = vunpack.c.l.b16 %v2074
    %v2655 = vunpack.c.h.b16 %v2074
    %v2656 = vunpack.c.l.b16 %v2075
    %v2657 = vunpack.c.h.b16 %v2075
    %v2658 = vunpack.c.l.b16 %v2076
    %v2659 = vunpack.c.h.b16 %v2076
    %v2660 = vunpack.c.l.b16 %v2077
    %v2661 = vunpack.c.h.b16 %v2077
    %v2662 = vunpack.c.l.b16 %v2078
    %v2663 = vunpack.c.h.b16 %v2078
    %v2664 = vunpack.c.l.b16 %v2079
    %v2665 = vunpack.c.h.b16 %v2079
    %v2666 = vunpack.c.l.b16 %v2080
    %v2667 = vunpack.c.h.b16 %v2080
    %v2668 = vunpack.c.l.b16 %v2081
    %v2669 = vunpack.c.h.b16 %v2081
    %v2670 = vpack.c.b16 %v2610, %v2606
    %v2671 = vpack.c.b16 %v2611, %v2607
    %v2672 = vpack.c.b16 %v2612, %v2608
    %v2673 = vpack.c.b16 %v2613, %v2609
    %v2674 = vpack.c.b16 %v2618, %v2614
    %v2675 = vpack.c.b16 %v2619, %v2615
    %v2676 = vpack.c.b16 %v2620, %v2616
    %v2677 = vpack.c.b16 %v2621, %v2617
    %v2678 = vpack.c.b16 %v2626, %v2622
    %v2679 = vpack.c.b16 %v2627, %v2623
    %v2680 = vpack.c.b16 %v2628, %v2624
    %v2681 = vpack.c.b16 %v2629, %v2625
    %v2682 = vpack.c.b16 %v2634, %v2630
    %v2683 = vpack.c.b16 %v2635, %v2631
    %v2684 = vpack.c.b16 %v2636, %v2632
    %v2685 = vpack.c.b16 %v2637, %v2633
    %v2686 = vpack.c.b16 %v2642, %v2638
    %v2687 = vpack.c.b16 %v2643, %v2639
    %v2688 = vpack.c.b16 %v2644, %v2640
    %v2689 = vpack.c.b16 %v2645, %v2641
    %v2690 = vpack.c.b16 %v2650, %v2646
    %v2691 = vpack.c.b16 %v2651, %v2647
    %v2692 = vpack.c.b16 %v2652, %v2648
    %v2693 = vpack.c.b16 %v2653, %v2649
    %v2694 = vpack.c.b16 %v2658, %v2654
    %v2695 = vpack.c.b16 %v2659, %v2655
    %v2696 = vpack.c.b16 %v2660, %v2656
    %v2697 = vpack.c.b16 %v2661, %v2657
    %v2698 = vpack.c.b16 %v2666, %v2662
    %v2699 = vpack.c.b16 %v2667, %v2663
    %v2700 = vpack.c.b16 %v2668, %v2664
    %v2701 = vpack.c.b16 %v2669, %v2665
    %2734 = vmatprep.subr.bf16.mxu0 %v2671
    %2735 = vmatpush1.bf16.msra.mxu0 %v2670
    %2736 = vmatprep.subr.bf16.mxu0 %v2675
    %2737 = vmatpush1.bf16.msra.mxu0 %v2674
    %2738 = vmatprep.subr.bf16.mxu0 %v2679
    %2739 = vmatpush1.bf16.msra.mxu0 %v2678
    %2740 = vmatprep.subr.bf16.mxu0 %v2683
    %2741 = vmatpush1.bf16.msra.mxu0 %v2682
    %2742 = vmatprep.subr.bf16.mxu0 %v2687
    %2743 = vmatpush1.bf16.msra.mxu0 %v2686
    %2744 = vmatprep.subr.bf16.mxu0 %v2691
    %2745 = vmatpush1.bf16.msra.mxu0 %v2690
    %2746 = vmatprep.subr.bf16.mxu0 %v2695
    %2747 = vmatpush1.bf16.msra.mxu0 %v2694
    %2748 = vmatprep.subr.bf16.mxu0 %v2699
    %2749 = vmatpush1.bf16.msra.mxu0 %v2698
    %2750 = vmatprep.subr.bf16.mxu0 0
    %2751 = vmatpush1.bf16.msra.mxu0 0
    %2752 = vmatprep.subr.bf16.mxu0 0
    %2753 = vmatpush1.bf16.msra.mxu0 0
    %2754 = vmatprep.subr.bf16.mxu0 0
    %2755 = vmatpush1.bf16.msra.mxu0 0
    %2756 = vmatprep.subr.bf16.mxu0 0
    %2757 = vmatpush1.bf16.msra.mxu0 0
    %2758 = vmatprep.subr.bf16.mxu0 0
    %2759 = vmatpush1.bf16.msra.mxu0 0
    %2760 = vmatprep.subr.bf16.mxu0 0
    %2761 = vmatpush1.bf16.msra.mxu0 0
    %2762 = vmatprep.subr.bf16.mxu0 0
    %2763 = vmatpush1.bf16.msra.mxu0 0
    %2764 = vmatprep.subr.bf16.mxu0 0
    %2765 = vmatpush1.bf16.msra.mxu0 0
    %2766 = vmatprep.mubr.bf16.mxu0 0
    %2767 = vmatmul.mubr.bf16.gmra.mrb[0].mxu0 %v2561
    %v2768 = vpop.f32.mrb[0].mxu0
    %v2769 = vadd.f32 0.0, %v2768
    %v2770 = vpop.f32.mrb[0].mxu0
    %v2771 = vadd.f32 0.0, %v2770
    %v2772 = vpop.f32.mrb[0].mxu0
    %v2773 = vadd.f32 0.0, %v2772
    %v2774 = vpop.f32.mrb[0].mxu0
    %v2775 = vadd.f32 0.0, %v2774
    %2776 = vdwg.mxu0
    %2777 = vmatprep.subr.bf16.mxu0 %v2673
    %2778 = vmatpush1.bf16.msra.mxu0 %v2672
    %2779 = vmatprep.subr.bf16.mxu0 %v2677
    %2780 = vmatpush1.bf16.msra.mxu0 %v2676
    %2781 = vmatprep.subr.bf16.mxu0 %v2681
    %2782 = vmatpush1.bf16.msra.mxu0 %v2680
    %2783 = vmatprep.subr.bf16.mxu0 %v2685
    %2784 = vmatpush1.bf16.msra.mxu0 %v2684
    %2785 = vmatprep.subr.bf16.mxu0 %v2689
    %2786 = vmatpush1.bf16.msra.mxu0 %v2688
    %2787 = vmatprep.subr.bf16.mxu0 %v2693
    %2788 = vmatpush1.bf16.msra.mxu0 %v2692
    %2789 = vmatprep.subr.bf16.mxu0 %v2697
    %2790 = vmatpush1.bf16.msra.mxu0 %v2696
    %2791 = vmatprep.subr.bf16.mxu0 %v2701
    %2792 = vmatpush1.bf16.msra.mxu0 %v2700
    %2793 = vmatprep.subr.bf16.mxu0 0
    %2794 = vmatpush1.bf16.msra.mxu0 0
    %2795 = vmatprep.subr.bf16.mxu0 0
    %2796 = vmatpush1.bf16.msra.mxu0 0
    %2797 = vmatprep.subr.bf16.mxu0 0
    %2798 = vmatpush1.bf16.msra.mxu0 0
    %2799 = vmatprep.subr.bf16.mxu0 0
    %2800 = vmatpush1.bf16.msra.mxu0 0
    %2801 = vmatprep.subr.bf16.mxu0 0
    %2802 = vmatpush1.bf16.msra.mxu0 0
    %2803 = vmatprep.subr.bf16.mxu0 0
    %2804 = vmatpush1.bf16.msra.mxu0 0
    %2805 = vmatprep.subr.bf16.mxu0 0
    %2806 = vmatpush1.bf16.msra.mxu0 0
    %2807 = vmatprep.subr.bf16.mxu0 0
    %2808 = vmatpush1.bf16.msra.mxu0 0
    %2809 = vmatprep.mubr.bf16.mxu0 0
    %2810 = vmatmul.mubr.bf16.gmra.mrb[0].mxu0 %v2561
    %v2811 = vpop.f32.mrb[0].mxu0
    %v2812 = vadd.f32 0.0, %v2811
    %v2813 = vpop.f32.mrb[0].mxu0
    %v2814 = vadd.f32 0.0, %v2813
    %v2815 = vpop.f32.mrb[0].mxu0
    %v2816 = vadd.f32 0.0, %v2815
    %v2817 = vpop.f32.mrb[0].mxu0
    %v2818 = vadd.f32 0.0, %v2817
    %2819 = vdwg.mxu0
    %v2820 = vadd.f32 %v2566, %v2769
    %v2821 = vadd.f32 %v2567, %v2771
    %v2822 = vadd.f32 %v2568, %v2812
    %v2823 = vadd.f32 %v2569, %v2814
    %v2824 = vadd.f32 %v2570, %v2773
    %v2825 = vadd.f32 %v2571, %v2775
    %v2826 = vadd.f32 %v2572, %v2816
    %v2827 = vadd.f32 %v2573, %v2818
    %v2828 = vmul.f32 %v2820, 0.5
    %v2829 = vmul.f32 %v2824, 0.5
    %v2830 = vtanh.pop %v2828
    %v2831 = vtanh.pop %v2829
    %v2832 = vadd.f32 %v2830, 1.0
    %v2833 = vadd.f32 %v2831, 1.0
    %v2834 = vmul.f32 %v2832, 0.5
    %v2835 = vmul.f32 %v2833, 0.5
    %v2836 = vmul.f32 %v2821, 0.5
    %v2837 = vmul.f32 %v2825, 0.5
    %v2838 = vtanh.pop %v2836
    %v2839 = vtanh.pop %v2837
    %v2840 = vadd.f32 %v2838, 1.0
    %v2841 = vadd.f32 %v2839, 1.0
    %v2842 = vmul.f32 %v2840, 0.5
    %v2843 = vmul.f32 %v2841, 0.5
    %v2844 = vtanh.pop %v2822
    %v2845 = vtanh.pop %v2826
    %v2846 = vmul.f32 %v2823, 0.5
    %v2847 = vmul.f32 %v2827, 0.5
    %v2848 = vtanh.pop %v2846
    %v2849 = vtanh.pop %v2847
    %v2850 = vadd.f32 %v2848, 1.0
    %v2851 = vadd.f32 %v2849, 1.0
    %v2852 = vmul.f32 %v2850, 0.5
    %v2853 = vmul.f32 %v2851, 0.5
    %v2854 = vmul.f32 %v2842, %v2559
    %v2855 = vmul.f32 %v2843, %v2560
    %v2856 = vmul.f32 %v2834, %v2844
    %v2857 = vmul.f32 %v2835, %v2845
    %v2858 = vadd.f32 %v2854, %v2856
    %v2859 = vadd.f32 %v2855, %v2857
    %v2860 = vtanh.pop %v2858
    %v2861 = vtanh.pop %v2859
    %v2862 = vmul.f32 %v2852, %v2860
    %v2863 = vmul.f32 %v2853, %v2861
    %v2864 = vpack.c.bf16 %v2863, %v2862
    %v2865 = vld [vmem:[%s983] sm:$0xff]
    %v2866 = vld [vmem:[%s983 + $0x8] sm:$0xff]
    %v2867 = vld [vmem:[%s983 + $0x10] sm:$0xff]
    %v2868 = vld [vmem:[%s983 + $0x18] sm:$0xff]
    %v2869 = vunpack.c.l.bf16 %v2865
    %v2870 = vunpack.c.l.bf16 %v2866
    %v2871 = vunpack.c.l.bf16 %v2867
    %v2872 = vunpack.c.l.bf16 %v2868
    %v2873 = vunpack.c.h.bf16 %v2865
    %v2874 = vunpack.c.h.bf16 %v2866
    %v2875 = vunpack.c.h.bf16 %v2867
    %v2876 = vunpack.c.h.bf16 %v2868
    %2877 = vmatprep.subr.bf16.mxu0 %v2671
    %2878 = vmatpush1.bf16.msra.mxu0 %v2670
    %2879 = vmatprep.subr.bf16.mxu0 %v2675
    %2880 = vmatpush1.bf16.msra.mxu0 %v2674
    %2881 = vmatprep.subr.bf16.mxu0 %v2679
    %2882 = vmatpush1.bf16.msra.mxu0 %v2678
    %2883 = vmatprep.subr.bf16.mxu0 %v2683
    %2884 = vmatpush1.bf16.msra.mxu0 %v2682
    %2885 = vmatprep.subr.bf16.mxu0 %v2687
    %2886 = vmatpush1.bf16.msra.mxu0 %v2686
    %2887 = vmatprep.subr.bf16.mxu0 %v2691
    %2888 = vmatpush1.bf16.msra.mxu0 %v2690
    %2889 = vmatprep.subr.bf16.mxu0 %v2695
    %2890 = vmatpush1.bf16.msra.mxu0 %v2694
    %2891 = vmatprep.subr.bf16.mxu0 %v2699
    %2892 = vmatpush1.bf16.msra.mxu0 %v2698
    %2893 = vmatprep.subr.bf16.mxu0 0
    %2894 = vmatpush1.bf16.msra.mxu0 0
    %2895 = vmatprep.subr.bf16.mxu0 0
    %2896 = vmatpush1.bf16.msra.mxu0 0
    %2897 = vmatprep.subr.bf16.mxu0 0
    %2898 = vmatpush1.bf16.msra.mxu0 0
    %2899 = vmatprep.subr.bf16.mxu0 0
    %2900 = vmatpush1.bf16.msra.mxu0 0
    %2901 = vmatprep.subr.bf16.mxu0 0
    %2902 = vmatpush1.bf16.msra.mxu0 0
    %2903 = vmatprep.subr.bf16.mxu0 0
    %2904 = vmatpush1.bf16.msra.mxu0 0
    %2905 = vmatprep.subr.bf16.mxu0 0
    %2906 = vmatpush1.bf16.msra.mxu0 0
    %2907 = vmatprep.subr.bf16.mxu0 0
    %2908 = vmatpush1.bf16.msra.mxu0 0
    %2909 = vmatprep.mubr.bf16.mxu0 0
    %2910 = vmatmul.mubr.bf16.gmra.mrb[0].mxu0 %v2864
    %v2911 = vpop.f32.mrb[0].mxu0
    %v2912 = vadd.f32 0.0, %v2911
    %v2913 = vpop.f32.mrb[0].mxu0
    %v2914 = vadd.f32 0.0, %v2913
    %v2915 = vpop.f32.mrb[0].mxu0
    %v2916 = vadd.f32 0.0, %v2915
    %v2917 = vpop.f32.mrb[0].mxu0
    %v2918 = vadd.f32 0.0, %v2917
    %2919 = vdwg.mxu0
    %2920 = vmatprep.subr.bf16.mxu0 %v2673
    %2921 = vmatpush1.bf16.msra.mxu0 %v2672
    %2922 = vmatprep.subr.bf16.mxu0 %v2677
    %2923 = vmatpush1.bf16.msra.mxu0 %v2676
    %2924 = vmatprep.subr.bf16.mxu0 %v2681
    %2925 = vmatpush1.bf16.msra.mxu0 %v2680
    %2926 = vmatprep.subr.bf16.mxu0 %v2685
    %2927 = vmatpush1.bf16.msra.mxu0 %v2684
    %2928 = vmatprep.subr.bf16.mxu0 %v2689
    %2929 = vmatpush1.bf16.msra.mxu0 %v2688
    %2930 = vmatprep.subr.bf16.mxu0 %v2693
    %2931 = vmatpush1.bf16.msra.mxu0 %v2692
    %2932 = vmatprep.subr.bf16.mxu0 %v2697
    %2933 = vmatpush1.bf16.msra.mxu0 %v2696
    %2934 = vmatprep.subr.bf16.mxu0 %v2701
    %2935 = vmatpush1.bf16.msra.mxu0 %v2700
    %2936 = vmatprep.subr.bf16.mxu0 0
    %2937 = vmatpush1.bf16.msra.mxu0 0
    %2938 = vmatprep.subr.bf16.mxu0 0
    %2939 = vmatpush1.bf16.msra.mxu0 0
    %2940 = vmatprep.subr.bf16.mxu0 0
    %2941 = vmatpush1.bf16.msra.mxu0 0
    %2942 = vmatprep.subr.bf16.mxu0 0
    %2943 = vmatpush1.bf16.msra.mxu0 0
    %2944 = vmatprep.subr.bf16.mxu0 0
    %2945 = vmatpush1.bf16.msra.mxu0 0
    %2946 = vmatprep.subr.bf16.mxu0 0
    %2947 = vmatpush1.bf16.msra.mxu0 0
    %2948 = vmatprep.subr.bf16.mxu0 0
    %2949 = vmatpush1.bf16.msra.mxu0 0
    %2950 = vmatprep.subr.bf16.mxu0 0
    %2951 = vmatpush1.bf16.msra.mxu0 0
    %2952 = vmatprep.mubr.bf16.mxu0 0
    %2953 = vmatmul.mubr.bf16.gmra.mrb[0].mxu0 %v2864
    %v2954 = vpop.f32.mrb[0].mxu0
    %v2955 = vadd.f32 0.0, %v2954
    %v2956 = vpop.f32.mrb[0].mxu0
    %v2957 = vadd.f32 0.0, %v2956
    %v2958 = vpop.f32.mrb[0].mxu0
    %v2959 = vadd.f32 0.0, %v2958
    %v2960 = vpop.f32.mrb[0].mxu0
    %v2961 = vadd.f32 0.0, %v2960
    %2962 = vdwg.mxu0
    %v2963 = vadd.f32 %v2869, %v2912
    %v2964 = vadd.f32 %v2870, %v2914
    %v2965 = vadd.f32 %v2871, %v2955
    %v2966 = vadd.f32 %v2872, %v2957
    %v2967 = vadd.f32 %v2873, %v2916
    %v2968 = vadd.f32 %v2874, %v2918
    %v2969 = vadd.f32 %v2875, %v2959
    %v2970 = vadd.f32 %v2876, %v2961
    %v2971 = vmul.f32 %v2963, 0.5
    %v2972 = vmul.f32 %v2967, 0.5
    %v2973 = vtanh.pop %v2971
    %v2974 = vtanh.pop %v2972
    %v2975 = vadd.f32 %v2973, 1.0
    %v2976 = vadd.f32 %v2974, 1.0
    %v2977 = vmul.f32 %v2975, 0.5
    %v2978 = vmul.f32 %v2976, 0.5
    %v2979 = vmul.f32 %v2964, 0.5
    %v2980 = vmul.f32 %v2968, 0.5
    %v2981 = vtanh.pop %v2979
    %v2982 = vtanh.pop %v2980
    %v2983 = vadd.f32 %v2981, 1.0
    %v2984 = vadd.f32 %v2982, 1.0
    %v2985 = vmul.f32 %v2983, 0.5
    %v2986 = vmul.f32 %v2984, 0.5
    %v2987 = vtanh.pop %v2965
    %v2988 = vtanh.pop %v2969
    %v2989 = vmul.f32 %v2966, 0.5
    %v2990 = vmul.f32 %v2970, 0.5
    %v2991 = vtanh.pop %v2989
    %v2992 = vtanh.pop %v2990
    %v2993 = vadd.f32 %v2991, 1.0
    %v2994 = vadd.f32 %v2992, 1.0
    %v2995 = vmul.f32 %v2993, 0.5
    %v2996 = vmul.f32 %v2994, 0.5
    %v2997 = vmul.f32 %v2985, %v2858
    %v2998 = vmul.f32 %v2986, %v2859
    %v2999 = vmul.f32 %v2977, %v2987
    %v3000 = vmul.f32 %v2978, %v2988
    %v3001 = vadd.f32 %v2997, %v2999
    %v3002 = vadd.f32 %v2998, %v3000
    %v3003 = vtanh.pop %v3001
    %v3004 = vtanh.pop %v3002
    %v3005 = vmul.f32 %v2995, %v3003
    %v3006 = vmul.f32 %v2996, %v3004
    %v3007 = vpack.c.bf16 %v3006, %v3005
    %v3008 = vld [vmem:[%s1129] sm:$0xff]
    %v3009 = vld [vmem:[%s1129 + $0x8] sm:$0xff]
    %v3010 = vld [vmem:[%s1129 + $0x10] sm:$0xff]
    %v3011 = vld [vmem:[%s1129 + $0x18] sm:$0xff]
    %v3012 = vunpack.c.l.bf16 %v3008
    %v3013 = vunpack.c.l.bf16 %v3009
    %v3014 = vunpack.c.l.bf16 %v3010
    %v3015 = vunpack.c.l.bf16 %v3011
    %v3016 = vunpack.c.h.bf16 %v3008
    %v3017 = vunpack.c.h.bf16 %v3009
    %v3018 = vunpack.c.h.bf16 %v3010
    %v3019 = vunpack.c.h.bf16 %v3011
    %3020 = vmatprep.subr.bf16.mxu0 %v2671
    %3021 = vmatpush1.bf16.msra.mxu0 %v2670
    %3022 = vmatprep.subr.bf16.mxu0 %v2675
    %3023 = vmatpush1.bf16.msra.mxu0 %v2674
    %3024 = vmatprep.subr.bf16.mxu0 %v2679
    %3025 = vmatpush1.bf16.msra.mxu0 %v2678
    %3026 = vmatprep.subr.bf16.mxu0 %v2683
    %3027 = vmatpush1.bf16.msra.mxu0 %v2682
    %3028 = vmatprep.subr.bf16.mxu0 %v2687
    %3029 = vmatpush1.bf16.msra.mxu0 %v2686
    %3030 = vmatprep.subr.bf16.mxu0 %v2691
    %3031 = vmatpush1.bf16.msra.mxu0 %v2690
    %3032 = vmatprep.subr.bf16.mxu0 %v2695
    %3033 = vmatpush1.bf16.msra.mxu0 %v2694
    %3034 = vmatprep.subr.bf16.mxu0 %v2699
    %3035 = vmatpush1.bf16.msra.mxu0 %v2698
    %3036 = vmatprep.subr.bf16.mxu0 0
    %3037 = vmatpush1.bf16.msra.mxu0 0
    %3038 = vmatprep.subr.bf16.mxu0 0
    %3039 = vmatpush1.bf16.msra.mxu0 0
    %3040 = vmatprep.subr.bf16.mxu0 0
    %3041 = vmatpush1.bf16.msra.mxu0 0
    %3042 = vmatprep.subr.bf16.mxu0 0
    %3043 = vmatpush1.bf16.msra.mxu0 0
    %3044 = vmatprep.subr.bf16.mxu0 0
    %3045 = vmatpush1.bf16.msra.mxu0 0
    %3046 = vmatprep.subr.bf16.mxu0 0
    %3047 = vmatpush1.bf16.msra.mxu0 0
    %3048 = vmatprep.subr.bf16.mxu0 0
    %3049 = vmatpush1.bf16.msra.mxu0 0
    %3050 = vmatprep.subr.bf16.mxu0 0
    %3051 = vmatpush1.bf16.msra.mxu0 0
    %3052 = vmatprep.mubr.bf16.mxu0 0
    %3053 = vmatmul.mubr.bf16.gmra.mrb[0].mxu0 %v3007
    %v3054 = vpop.f32.mrb[0].mxu0
    %v3055 = vadd.f32 0.0, %v3054
    %v3056 = vpop.f32.mrb[0].mxu0
    %v3057 = vadd.f32 0.0, %v3056
    %v3058 = vpop.f32.mrb[0].mxu0
    %v3059 = vadd.f32 0.0, %v3058
    %v3060 = vpop.f32.mrb[0].mxu0
    %v3061 = vadd.f32 0.0, %v3060
    %3062 = vdwg.mxu0
    %3063 = vmatprep.subr.bf16.mxu0 %v2673
    %3064 = vmatpush1.bf16.msra.mxu0 %v2672
    %3065 = vmatprep.subr.bf16.mxu0 %v2677
    %3066 = vmatpush1.bf16.msra.mxu0 %v2676
    %3067 = vmatprep.subr.bf16.mxu0 %v2681
    %3068 = vmatpush1.bf16.msra.mxu0 %v2680
    %3069 = vmatprep.subr.bf16.mxu0 %v2685
    %3070 = vmatpush1.bf16.msra.mxu0 %v2684
    %3071 = vmatprep.subr.bf16.mxu0 %v2689
    %3072 = vmatpush1.bf16.msra.mxu0 %v2688
    %3073 = vmatprep.subr.bf16.mxu0 %v2693
    %3074 = vmatpush1.bf16.msra.mxu0 %v2692
    %3075 = vmatprep.subr.bf16.mxu0 %v2697
    %3076 = vmatpush1.bf16.msra.mxu0 %v2696
    %3077 = vmatprep.subr.bf16.mxu0 %v2701
    %3078 = vmatpush1.bf16.msra.mxu0 %v2700
    %3079 = vmatprep.subr.bf16.mxu0 0
    %3080 = vmatpush1.bf16.msra.mxu0 0
    %3081 = vmatprep.subr.bf16.mxu0 0
    %3082 = vmatpush1.bf16.msra.mxu0 0
    %3083 = vmatprep.subr.bf16.mxu0 0
    %3084 = vmatpush1.bf16.msra.mxu0 0
    %3085 = vmatprep.subr.bf16.mxu0 0
    %3086 = vmatpush1.bf16.msra.mxu0 0
    %3087 = vmatprep.subr.bf16.mxu0 0
    %3088 = vmatpush1.bf16.msra.mxu0 0
    %3089 = vmatprep.subr.bf16.mxu0 0
    %3090 = vmatpush1.bf16.msra.mxu0 0
    %3091 = vmatprep.subr.bf16.mxu0 0
    %3092 = vmatpush1.bf16.msra.mxu0 0
    %3093 = vmatprep.subr.bf16.mxu0 0
    %3094 = vmatpush1.bf16.msra.mxu0 0
    %3095 = vmatprep.mubr.bf16.mxu0 0
    %3096 = vmatmul.mubr.bf16.gmra.mrb[0].mxu0 %v3007
    %v3097 = vpop.f32.mrb[0].mxu0
    %v3098 = vadd.f32 0.0, %v3097
    %v3099 = vpop.f32.mrb[0].mxu0
    %v3100 = vadd.f32 0.0, %v3099
    %v3101 = vpop.f32.mrb[0].mxu0
    %v3102 = vadd.f32 0.0, %v3101
    %v3103 = vpop.f32.mrb[0].mxu0
    %v3104 = vadd.f32 0.0, %v3103
    %3105 = vdwg.mxu0
    %v3106 = vadd.f32 %v3012, %v3055
    %v3107 = vadd.f32 %v3013, %v3057
    %v3108 = vadd.f32 %v3014, %v3098
    %v3109 = vadd.f32 %v3015, %v3100
    %v3110 = vadd.f32 %v3016, %v3059
    %v3111 = vadd.f32 %v3017, %v3061
    %v3112 = vadd.f32 %v3018, %v3102
    %v3113 = vadd.f32 %v3019, %v3104
    %v3114 = vmul.f32 %v3106, 0.5
    %v3115 = vmul.f32 %v3110, 0.5
    %v3116 = vtanh.pop %v3114
    %v3117 = vtanh.pop %v3115
    %v3118 = vadd.f32 %v3116, 1.0
    %v3119 = vadd.f32 %v3117, 1.0
    %v3120 = vmul.f32 %v3118, 0.5
    %v3121 = vmul.f32 %v3119, 0.5
    %v3122 = vmul.f32 %v3107, 0.5
    %v3123 = vmul.f32 %v3111, 0.5
    %v3124 = vtanh.pop %v3122
    %v3125 = vtanh.pop %v3123
    %v3126 = vadd.f32 %v3124, 1.0
    %v3127 = vadd.f32 %v3125, 1.0
    %v3128 = vmul.f32 %v3126, 0.5
    %v3129 = vmul.f32 %v3127, 0.5
    %v3130 = vtanh.pop %v3108
    %v3131 = vtanh.pop %v3112
    %v3132 = vmul.f32 %v3109, 0.5
    %v3133 = vmul.f32 %v3113, 0.5
    %v3134 = vtanh.pop %v3132
    %v3135 = vtanh.pop %v3133
    %v3136 = vadd.f32 %v3134, 1.0
    %v3137 = vadd.f32 %v3135, 1.0
    %v3138 = vmul.f32 %v3136, 0.5
    %v3139 = vmul.f32 %v3137, 0.5
    %v3140 = vmul.f32 %v3128, %v3001
    %v3141 = vmul.f32 %v3129, %v3002
    %v3142 = vmul.f32 %v3120, %v3130
    %v3143 = vmul.f32 %v3121, %v3131
    %v3144 = vadd.f32 %v3140, %v3142
    %v3145 = vadd.f32 %v3141, %v3143
    %v3146 = vtanh.pop %v3144
    %v3147 = vtanh.pop %v3145
    %v3148 = vmul.f32 %v3138, %v3146
    %v3149 = vmul.f32 %v3139, %v3147
    %v3150 = vpack.c.bf16 %v3149, %v3148
    %v3151 = vld [vmem:[%s1275] sm:$0xff]
    %v3152 = vld [vmem:[%s1275 + $0x8] sm:$0xff]
    %v3153 = vld [vmem:[%s1275 + $0x10] sm:$0xff]
    %v3154 = vld [vmem:[%s1275 + $0x18] sm:$0xff]
    %v3155 = vunpack.c.l.bf16 %v3151
    %v3156 = vunpack.c.l.bf16 %v3152
    %v3157 = vunpack.c.l.bf16 %v3153
    %v3158 = vunpack.c.l.bf16 %v3154
    %v3159 = vunpack.c.h.bf16 %v3151
    %v3160 = vunpack.c.h.bf16 %v3152
    %v3161 = vunpack.c.h.bf16 %v3153
    %v3162 = vunpack.c.h.bf16 %v3154
    %3163 = vmatprep.subr.bf16.mxu0 %v2671
    %3164 = vmatpush1.bf16.msra.mxu0 %v2670
    %3165 = vmatprep.subr.bf16.mxu0 %v2675
    %3166 = vmatpush1.bf16.msra.mxu0 %v2674
    %3167 = vmatprep.subr.bf16.mxu0 %v2679
    %3168 = vmatpush1.bf16.msra.mxu0 %v2678
    %3169 = vmatprep.subr.bf16.mxu0 %v2683
    %3170 = vmatpush1.bf16.msra.mxu0 %v2682
    %3171 = vmatprep.subr.bf16.mxu0 %v2687
    %3172 = vmatpush1.bf16.msra.mxu0 %v2686
    %3173 = vmatprep.subr.bf16.mxu0 %v2691
    %3174 = vmatpush1.bf16.msra.mxu0 %v2690
    %3175 = vmatprep.subr.bf16.mxu0 %v2695
    %3176 = vmatpush1.bf16.msra.mxu0 %v2694
    %3177 = vmatprep.subr.bf16.mxu0 %v2699
    %3178 = vmatpush1.bf16.msra.mxu0 %v2698
    %3179 = vmatprep.subr.bf16.mxu0 0
    %3180 = vmatpush1.bf16.msra.mxu0 0
    %3181 = vmatprep.subr.bf16.mxu0 0
    %3182 = vmatpush1.bf16.msra.mxu0 0
    %3183 = vmatprep.subr.bf16.mxu0 0
    %3184 = vmatpush1.bf16.msra.mxu0 0
    %3185 = vmatprep.subr.bf16.mxu0 0
    %3186 = vmatpush1.bf16.msra.mxu0 0
    %3187 = vmatprep.subr.bf16.mxu0 0
    %3188 = vmatpush1.bf16.msra.mxu0 0
    %3189 = vmatprep.subr.bf16.mxu0 0
    %3190 = vmatpush1.bf16.msra.mxu0 0
    %3191 = vmatprep.subr.bf16.mxu0 0
    %3192 = vmatpush1.bf16.msra.mxu0 0
    %3193 = vmatprep.subr.bf16.mxu0 0
    %3194 = vmatpush1.bf16.msra.mxu0 0
    %3195 = vmatprep.mubr.bf16.mxu0 0
    %3196 = vmatmul.mubr.bf16.gmra.mrb[0].mxu0 %v3150
    %v3197 = vpop.f32.mrb[0].mxu0
    %v3198 = vadd.f32 0.0, %v3197
    %v3199 = vpop.f32.mrb[0].mxu0
    %v3200 = vadd.f32 0.0, %v3199
    %v3201 = vpop.f32.mrb[0].mxu0
    %v3202 = vadd.f32 0.0, %v3201
    %v3203 = vpop.f32.mrb[0].mxu0
    %v3204 = vadd.f32 0.0, %v3203
    %3205 = vdwg.mxu0
    %3206 = vmatprep.subr.bf16.mxu0 %v2673
    %3207 = vmatpush1.bf16.msra.mxu0 %v2672
    %3208 = vmatprep.subr.bf16.mxu0 %v2677
    %3209 = vmatpush1.bf16.msra.mxu0 %v2676
    %3210 = vmatprep.subr.bf16.mxu0 %v2681
    %3211 = vmatpush1.bf16.msra.mxu0 %v2680
    %3212 = vmatprep.subr.bf16.mxu0 %v2685
    %3213 = vmatpush1.bf16.msra.mxu0 %v2684
    %3214 = vmatprep.subr.bf16.mxu0 %v2689
    %3215 = vmatpush1.bf16.msra.mxu0 %v2688
    %3216 = vmatprep.subr.bf16.mxu0 %v2693
    %3217 = vmatpush1.bf16.msra.mxu0 %v2692
    %3218 = vmatprep.subr.bf16.mxu0 %v2697
    %3219 = vmatpush1.bf16.msra.mxu0 %v2696
    %3220 = vmatprep.subr.bf16.mxu0 %v2701
    %3221 = vmatpush1.bf16.msra.mxu0 %v2700
    %3222 = vmatprep.subr.bf16.mxu0 0
    %3223 = vmatpush1.bf16.msra.mxu0 0
    %3224 = vmatprep.subr.bf16.mxu0 0
    %3225 = vmatpush1.bf16.msra.mxu0 0
    %3226 = vmatprep.subr.bf16.mxu0 0
    %3227 = vmatpush1.bf16.msra.mxu0 0
    %3228 = vmatprep.subr.bf16.mxu0 0
    %3229 = vmatpush1.bf16.msra.mxu0 0
    %3230 = vmatprep.subr.bf16.mxu0 0
    %3231 = vmatpush1.bf16.msra.mxu0 0
    %3232 = vmatprep.subr.bf16.mxu0 0
    %3233 = vmatpush1.bf16.msra.mxu0 0
    %3234 = vmatprep.subr.bf16.mxu0 0
    %3235 = vmatpush1.bf16.msra.mxu0 0
    %3236 = vmatprep.subr.bf16.mxu0 0
    %3237 = vmatpush1.bf16.msra.mxu0 0
    %3238 = vmatprep.mubr.bf16.mxu0 0
    %3239 = vmatmul.mubr.bf16.gmra.mrb[0].mxu0 %v3150
    %v3240 = vpop.f32.mrb[0].mxu0
    %v3241 = vadd.f32 0.0, %v3240
    %v3242 = vpop.f32.mrb[0].mxu0
    %v3243 = vadd.f32 0.0, %v3242
    %v3244 = vpop.f32.mrb[0].mxu0
    %v3245 = vadd.f32 0.0, %v3244
    %v3246 = vpop.f32.mrb[0].mxu0
    %v3247 = vadd.f32 0.0, %v3246
    %3248 = vdwg.mxu0
    %v3249 = vadd.f32 %v3155, %v3198
    %v3250 = vadd.f32 %v3156, %v3200
    %v3251 = vadd.f32 %v3157, %v3241
    %v3252 = vadd.f32 %v3158, %v3243
    %v3253 = vadd.f32 %v3159, %v3202
    %v3254 = vadd.f32 %v3160, %v3204
    %v3255 = vadd.f32 %v3161, %v3245
    %v3256 = vadd.f32 %v3162, %v3247
    %v3257 = vmul.f32 %v3249, 0.5
    %v3258 = vmul.f32 %v3253, 0.5
    %v3259 = vtanh.pop %v3257
    %v3260 = vtanh.pop %v3258
    %v3261 = vadd.f32 %v3259, 1.0
    %v3262 = vadd.f32 %v3260, 1.0
    %v3263 = vmul.f32 %v3261, 0.5
    %v3264 = vmul.f32 %v3262, 0.5
    %v3265 = vmul.f32 %v3250, 0.5
    %v3266 = vmul.f32 %v3254, 0.5
    %v3267 = vtanh.pop %v3265
    %v3268 = vtanh.pop %v3266
    %v3269 = vadd.f32 %v3267, 1.0
    %v3270 = vadd.f32 %v3268, 1.0
    %v3271 = vmul.f32 %v3269, 0.5
    %v3272 = vmul.f32 %v3270, 0.5
    %v3273 = vtanh.pop %v3251
    %v3274 = vtanh.pop %v3255
    %v3275 = vmul.f32 %v3252, 0.5
    %v3276 = vmul.f32 %v3256, 0.5
    %v3277 = vtanh.pop %v3275
    %v3278 = vtanh.pop %v3276
    %v3279 = vadd.f32 %v3277, 1.0
    %v3280 = vadd.f32 %v3278, 1.0
    %v3281 = vmul.f32 %v3279, 0.5
    %v3282 = vmul.f32 %v3280, 0.5
    %v3283 = vmul.f32 %v3271, %v3144
    %v3284 = vmul.f32 %v3272, %v3145
    %v3285 = vmul.f32 %v3263, %v3273
    %v3286 = vmul.f32 %v3264, %v3274
    %v3287 = vadd.f32 %v3283, %v3285
    %v3288 = vadd.f32 %v3284, %v3286
    %v3289 = vtanh.pop %v3287
    %v3290 = vtanh.pop %v3288
    %v3291 = vmul.f32 %v3281, %v3289
    %v3292 = vmul.f32 %v3282, %v3290
    %v3293 = vpack.c.bf16 %v3292, %v3291
    %v3294 = vld [vmem:[%s1421] sm:$0xff]
    %v3295 = vld [vmem:[%s1421 + $0x8] sm:$0xff]
    %v3296 = vld [vmem:[%s1421 + $0x10] sm:$0xff]
    %v3297 = vld [vmem:[%s1421 + $0x18] sm:$0xff]
    %v3298 = vunpack.c.l.bf16 %v3294
    %v3299 = vunpack.c.l.bf16 %v3295
    %v3300 = vunpack.c.l.bf16 %v3296
    %v3301 = vunpack.c.l.bf16 %v3297
    %v3302 = vunpack.c.h.bf16 %v3294
    %v3303 = vunpack.c.h.bf16 %v3295
    %v3304 = vunpack.c.h.bf16 %v3296
    %v3305 = vunpack.c.h.bf16 %v3297
    %3306 = vmatprep.subr.bf16.mxu0 %v2671
    %3307 = vmatpush1.bf16.msra.mxu0 %v2670
    %3308 = vmatprep.subr.bf16.mxu0 %v2675
    %3309 = vmatpush1.bf16.msra.mxu0 %v2674
    %3310 = vmatprep.subr.bf16.mxu0 %v2679
    %3311 = vmatpush1.bf16.msra.mxu0 %v2678
    %3312 = vmatprep.subr.bf16.mxu0 %v2683
    %3313 = vmatpush1.bf16.msra.mxu0 %v2682
    %3314 = vmatprep.subr.bf16.mxu0 %v2687
    %3315 = vmatpush1.bf16.msra.mxu0 %v2686
    %3316 = vmatprep.subr.bf16.mxu0 %v2691
    %3317 = vmatpush1.bf16.msra.mxu0 %v2690
    %3318 = vmatprep.subr.bf16.mxu0 %v2695
    %3319 = vmatpush1.bf16.msra.mxu0 %v2694
    %3320 = vmatprep.subr.bf16.mxu0 %v2699
    %3321 = vmatpush1.bf16.msra.mxu0 %v2698
    %3322 = vmatprep.subr.bf16.mxu0 0
    %3323 = vmatpush1.bf16.msra.mxu0 0
    %3324 = vmatprep.subr.bf16.mxu0 0
    %3325 = vmatpush1.bf16.msra.mxu0 0
    %3326 = vmatprep.subr.bf16.mxu0 0
    %3327 = vmatpush1.bf16.msra.mxu0 0
    %3328 = vmatprep.subr.bf16.mxu0 0
    %3329 = vmatpush1.bf16.msra.mxu0 0
    %3330 = vmatprep.subr.bf16.mxu0 0
    %3331 = vmatpush1.bf16.msra.mxu0 0
    %3332 = vmatprep.subr.bf16.mxu0 0
    %3333 = vmatpush1.bf16.msra.mxu0 0
    %3334 = vmatprep.subr.bf16.mxu0 0
    %3335 = vmatpush1.bf16.msra.mxu0 0
    %3336 = vmatprep.subr.bf16.mxu0 0
    %3337 = vmatpush1.bf16.msra.mxu0 0
    %3338 = vmatprep.mubr.bf16.mxu0 0
    %3339 = vmatmul.mubr.bf16.gmra.mrb[0].mxu0 %v3293
    %v3340 = vpop.f32.mrb[0].mxu0
    %v3341 = vadd.f32 0.0, %v3340
    %v3342 = vpop.f32.mrb[0].mxu0
    %v3343 = vadd.f32 0.0, %v3342
    %v3344 = vpop.f32.mrb[0].mxu0
    %v3345 = vadd.f32 0.0, %v3344
    %v3346 = vpop.f32.mrb[0].mxu0
    %v3347 = vadd.f32 0.0, %v3346
    %3348 = vdwg.mxu0
    %3349 = vmatprep.subr.bf16.mxu0 %v2673
    %3350 = vmatpush1.bf16.msra.mxu0 %v2672
    %3351 = vmatprep.subr.bf16.mxu0 %v2677
    %3352 = vmatpush1.bf16.msra.mxu0 %v2676
    %3353 = vmatprep.subr.bf16.mxu0 %v2681
    %3354 = vmatpush1.bf16.msra.mxu0 %v2680
    %3355 = vmatprep.subr.bf16.mxu0 %v2685
    %3356 = vmatpush1.bf16.msra.mxu0 %v2684
    %3357 = vmatprep.subr.bf16.mxu0 %v2689
    %3358 = vmatpush1.bf16.msra.mxu0 %v2688
    %3359 = vmatprep.subr.bf16.mxu0 %v2693
    %3360 = vmatpush1.bf16.msra.mxu0 %v2692
    %3361 = vmatprep.subr.bf16.mxu0 %v2697
    %3362 = vmatpush1.bf16.msra.mxu0 %v2696
    %3363 = vmatprep.subr.bf16.mxu0 %v2701
    %3364 = vmatpush1.bf16.msra.mxu0 %v2700
    %3365 = vmatprep.subr.bf16.mxu0 0
    %3366 = vmatpush1.bf16.msra.mxu0 0
    %3367 = vmatprep.subr.bf16.mxu0 0
    %3368 = vmatpush1.bf16.msra.mxu0 0
    %3369 = vmatprep.subr.bf16.mxu0 0
    %3370 = vmatpush1.bf16.msra.mxu0 0
    %3371 = vmatprep.subr.bf16.mxu0 0
    %3372 = vmatpush1.bf16.msra.mxu0 0
    %3373 = vmatprep.subr.bf16.mxu0 0
    %3374 = vmatpush1.bf16.msra.mxu0 0
    %3375 = vmatprep.subr.bf16.mxu0 0
    %3376 = vmatpush1.bf16.msra.mxu0 0
    %3377 = vmatprep.subr.bf16.mxu0 0
    %3378 = vmatpush1.bf16.msra.mxu0 0
    %3379 = vmatprep.subr.bf16.mxu0 0
    %3380 = vmatpush1.bf16.msra.mxu0 0
    %3381 = vmatprep.mubr.bf16.mxu0 0
    %3382 = vmatmul.mubr.bf16.gmra.mrb[0].mxu0 %v3293
    %v3383 = vpop.f32.mrb[0].mxu0
    %v3384 = vadd.f32 0.0, %v3383
    %v3385 = vpop.f32.mrb[0].mxu0
    %v3386 = vadd.f32 0.0, %v3385
    %v3387 = vpop.f32.mrb[0].mxu0
    %v3388 = vadd.f32 0.0, %v3387
    %v3389 = vpop.f32.mrb[0].mxu0
    %v3390 = vadd.f32 0.0, %v3389
    %3391 = vdwg.mxu0
    %v3392 = vadd.f32 %v3298, %v3341
    %v3393 = vadd.f32 %v3299, %v3343
    %v3394 = vadd.f32 %v3300, %v3384
    %v3395 = vadd.f32 %v3301, %v3386
    %v3396 = vadd.f32 %v3302, %v3345
    %v3397 = vadd.f32 %v3303, %v3347
    %v3398 = vadd.f32 %v3304, %v3388
    %v3399 = vadd.f32 %v3305, %v3390
    %v3400 = vmul.f32 %v3392, 0.5
    %v3401 = vmul.f32 %v3396, 0.5
    %v3402 = vtanh.pop %v3400
    %v3403 = vtanh.pop %v3401
    %v3404 = vadd.f32 %v3402, 1.0
    %v3405 = vadd.f32 %v3403, 1.0
    %v3406 = vmul.f32 %v3404, 0.5
    %v3407 = vmul.f32 %v3405, 0.5
    %v3408 = vmul.f32 %v3393, 0.5
    %v3409 = vmul.f32 %v3397, 0.5
    %v3410 = vtanh.pop %v3408
    %v3411 = vtanh.pop %v3409
    %v3412 = vadd.f32 %v3410, 1.0
    %v3413 = vadd.f32 %v3411, 1.0
    %v3414 = vmul.f32 %v3412, 0.5
    %v3415 = vmul.f32 %v3413, 0.5
    %v3416 = vtanh.pop %v3394
    %v3417 = vtanh.pop %v3398
    %v3418 = vmul.f32 %v3395, 0.5
    %v3419 = vmul.f32 %v3399, 0.5
    %v3420 = vtanh.pop %v3418
    %v3421 = vtanh.pop %v3419
    %v3422 = vadd.f32 %v3420, 1.0
    %v3423 = vadd.f32 %v3421, 1.0
    %v3424 = vmul.f32 %v3422, 0.5
    %v3425 = vmul.f32 %v3423, 0.5
    %v3426 = vmul.f32 %v3414, %v3287
    %v3427 = vmul.f32 %v3415, %v3288
    %v3428 = vmul.f32 %v3406, %v3416
    %v3429 = vmul.f32 %v3407, %v3417
    %v3430 = vadd.f32 %v3426, %v3428
    %v3431 = vadd.f32 %v3427, %v3429
    %v3432 = vtanh.pop %v3430
    %v3433 = vtanh.pop %v3431
    %v3434 = vmul.f32 %v3424, %v3432
    %v3435 = vmul.f32 %v3425, %v3433
    %v3436 = vpack.c.bf16 %v3435, %v3434
    %v3437 = vld [vmem:[%s1567] sm:$0xff]
    %v3438 = vld [vmem:[%s1567 + $0x8] sm:$0xff]
    %v3439 = vld [vmem:[%s1567 + $0x10] sm:$0xff]
    %v3440 = vld [vmem:[%s1567 + $0x18] sm:$0xff]
    %v3441 = vunpack.c.l.bf16 %v3437
    %v3442 = vunpack.c.l.bf16 %v3438
    %v3443 = vunpack.c.l.bf16 %v3439
    %v3444 = vunpack.c.l.bf16 %v3440
    %v3445 = vunpack.c.h.bf16 %v3437
    %v3446 = vunpack.c.h.bf16 %v3438
    %v3447 = vunpack.c.h.bf16 %v3439
    %v3448 = vunpack.c.h.bf16 %v3440
    %3449 = vmatprep.subr.bf16.mxu0 %v2671
    %3450 = vmatpush1.bf16.msra.mxu0 %v2670
    %3451 = vmatprep.subr.bf16.mxu0 %v2675
    %3452 = vmatpush1.bf16.msra.mxu0 %v2674
    %3453 = vmatprep.subr.bf16.mxu0 %v2679
    %3454 = vmatpush1.bf16.msra.mxu0 %v2678
    %3455 = vmatprep.subr.bf16.mxu0 %v2683
    %3456 = vmatpush1.bf16.msra.mxu0 %v2682
    %3457 = vmatprep.subr.bf16.mxu0 %v2687
    %3458 = vmatpush1.bf16.msra.mxu0 %v2686
    %3459 = vmatprep.subr.bf16.mxu0 %v2691
    %3460 = vmatpush1.bf16.msra.mxu0 %v2690
    %3461 = vmatprep.subr.bf16.mxu0 %v2695
    %3462 = vmatpush1.bf16.msra.mxu0 %v2694
    %3463 = vmatprep.subr.bf16.mxu0 %v2699
    %3464 = vmatpush1.bf16.msra.mxu0 %v2698
    %3465 = vmatprep.subr.bf16.mxu0 0
    %3466 = vmatpush1.bf16.msra.mxu0 0
    %3467 = vmatprep.subr.bf16.mxu0 0
    %3468 = vmatpush1.bf16.msra.mxu0 0
    %3469 = vmatprep.subr.bf16.mxu0 0
    %3470 = vmatpush1.bf16.msra.mxu0 0
    %3471 = vmatprep.subr.bf16.mxu0 0
    %3472 = vmatpush1.bf16.msra.mxu0 0
    %3473 = vmatprep.subr.bf16.mxu0 0
    %3474 = vmatpush1.bf16.msra.mxu0 0
    %3475 = vmatprep.subr.bf16.mxu0 0
    %3476 = vmatpush1.bf16.msra.mxu0 0
    %3477 = vmatprep.subr.bf16.mxu0 0
    %3478 = vmatpush1.bf16.msra.mxu0 0
    %3479 = vmatprep.subr.bf16.mxu0 0
    %3480 = vmatpush1.bf16.msra.mxu0 0
    %3481 = vmatprep.mubr.bf16.mxu0 0
    %3482 = vmatmul.mubr.bf16.gmra.mrb[0].mxu0 %v3436
    %v3483 = vpop.f32.mrb[0].mxu0
    %v3484 = vadd.f32 0.0, %v3483
    %v3485 = vpop.f32.mrb[0].mxu0
    %v3486 = vadd.f32 0.0, %v3485
    %v3487 = vpop.f32.mrb[0].mxu0
    %v3488 = vadd.f32 0.0, %v3487
    %v3489 = vpop.f32.mrb[0].mxu0
    %v3490 = vadd.f32 0.0, %v3489
    %3491 = vdwg.mxu0
    %3492 = vmatprep.subr.bf16.mxu0 %v2673
    %3493 = vmatpush1.bf16.msra.mxu0 %v2672
    %3494 = vmatprep.subr.bf16.mxu0 %v2677
    %3495 = vmatpush1.bf16.msra.mxu0 %v2676
    %3496 = vmatprep.subr.bf16.mxu0 %v2681
    %3497 = vmatpush1.bf16.msra.mxu0 %v2680
    %3498 = vmatprep.subr.bf16.mxu0 %v2685
    %3499 = vmatpush1.bf16.msra.mxu0 %v2684
    %3500 = vmatprep.subr.bf16.mxu0 %v2689
    %3501 = vmatpush1.bf16.msra.mxu0 %v2688
    %3502 = vmatprep.subr.bf16.mxu0 %v2693
    %3503 = vmatpush1.bf16.msra.mxu0 %v2692
    %3504 = vmatprep.subr.bf16.mxu0 %v2697
    %3505 = vmatpush1.bf16.msra.mxu0 %v2696
    %3506 = vmatprep.subr.bf16.mxu0 %v2701
    %3507 = vmatpush1.bf16.msra.mxu0 %v2700
    %3508 = vmatprep.subr.bf16.mxu0 0
    %3509 = vmatpush1.bf16.msra.mxu0 0
    %3510 = vmatprep.subr.bf16.mxu0 0
    %3511 = vmatpush1.bf16.msra.mxu0 0
    %3512 = vmatprep.subr.bf16.mxu0 0
    %3513 = vmatpush1.bf16.msra.mxu0 0
    %3514 = vmatprep.subr.bf16.mxu0 0
    %3515 = vmatpush1.bf16.msra.mxu0 0
    %3516 = vmatprep.subr.bf16.mxu0 0
    %3517 = vmatpush1.bf16.msra.mxu0 0
    %3518 = vmatprep.subr.bf16.mxu0 0
    %3519 = vmatpush1.bf16.msra.mxu0 0
    %3520 = vmatprep.subr.bf16.mxu0 0
    %3521 = vmatpush1.bf16.msra.mxu0 0
    %3522 = vmatprep.subr.bf16.mxu0 0
    %3523 = vmatpush1.bf16.msra.mxu0 0
    %3524 = vmatprep.mubr.bf16.mxu0 0
    %3525 = vmatmul.mubr.bf16.gmra.mrb[0].mxu0 %v3436
    %v3526 = vpop.f32.mrb[0].mxu0
    %v3527 = vadd.f32 0.0, %v3526
    %v3528 = vpop.f32.mrb[0].mxu0
    %v3529 = vadd.f32 0.0, %v3528
    %v3530 = vpop.f32.mrb[0].mxu0
    %v3531 = vadd.f32 0.0, %v3530
    %v3532 = vpop.f32.mrb[0].mxu0
    %v3533 = vadd.f32 0.0, %v3532
    %3534 = vdwg.mxu0
    %v3535 = vadd.f32 %v3441, %v3484
    %v3536 = vadd.f32 %v3442, %v3486
    %v3537 = vadd.f32 %v3443, %v3527
    %v3538 = vadd.f32 %v3444, %v3529
    %v3539 = vadd.f32 %v3445, %v3488
    %v3540 = vadd.f32 %v3446, %v3490
    %v3541 = vadd.f32 %v3447, %v3531
    %v3542 = vadd.f32 %v3448, %v3533
    %v3543 = vmul.f32 %v3535, 0.5
    %v3544 = vmul.f32 %v3539, 0.5
    %v3545 = vtanh.pop %v3543
    %v3546 = vtanh.pop %v3544
    %v3547 = vadd.f32 %v3545, 1.0
    %v3548 = vadd.f32 %v3546, 1.0
    %v3549 = vmul.f32 %v3547, 0.5
    %v3550 = vmul.f32 %v3548, 0.5
    %v3551 = vmul.f32 %v3536, 0.5
    %v3552 = vmul.f32 %v3540, 0.5
    %v3553 = vtanh.pop %v3551
    %v3554 = vtanh.pop %v3552
    %v3555 = vadd.f32 %v3553, 1.0
    %v3556 = vadd.f32 %v3554, 1.0
    %v3557 = vmul.f32 %v3555, 0.5
    %v3558 = vmul.f32 %v3556, 0.5
    %v3559 = vtanh.pop %v3537
    %v3560 = vtanh.pop %v3541
    %v3561 = vmul.f32 %v3538, 0.5
    %v3562 = vmul.f32 %v3542, 0.5
    %v3563 = vtanh.pop %v3561
    %v3564 = vtanh.pop %v3562
    %v3565 = vadd.f32 %v3563, 1.0
    %v3566 = vadd.f32 %v3564, 1.0
    %v3567 = vmul.f32 %v3565, 0.5
    %v3568 = vmul.f32 %v3566, 0.5
    %v3569 = vmul.f32 %v3557, %v3430
    %v3570 = vmul.f32 %v3558, %v3431
    %v3571 = vmul.f32 %v3549, %v3559
    %v3572 = vmul.f32 %v3550, %v3560
    %v3573 = vadd.f32 %v3569, %v3571
    %v3574 = vadd.f32 %v3570, %v3572
    %v3575 = vtanh.pop %v3573
    %v3576 = vtanh.pop %v3574
    %v3577 = vmul.f32 %v3567, %v3575
    %v3578 = vmul.f32 %v3568, %v3576
    %v3579 = vpack.c.bf16 %v3578, %v3577
    %v3580 = vld [vmem:[%s1713] sm:$0xff]
    %v3581 = vld [vmem:[%s1713 + $0x8] sm:$0xff]
    %v3582 = vld [vmem:[%s1713 + $0x10] sm:$0xff]
    %v3583 = vld [vmem:[%s1713 + $0x18] sm:$0xff]
    %v3584 = vunpack.c.l.bf16 %v3580
    %v3585 = vunpack.c.l.bf16 %v3581
    %v3586 = vunpack.c.l.bf16 %v3582
    %v3587 = vunpack.c.l.bf16 %v3583
    %v3588 = vunpack.c.h.bf16 %v3580
    %v3589 = vunpack.c.h.bf16 %v3581
    %v3590 = vunpack.c.h.bf16 %v3582
    %v3591 = vunpack.c.h.bf16 %v3583
    %3592 = vmatprep.subr.bf16.mxu0 %v2671
    %3593 = vmatpush1.bf16.msra.mxu0 %v2670
    %3594 = vmatprep.subr.bf16.mxu0 %v2675
    %3595 = vmatpush1.bf16.msra.mxu0 %v2674
    %3596 = vmatprep.subr.bf16.mxu0 %v2679
    %3597 = vmatpush1.bf16.msra.mxu0 %v2678
    %3598 = vmatprep.subr.bf16.mxu0 %v2683
    %3599 = vmatpush1.bf16.msra.mxu0 %v2682
    %3600 = vmatprep.subr.bf16.mxu0 %v2687
    %3601 = vmatpush1.bf16.msra.mxu0 %v2686
    %3602 = vmatprep.subr.bf16.mxu0 %v2691
    %3603 = vmatpush1.bf16.msra.mxu0 %v2690
    %3604 = vmatprep.subr.bf16.mxu0 %v2695
    %3605 = vmatpush1.bf16.msra.mxu0 %v2694
    %3606 = vmatprep.subr.bf16.mxu0 %v2699
    %3607 = vmatpush1.bf16.msra.mxu0 %v2698
    %3608 = vmatprep.subr.bf16.mxu0 0
    %3609 = vmatpush1.bf16.msra.mxu0 0
    %3610 = vmatprep.subr.bf16.mxu0 0
    %3611 = vmatpush1.bf16.msra.mxu0 0
    %3612 = vmatprep.subr.bf16.mxu0 0
    %3613 = vmatpush1.bf16.msra.mxu0 0
    %3614 = vmatprep.subr.bf16.mxu0 0
    %3615 = vmatpush1.bf16.msra.mxu0 0
    %3616 = vmatprep.subr.bf16.mxu0 0
    %3617 = vmatpush1.bf16.msra.mxu0 0
    %3618 = vmatprep.subr.bf16.mxu0 0
    %3619 = vmatpush1.bf16.msra.mxu0 0
    %3620 = vmatprep.subr.bf16.mxu0 0
    %3621 = vmatpush1.bf16.msra.mxu0 0
    %3622 = vmatprep.subr.bf16.mxu0 0
    %3623 = vmatpush1.bf16.msra.mxu0 0
    %3624 = vmatprep.mubr.bf16.mxu0 0
    %3625 = vmatmul.mubr.bf16.gmra.mrb[0].mxu0 %v3579
    %v3626 = vpop.f32.mrb[0].mxu0
    %v3627 = vadd.f32 0.0, %v3626
    %v3628 = vpop.f32.mrb[0].mxu0
    %v3629 = vadd.f32 0.0, %v3628
    %v3630 = vpop.f32.mrb[0].mxu0
    %v3631 = vadd.f32 0.0, %v3630
    %v3632 = vpop.f32.mrb[0].mxu0
    %v3633 = vadd.f32 0.0, %v3632
    %3634 = vdwg.mxu0
    %3635 = vmatprep.subr.bf16.mxu0 %v2673
    %3636 = vmatpush1.bf16.msra.mxu0 %v2672
    %3637 = vmatprep.subr.bf16.mxu0 %v2677
    %3638 = vmatpush1.bf16.msra.mxu0 %v2676
    %3639 = vmatprep.subr.bf16.mxu0 %v2681
    %3640 = vmatpush1.bf16.msra.mxu0 %v2680
    %3641 = vmatprep.subr.bf16.mxu0 %v2685
    %3642 = vmatpush1.bf16.msra.mxu0 %v2684
    %3643 = vmatprep.subr.bf16.mxu0 %v2689
    %3644 = vmatpush1.bf16.msra.mxu0 %v2688
    %3645 = vmatprep.subr.bf16.mxu0 %v2693
    %3646 = vmatpush1.bf16.msra.mxu0 %v2692
    %3647 = vmatprep.subr.bf16.mxu0 %v2697
    %3648 = vmatpush1.bf16.msra.mxu0 %v2696
    %3649 = vmatprep.subr.bf16.mxu0 %v2701
    %3650 = vmatpush1.bf16.msra.mxu0 %v2700
    %3651 = vmatprep.subr.bf16.mxu0 0
    %3652 = vmatpush1.bf16.msra.mxu0 0
    %3653 = vmatprep.subr.bf16.mxu0 0
    %3654 = vmatpush1.bf16.msra.mxu0 0
    %3655 = vmatprep.subr.bf16.mxu0 0
    %3656 = vmatpush1.bf16.msra.mxu0 0
    %3657 = vmatprep.subr.bf16.mxu0 0
    %3658 = vmatpush1.bf16.msra.mxu0 0
    %3659 = vmatprep.subr.bf16.mxu0 0
    %3660 = vmatpush1.bf16.msra.mxu0 0
    %3661 = vmatprep.subr.bf16.mxu0 0
    %3662 = vmatpush1.bf16.msra.mxu0 0
    %3663 = vmatprep.subr.bf16.mxu0 0
    %3664 = vmatpush1.bf16.msra.mxu0 0
    %3665 = vmatprep.subr.bf16.mxu0 0
    %3666 = vmatpush1.bf16.msra.mxu0 0
    %3667 = vmatprep.mubr.bf16.mxu0 0
    %3668 = vmatmul.mubr.bf16.gmra.mrb[0].mxu0 %v3579
    %v3669 = vpop.f32.mrb[0].mxu0
    %v3670 = vadd.f32 0.0, %v3669
    %v3671 = vpop.f32.mrb[0].mxu0
    %v3672 = vadd.f32 0.0, %v3671
    %v3673 = vpop.f32.mrb[0].mxu0
    %v3674 = vadd.f32 0.0, %v3673
    %v3675 = vpop.f32.mrb[0].mxu0
    %v3676 = vadd.f32 0.0, %v3675
    %3677 = vdwg.mxu0
    %v3678 = vadd.f32 %v3584, %v3627
    %v3679 = vadd.f32 %v3585, %v3629
    %v3680 = vadd.f32 %v3586, %v3670
    %v3681 = vadd.f32 %v3587, %v3672
    %v3682 = vadd.f32 %v3588, %v3631
    %v3683 = vadd.f32 %v3589, %v3633
    %v3684 = vadd.f32 %v3590, %v3674
    %v3685 = vadd.f32 %v3591, %v3676
    %v3686 = vmul.f32 %v3678, 0.5
    %v3687 = vmul.f32 %v3682, 0.5
    %v3688 = vtanh.pop %v3686
    %v3689 = vtanh.pop %v3687
    %v3690 = vadd.f32 %v3688, 1.0
    %v3691 = vadd.f32 %v3689, 1.0
    %v3692 = vmul.f32 %v3690, 0.5
    %v3693 = vmul.f32 %v3691, 0.5
    %v3694 = vmul.f32 %v3679, 0.5
    %v3695 = vmul.f32 %v3683, 0.5
    %v3696 = vtanh.pop %v3694
    %v3697 = vtanh.pop %v3695
    %v3698 = vadd.f32 %v3696, 1.0
    %v3699 = vadd.f32 %v3697, 1.0
    %v3700 = vmul.f32 %v3698, 0.5
    %v3701 = vmul.f32 %v3699, 0.5
    %v3702 = vtanh.pop %v3680
    %v3703 = vtanh.pop %v3684
    %v3704 = vmul.f32 %v3681, 0.5
    %v3705 = vmul.f32 %v3685, 0.5
    %v3706 = vtanh.pop %v3704
    %v3707 = vtanh.pop %v3705
    %v3708 = vadd.f32 %v3706, 1.0
    %v3709 = vadd.f32 %v3707, 1.0
    %v3710 = vmul.f32 %v3708, 0.5
    %v3711 = vmul.f32 %v3709, 0.5
    %v3712 = vmul.f32 %v3700, %v3573
    %v3713 = vmul.f32 %v3701, %v3574
    %v3714 = vmul.f32 %v3692, %v3702
    %v3715 = vmul.f32 %v3693, %v3703
    %v3716 = vadd.f32 %v3712, %v3714
    %v3717 = vadd.f32 %v3713, %v3715
    %v3718 = vtanh.pop %v3716
    %v3719 = vtanh.pop %v3717
    %v3720 = vmul.f32 %v3710, %v3718
    %v3721 = vmul.f32 %v3711, %v3719
    %v3722 = vpack.c.bf16 %v3721, %v3720
    %v3723 = vld [vmem:[%s1859] sm:$0xff]
    %v3724 = vld [vmem:[%s1859 + $0x8] sm:$0xff]
    %v3725 = vld [vmem:[%s1859 + $0x10] sm:$0xff]
    %v3726 = vld [vmem:[%s1859 + $0x18] sm:$0xff]
    %v3727 = vunpack.c.l.bf16 %v3723
    %v3728 = vunpack.c.l.bf16 %v3724
    %v3729 = vunpack.c.l.bf16 %v3725
    %v3730 = vunpack.c.l.bf16 %v3726
    %v3731 = vunpack.c.h.bf16 %v3723
    %v3732 = vunpack.c.h.bf16 %v3724
    %v3733 = vunpack.c.h.bf16 %v3725
    %v3734 = vunpack.c.h.bf16 %v3726
    %3735 = vmatprep.subr.bf16.mxu0 %v2671
    %3736 = vmatpush1.bf16.msra.mxu0 %v2670
    %3737 = vmatprep.subr.bf16.mxu0 %v2675
    %3738 = vmatpush1.bf16.msra.mxu0 %v2674
    %3739 = vmatprep.subr.bf16.mxu0 %v2679
    %3740 = vmatpush1.bf16.msra.mxu0 %v2678
    %3741 = vmatprep.subr.bf16.mxu0 %v2683
    %3742 = vmatpush1.bf16.msra.mxu0 %v2682
    %3743 = vmatprep.subr.bf16.mxu0 %v2687
    %3744 = vmatpush1.bf16.msra.mxu0 %v2686
    %3745 = vmatprep.subr.bf16.mxu0 %v2691
    %3746 = vmatpush1.bf16.msra.mxu0 %v2690
    %3747 = vmatprep.subr.bf16.mxu0 %v2695
    %3748 = vmatpush1.bf16.msra.mxu0 %v2694
    %3749 = vmatprep.subr.bf16.mxu0 %v2699
    %3750 = vmatpush1.bf16.msra.mxu0 %v2698
    %3751 = vmatprep.subr.bf16.mxu0 0
    %3752 = vmatpush1.bf16.msra.mxu0 0
    %3753 = vmatprep.subr.bf16.mxu0 0
    %3754 = vmatpush1.bf16.msra.mxu0 0
    %3755 = vmatprep.subr.bf16.mxu0 0
    %3756 = vmatpush1.bf16.msra.mxu0 0
    %3757 = vmatprep.subr.bf16.mxu0 0
    %3758 = vmatpush1.bf16.msra.mxu0 0
    %3759 = vmatprep.subr.bf16.mxu0 0
    %3760 = vmatpush1.bf16.msra.mxu0 0
    %3761 = vmatprep.subr.bf16.mxu0 0
    %3762 = vmatpush1.bf16.msra.mxu0 0
    %3763 = vmatprep.subr.bf16.mxu0 0
    %3764 = vmatpush1.bf16.msra.mxu0 0
    %3765 = vmatprep.subr.bf16.mxu0 0
    %3766 = vmatpush1.bf16.msra.mxu0 0
    %3767 = vmatprep.mubr.bf16.mxu0 0
    %3768 = vmatmul.mubr.bf16.gmra.mrb[0].mxu0 %v3722
    %v3769 = vpop.f32.mrb[0].mxu0
    %v3770 = vadd.f32 0.0, %v3769
    %v3771 = vpop.f32.mrb[0].mxu0
    %v3772 = vadd.f32 0.0, %v3771
    %v3773 = vpop.f32.mrb[0].mxu0
    %v3774 = vadd.f32 0.0, %v3773
    %v3775 = vpop.f32.mrb[0].mxu0
    %v3776 = vadd.f32 0.0, %v3775
    %3777 = vdwg.mxu0
    %3778 = vmatprep.subr.bf16.mxu0 %v2673
    %3779 = vmatpush1.bf16.msra.mxu0 %v2672
    %3780 = vmatprep.subr.bf16.mxu0 %v2677
    %3781 = vmatpush1.bf16.msra.mxu0 %v2676
    %3782 = vmatprep.subr.bf16.mxu0 %v2681
    %3783 = vmatpush1.bf16.msra.mxu0 %v2680
    %3784 = vmatprep.subr.bf16.mxu0 %v2685
    %3785 = vmatpush1.bf16.msra.mxu0 %v2684
    %3786 = vmatprep.subr.bf16.mxu0 %v2689
    %3787 = vmatpush1.bf16.msra.mxu0 %v2688
    %3788 = vmatprep.subr.bf16.mxu0 %v2693
    %3789 = vmatpush1.bf16.msra.mxu0 %v2692
    %3790 = vmatprep.subr.bf16.mxu0 %v2697
    %3791 = vmatpush1.bf16.msra.mxu0 %v2696
    %3792 = vmatprep.subr.bf16.mxu0 %v2701
    %3793 = vmatpush1.bf16.msra.mxu0 %v2700
    %3794 = vmatprep.subr.bf16.mxu0 0
    %3795 = vmatpush1.bf16.msra.mxu0 0
    %3796 = vmatprep.subr.bf16.mxu0 0
    %3797 = vmatpush1.bf16.msra.mxu0 0
    %3798 = vmatprep.subr.bf16.mxu0 0
    %3799 = vmatpush1.bf16.msra.mxu0 0
    %3800 = vmatprep.subr.bf16.mxu0 0
    %3801 = vmatpush1.bf16.msra.mxu0 0
    %3802 = vmatprep.subr.bf16.mxu0 0
    %3803 = vmatpush1.bf16.msra.mxu0 0
    %3804 = vmatprep.subr.bf16.mxu0 0
    %3805 = vmatpush1.bf16.msra.mxu0 0
    %3806 = vmatprep.subr.bf16.mxu0 0
    %3807 = vmatpush1.bf16.msra.mxu0 0
    %3808 = vmatprep.subr.bf16.mxu0 0
    %3809 = vmatpush1.bf16.msra.mxu0 0
    %3810 = vmatprep.mubr.bf16.mxu0 0
    %3811 = vmatmul.mubr.bf16.gmra.mrb[0].mxu0 %v3722
    %v3812 = vpop.f32.mrb[0].mxu0
    %v3813 = vadd.f32 0.0, %v3812
    %v3814 = vpop.f32.mrb[0].mxu0
    %v3815 = vadd.f32 0.0, %v3814
    %v3816 = vpop.f32.mrb[0].mxu0
    %v3817 = vadd.f32 0.0, %v3816
    %v3818 = vpop.f32.mrb[0].mxu0
    %v3819 = vadd.f32 0.0, %v3818
    %3820 = vdwg.mxu0
    %v3821 = vadd.f32 %v3727, %v3770
    %v3822 = vadd.f32 %v3728, %v3772
    %v3823 = vadd.f32 %v3729, %v3813
    %v3824 = vadd.f32 %v3730, %v3815
    %v3825 = vadd.f32 %v3731, %v3774
    %v3826 = vadd.f32 %v3732, %v3776
    %v3827 = vadd.f32 %v3733, %v3817
    %v3828 = vadd.f32 %v3734, %v3819
    %v3829 = vmul.f32 %v3821, 0.5
    %v3830 = vmul.f32 %v3825, 0.5
    %v3831 = vtanh.pop %v3829
    %v3832 = vtanh.pop %v3830
    %v3833 = vadd.f32 %v3831, 1.0
    %v3834 = vadd.f32 %v3832, 1.0
    %v3835 = vmul.f32 %v3833, 0.5
    %v3836 = vmul.f32 %v3834, 0.5
    %v3837 = vmul.f32 %v3822, 0.5
    %v3838 = vmul.f32 %v3826, 0.5
    %v3839 = vtanh.pop %v3837
    %v3840 = vtanh.pop %v3838
    %v3841 = vadd.f32 %v3839, 1.0
    %v3842 = vadd.f32 %v3840, 1.0
    %v3843 = vmul.f32 %v3841, 0.5
    %v3844 = vmul.f32 %v3842, 0.5
    %v3845 = vtanh.pop %v3823
    %v3846 = vtanh.pop %v3827
    %v3847 = vmul.f32 %v3824, 0.5
    %v3848 = vmul.f32 %v3828, 0.5
    %v3849 = vtanh.pop %v3847
    %v3850 = vtanh.pop %v3848
    %v3851 = vadd.f32 %v3849, 1.0
    %v3852 = vadd.f32 %v3850, 1.0
    %v3853 = vmul.f32 %v3851, 0.5
    %v3854 = vmul.f32 %v3852, 0.5
    %v3855 = vmul.f32 %v3843, %v3716
    %v3856 = vmul.f32 %v3844, %v3717
    %v3857 = vmul.f32 %v3835, %v3845
    %v3858 = vmul.f32 %v3836, %v3846
    %v3859 = vadd.f32 %v3855, %v3857
    %v3860 = vadd.f32 %v3856, %v3858
    %v3861 = vtanh.pop %v3859
    %v3862 = vtanh.pop %v3860
    %v3863 = vmul.f32 %v3853, %v3861
    %v3864 = vmul.f32 %v3854, %v3862
    %3865 = vst [vmem:[%s2555] sm:$0xff] %v3863
    %3866 = vst [vmem:[%s2555 + $0x8] sm:$0xff] %v3864
    %3867 = vst [vmem:[%s2558] sm:$0xff] %v3859
    %3868 = vst [vmem:[%s2558 + $0x8] sm:$0xff] %v3860
    // Predicated region
    $region38: #{encoder_forward.1} parent=1 // pred_check
      %p3869 = pneg %p62
    $region39: #{encoder_forward.1} parent=1 // pred_check_branch
      %3871 = sbr.rel (%p3869) target = $region41
    $region40: #{encoder_forward.1} parent=1 // pred_region
      %v3872 = vld [vmem:[#allocation2] sm:$0xff]
      %v3873 = vld [vmem:[#allocation2 + $0x8] sm:$0xff]
      %v3874 = vld [vmem:[#allocation2 + $0x10] sm:$0xff]
      %v3875 = vld [vmem:[#allocation2 + $0x18] sm:$0xff]
      %3876 = vst [vmem:[%s5] sm:$0xff] %v3872
      %3877 = vst [vmem:[%s5 + $0x8] sm:$0xff] %v3873
      %3878 = vst [vmem:[%s5 + $0x10] sm:$0xff] %v3874
      %3879 = vst [vmem:[%s5 + $0x18] sm:$0xff] %v3875
    $region41: #{encoder_forward.1} parent=1 // pred_fallthru
      _
    // Predicated region
    $region42: #{encoder_forward.1} parent=1 // pred_check
      _
    $region43: #{encoder_forward.1} parent=1 // pred_check_branch
      %3881 = sbr.rel (0) target = $region45
    $region44: #{encoder_forward.1} parent=1 // pred_region
      _
    $region45: #{encoder_forward.1} parent=1 // pred_fallthru
      _
    // Predicated region
    $region46: #{encoder_forward.1} parent=1 // pred_check
      _
    $region47: #{encoder_forward.1} parent=1 // pred_check_branch
      %3883 = sbr.rel (0) target = $region49
    $region48: #{encoder_forward.1} parent=1 // pred_region
      _
    $region49: #{encoder_forward.1} parent=1 // pred_fallthru
      _
    %3884 = vsyncpa [#allocation7], 1
    %3885 = vsyncpa [#allocation9], 1

</llo_original>
